<compile_context>
chip_gen: v7x
topology: tpu7x:2x2x1
jax: 0.10.0
libtpu: 0.0.40
codegen_flags: <defaults>
</compile_context>

<pallas_src>
import math

import jax
import jax.numpy as jnp
from jax.experimental import pallas as pl
from jax.experimental.pallas import tpu as pltpu

DIM = 27        # real feature dim (Linear(27, 27))
LPAD = 128      # lane-padded feature dim
CH = 40         # BatchNorm1d(40) channel dim
PRED_DIM = 512  # predictor hidden dim (module default)
BN_EPS = 1e-5


def simsiam_kernel(x1_ref, x2_ref, wfc_ref, bmisc_ref, wp1_ref, bp1_ref,
                   wp2_ref, bn_ref, p1_ref, p2_ref, z1_ref, z2_ref):
    n, ch, lpad = x1_ref.shape          # [n, CH, LPAD] per view
    rows = 2 * n * ch                   # both views stacked along rows

    bmisc = bmisc_ref[...]              # [4, LPAD] f32: fc biases 1..3, pred bias 2
    bn = bn_ref[...]                    # [CH, 8]  f32: cols 2i/2i+1 = gamma_i/beta_i

    def linear(h2, w, b_row):
        # h2: [rows, K] f32, w: [K, M] bf16 -> MXU bf16 matmul, f32 accumulate.
        return jnp.dot(h2.astype(jnp.bfloat16), w,
                       preferred_element_type=jnp.float32) + b_row

    def batchnorm(h2, layer, valid):
        # Training-mode BatchNorm1d(40): per-view, per-channel stats over
        # (n, L), biased variance.  h2 padded lanes (if any) are exactly zero.
        width = h2.shape[-1]
        h4 = h2.reshape(2, n, ch, width)                      # [view, n, CH, W]
        gamma = bn[:, 2 * layer:2 * layer + 1].reshape(1, 1, ch, 1)
        beta = bn[:, 2 * layer + 1:2 * layer + 2].reshape(1, 1, ch, 1)
        inv_cnt = 1.0 / (n * valid)
        mean = jnp.sum(h4, axis=(1, 3), keepdims=True) * inv_cnt      # [2,1,CH,1]
        dev = h4 - mean
        ssq = jnp.sum(dev * dev, axis=(1, 3), keepdims=True)          # [2,1,CH,1]
        if valid != width:
            # Padded lanes are exactly 0, so each contributes mean^2 to ssq;
            # remove that contribution exactly (keeps the two-pass numerics).
            ssq = ssq - (n * (width - valid)) * (mean * mean)
        var = jnp.maximum(ssq * inv_cnt, 0.0)
        scale = jax.lax.rsqrt(var + BN_EPS) * gamma
        shift = beta - mean * scale
        return (h4 * scale + shift).reshape(rows, width)

    # Stack the two views along the row axis (major-dim concat: layout-free).
    x = jnp.concatenate([x1_ref[...], x2_ref[...]], axis=0)   # [2n, CH, LPAD]
    h = x.reshape(rows, lpad)

    # self.fc : Linear-BN-ReLU -> Linear-BN-ReLU -> Linear-BN
    h = linear(h, wfc_ref[0], bmisc[0:1, :])
    h = jnp.maximum(batchnorm(h, 0, DIM), 0.0)
    h = linear(h, wfc_ref[1], bmisc[1:2, :])
    h = jnp.maximum(batchnorm(h, 1, DIM), 0.0)
    h = linear(h, wfc_ref[2], bmisc[2:3, :])
    z = batchnorm(h, 2, DIM)                                  # [rows, LPAD]

    # Emit unpadded z per view (masked store on the 27-lane tail).
    z4 = z.reshape(2, n, ch, lpad)
    z1_ref[...] = z4[0, :, :, :DIM]
    z2_ref[...] = z4[1, :, :, :DIM]

    # self.predictor : Linear-BN-ReLU -> Linear
    q = linear(z, wp1_ref[...], bp1_ref[...])                 # [rows, PRED_DIM]
    q = jnp.maximum(batchnorm(q, 3, PRED_DIM), 0.0)
    p = linear(q, wp2_ref[...], bmisc[3:4, :])                # [rows, LPAD]

    p4 = p.reshape(2, n, ch, lpad)
    p1_ref[...] = p4[0, :, :, :DIM]
    p2_ref[...] = p4[1, :, :, :DIM]


def _full_spec(arr):
    # Whole-array block, single kernel invocation (empty grid).
    return pl.BlockSpec(arr.shape, lambda: (0,) * arr.ndim)


@jax.jit
def simsiam_forward(x1, x2, params):
    w_fc, b_misc, wp1, bp1, wp2, bn = params
    n = x1.shape[0]

    # Only host-side prep left: lane-pad the tiny inputs (n*40*27 f32 each).
    # Stacking, output un-padding and per-view slicing all happen in-kernel.
    x1p = jnp.pad(x1, ((0, 0), (0, 0), (0, LPAD - DIM)))
    x2p = jnp.pad(x2, ((0, 0), (0, 0), (0, LPAD - DIM)))

    out_sds = jax.ShapeDtypeStruct((n, CH, DIM), jnp.float32)

    rows = 2 * n * CH
    flops = 2 * rows * (3 * LPAD * LPAD + LPAD * PRED_DIM + PRED_DIM * LPAD)
    bytes_accessed = (
        2 * x1p.size * 4                                    # padded inputs
        + (w_fc.size + wp1.size + wp2.size) * 2             # bf16 weights
        + (b_misc.size + bp1.size + bn.size) * 4             # f32 biases / BN
        + 4 * n * CH * DIM * 4)                              # p1,p2,z1,z2

    # NOTE: at realistic (larger) batch sizes on v7x (64 MiB VMEM) add a row
    # tile grid axis and set pltpu.CompilerParams(vmem_limit_bytes=...); at
    # this size everything fits comfortably in the default scoped VMEM.
    p1, p2, z1, z2 = pl.pallas_call(
        simsiam_kernel,
        out_shape=(out_sds, out_sds, out_sds, out_sds),
        in_specs=[_full_spec(x1p), _full_spec(x2p), _full_spec(w_fc),
                  _full_spec(b_misc), _full_spec(wp1), _full_spec(bp1),
                  _full_spec(wp2), _full_spec(bn)],
        out_specs=(pl.BlockSpec((n, CH, DIM), lambda: (0, 0, 0)),) * 4,
        cost_estimate=pl.CostEstimate(flops=flops,
                                      transcendentals=8 * CH,
                                      bytes_accessed=bytes_accessed),
    )(x1p, x2p, w_fc, b_misc, wp1, bp1, wp2, bn)

    # mode == 'train' branch: (p1, p2, z1.detach(), z2.detach())
    return p1, p2, jax.lax.stop_gradient(z1), jax.lax.stop_gradient(z2)


def init_params(key):
    ks = jax.random.split(key, 5)

    def lin(k, fan_in, fan_out, pad_in, pad_out):
        # PyTorch Linear default init; weight stored pre-transposed [in, out]
        # and zero-padded so padded lanes stay exactly zero through the net.
        kw, kb = jax.random.split(k)
        bound = 1.0 / math.sqrt(fan_in)
        w = jax.random.uniform(kw, (fan_in, fan_out), jnp.float32, -bound, bound)
        b = jax.random.uniform(kb, (fan_out,), jnp.float32, -bound, bound)
        w = jnp.pad(w, ((0, pad_in - fan_in), (0, pad_out - fan_out)))
        b = jnp.pad(b, (0, pad_out - fan_out))
        return w, b

    fw1, fb1 = lin(ks[0], DIM, DIM, LPAD, LPAD)
    fw2, fb2 = lin(ks[1], DIM, DIM, LPAD, LPAD)
    fw3, fb3 = lin(ks[2], DIM, DIM, LPAD, LPAD)
    pw1, pb1 = lin(ks[3], DIM, PRED_DIM, LPAD, PRED_DIM)
    pw2, pb2 = lin(ks[4], PRED_DIM, DIM, PRED_DIM, LPAD)

    # Weights in bf16 (native MXU input dtype); biases stay f32.
    w_fc = jnp.stack([fw1, fw2, fw3], axis=0).astype(jnp.bfloat16)  # [3,128,128]
    b_misc = jnp.stack([fb1, fb2, fb3, pb2], axis=0)                # [4,128] f32
    wp1 = pw1.astype(jnp.bfloat16)                                  # [128,512]
    bp1 = pb1[None, :]                                              # [1,512] f32
    wp2 = pw2.astype(jnp.bfloat16)                                  # [512,128]

    # BatchNorm1d(40) affine params (gamma=1, beta=0 init) for the 4 BN layers,
    # packed lane-dense: [CH, 8], column 2i = gamma_i, column 2i+1 = beta_i.
    gammas = jnp.ones((CH, 4), jnp.float32)
    betas = jnp.zeros((CH, 4), jnp.float32)
    bn = jnp.stack([gammas, betas], axis=-1).reshape(CH, 8)

    return (w_fc, b_misc, wp1, bp1, wp2, bn)


if __name__ == "__main__":
    key = jax.random.PRNGKey(0)
    kx1, kx2, kp = jax.random.split(key, 3)
    x1 = jax.random.normal(kx1, (2, CH, DIM), jnp.float32)
    x2 = jax.random.normal(kx2, (2, CH, DIM), jnp.float32)
    params = init_params(kp)

    p1, p2, z1, z2 = simsiam_forward(x1, x2, params)
    jax.block_until_ready((p1, p2, z1, z2))
    assert p1.shape == (2, CH, DIM) and p2.shape == (2, CH, DIM)
    assert z1.shape == (2, CH, DIM) and z2.shape == (2, CH, DIM)
    assert bool(jnp.all(jnp.isfinite(p1))) and bool(jnp.all(jnp.isfinite(p2)))
    assert bool(jnp.all(jnp.isfinite(z1))) and bool(jnp.all(jnp.isfinite(z2)))
    print("KERNEL_OK")
</pallas_src>

<mosaic_0001>
module attributes {stable_mosaic.version = 11 : i64} {
  func.func @simsiam_kernel(%arg0: memref<2x40x128xf32, #tpu.memory_space<vmem>>, %arg1: memref<2x40x128xf32, #tpu.memory_space<vmem>>, %arg2: memref<3x128x128xbf16, #tpu.memory_space<vmem>>, %arg3: memref<4x128xf32, #tpu.memory_space<vmem>>, %arg4: memref<128x512xbf16, #tpu.memory_space<vmem>>, %arg5: memref<1x512xf32, #tpu.memory_space<vmem>>, %arg6: memref<512x128xbf16, #tpu.memory_space<vmem>>, %arg7: memref<40x8xf32, #tpu.memory_space<vmem>>, %arg8: memref<2x40x27xf32, #tpu.memory_space<vmem>>, %arg9: memref<2x40x27xf32, #tpu.memory_space<vmem>>, %arg10: memref<2x40x27xf32, #tpu.memory_space<vmem>>, %arg11: memref<2x40x27xf32, #tpu.memory_space<vmem>>) attributes {dimension_semantics = [], scalar_prefetch = 0 : i64, scratch_operands = 0 : i64, tpu.core_type = #tpu.core_type<tc>} {
    %c0 = arith.constant 0 : index
    %c0_0 = arith.constant 0 : index
    %0 = vector.load %arg3[%c0, %c0_0] : memref<4x128xf32, #tpu.memory_space<vmem>>, vector<4x128xf32>
    %c0_1 = arith.constant 0 : index
    %c0_2 = arith.constant 0 : index
    %1 = vector.load %arg7[%c0_1, %c0_2] : memref<40x8xf32, #tpu.memory_space<vmem>>, vector<40x8xf32>
    %c0_3 = arith.constant 0 : index
    %c0_4 = arith.constant 0 : index
    %c0_5 = arith.constant 0 : index
    %2 = vector.load %arg0[%c0_3, %c0_4, %c0_5] : memref<2x40x128xf32, #tpu.memory_space<vmem>>, vector<2x40x128xf32>
    %c0_6 = arith.constant 0 : index
    %c0_7 = arith.constant 0 : index
    %c0_8 = arith.constant 0 : index
    %3 = vector.load %arg1[%c0_6, %c0_7, %c0_8] : memref<2x40x128xf32, #tpu.memory_space<vmem>>, vector<2x40x128xf32>
    %4 = tpu.concatenate %2, %3 in 0 : vector<2x40x128xf32>, vector<2x40x128xf32> -> vector<4x40x128xf32>
    %5 = vector.shape_cast %4 : vector<4x40x128xf32> to vector<160x128xf32>
    %c0_9 = arith.constant 0 : index
    %c0_10 = arith.constant 0 : index
    %c0_11 = arith.constant 0 : index
    %6 = vector.load %arg2[%c0_9, %c0_10, %c0_11] : memref<3x128x128xbf16, #tpu.memory_space<vmem>>, vector<1x128x128xbf16>
    %7 = vector.shape_cast %6 : vector<1x128x128xbf16> to vector<128x128xbf16>
    %8 = vector.extract_strided_slice %0 {offsets = [0, 0], sizes = [1, 128], strides = [1, 1]} : vector<4x128xf32> to vector<1x128xf32>
    %9 = arith.truncf %5 : vector<160x128xf32> to vector<160x128xbf16>
    %cst = arith.constant dense<0.000000e+00> : vector<160x128xf32>
    %10 = tpu.matmul %9, %7, %cst {dimension_numbers = #tpu.dot_dimension_numbers<[1], [0], [0], [1], [0, 0, 1, 1], [], []>} : vector<160x128xbf16>, vector<128x128xbf16>, vector<160x128xf32> -> vector<160x128xf32>
    %11 = vector.broadcast %8 : vector<1x128xf32> to vector<160x128xf32>
    %12 = arith.addf %10, %11 : vector<160x128xf32>
    %13 = vector.shape_cast %12 : vector<160x128xf32> to vector<2x2x40x128xf32>
    %14 = vector.extract_strided_slice %1 {offsets = [0, 0], sizes = [40, 1], strides = [1, 1]} : vector<40x8xf32> to vector<40x1xf32>
    %15 = vector.shape_cast %14 : vector<40x1xf32> to vector<1x1x40x1xf32>
    %16 = vector.extract_strided_slice %1 {offsets = [0, 1], sizes = [40, 1], strides = [1, 1]} : vector<40x8xf32> to vector<40x1xf32>
    %17 = vector.shape_cast %16 : vector<40x1xf32> to vector<1x1x40x1xf32>
    %cst_12 = arith.constant dense<0.000000e+00> : vector<2x40xf32>
    %18 = vector.multi_reduction <add>, %13, %cst_12 [1, 3] : vector<2x2x40x128xf32> to vector<2x40xf32>
    %19 = vector.shape_cast %18 : vector<2x40xf32> to vector<2x1x40x1xf32>
    %cst_13 = arith.constant 0.0185185187 : f32
    %20 = vector.broadcast %cst_13 : f32 to vector<2x1x40x1xf32>
    %21 = arith.mulf %19, %20 : vector<2x1x40x1xf32>
    %22 = vector.broadcast %21 : vector<2x1x40x1xf32> to vector<2x2x40x128xf32>
    %23 = arith.subf %13, %22 : vector<2x2x40x128xf32>
    %24 = arith.mulf %23, %23 : vector<2x2x40x128xf32>
    %cst_14 = arith.constant dense<0.000000e+00> : vector<2x40xf32>
    %25 = vector.multi_reduction <add>, %24, %cst_14 [1, 3] : vector<2x2x40x128xf32> to vector<2x40xf32>
    %26 = vector.shape_cast %25 : vector<2x40xf32> to vector<2x1x40x1xf32>
    %27 = arith.mulf %21, %21 : vector<2x1x40x1xf32>
    %cst_15 = arith.constant 2.020000e+02 : f32
    %28 = vector.broadcast %cst_15 : f32 to vector<2x1x40x1xf32>
    %29 = arith.mulf %28, %27 : vector<2x1x40x1xf32>
    %30 = arith.subf %26, %29 : vector<2x1x40x1xf32>
    %cst_16 = arith.constant 0.0185185187 : f32
    %31 = vector.broadcast %cst_16 : f32 to vector<2x1x40x1xf32>
    %32 = arith.mulf %30, %31 : vector<2x1x40x1xf32>
    %cst_17 = arith.constant 0.000000e+00 : f32
    %33 = vector.broadcast %cst_17 : f32 to vector<2x1x40x1xf32>
    %34 = arith.maximumf %32, %33 : vector<2x1x40x1xf32>
    %cst_18 = arith.constant 9.99999974E-6 : f32
    %35 = vector.broadcast %cst_18 : f32 to vector<2x1x40x1xf32>
    %36 = arith.addf %34, %35 : vector<2x1x40x1xf32>
    %37 = math.rsqrt %36 : vector<2x1x40x1xf32>
    %38 = vector.broadcast %15 : vector<1x1x40x1xf32> to vector<2x1x40x1xf32>
    %39 = arith.mulf %37, %38 : vector<2x1x40x1xf32>
    %40 = arith.mulf %21, %39 : vector<2x1x40x1xf32>
    %41 = vector.broadcast %17 : vector<1x1x40x1xf32> to vector<2x1x40x1xf32>
    %42 = arith.subf %41, %40 : vector<2x1x40x1xf32>
    %43 = vector.broadcast %39 : vector<2x1x40x1xf32> to vector<2x2x40x128xf32>
    %44 = arith.mulf %13, %43 : vector<2x2x40x128xf32>
    %45 = vector.broadcast %42 : vector<2x1x40x1xf32> to vector<2x2x40x128xf32>
    %46 = arith.addf %44, %45 : vector<2x2x40x128xf32>
    %47 = vector.shape_cast %46 : vector<2x2x40x128xf32> to vector<160x128xf32>
    %cst_19 = arith.constant 0.000000e+00 : f32
    %48 = vector.broadcast %cst_19 : f32 to vector<160x128xf32>
    %49 = arith.maximumf %47, %48 : vector<160x128xf32>
    %c1 = arith.constant 1 : index
    %c0_20 = arith.constant 0 : index
    %c0_21 = arith.constant 0 : index
    %50 = vector.load %arg2[%c1, %c0_20, %c0_21] : memref<3x128x128xbf16, #tpu.memory_space<vmem>>, vector<1x128x128xbf16>
    %51 = vector.shape_cast %50 : vector<1x128x128xbf16> to vector<128x128xbf16>
    %52 = vector.extract_strided_slice %0 {offsets = [1, 0], sizes = [1, 128], strides = [1, 1]} : vector<4x128xf32> to vector<1x128xf32>
    %53 = arith.truncf %49 : vector<160x128xf32> to vector<160x128xbf16>
    %cst_22 = arith.constant dense<0.000000e+00> : vector<160x128xf32>
    %54 = tpu.matmul %53, %51, %cst_22 {dimension_numbers = #tpu.dot_dimension_numbers<[1], [0], [0], [1], [0, 0, 1, 1], [], []>} : vector<160x128xbf16>, vector<128x128xbf16>, vector<160x128xf32> -> vector<160x128xf32>
    %55 = vector.broadcast %52 : vector<1x128xf32> to vector<160x128xf32>
    %56 = arith.addf %54, %55 : vector<160x128xf32>
    %57 = vector.shape_cast %56 : vector<160x128xf32> to vector<2x2x40x128xf32>
    %58 = vector.extract_strided_slice %1 {offsets = [0, 2], sizes = [40, 1], strides = [1, 1]} : vector<40x8xf32> to vector<40x1xf32>
    %59 = vector.shape_cast %58 : vector<40x1xf32> to vector<1x1x40x1xf32>
    %60 = vector.extract_strided_slice %1 {offsets = [0, 3], sizes = [40, 1], strides = [1, 1]} : vector<40x8xf32> to vector<40x1xf32>
    %61 = vector.shape_cast %60 : vector<40x1xf32> to vector<1x1x40x1xf32>
    %cst_23 = arith.constant dense<0.000000e+00> : vector<2x40xf32>
    %62 = vector.multi_reduction <add>, %57, %cst_23 [1, 3] : vector<2x2x40x128xf32> to vector<2x40xf32>
    %63 = vector.shape_cast %62 : vector<2x40xf32> to vector<2x1x40x1xf32>
    %cst_24 = arith.constant 0.0185185187 : f32
    %64 = vector.broadcast %cst_24 : f32 to vector<2x1x40x1xf32>
    %65 = arith.mulf %63, %64 : vector<2x1x40x1xf32>
    %66 = vector.broadcast %65 : vector<2x1x40x1xf32> to vector<2x2x40x128xf32>
    %67 = arith.subf %57, %66 : vector<2x2x40x128xf32>
    %68 = arith.mulf %67, %67 : vector<2x2x40x128xf32>
    %cst_25 = arith.constant dense<0.000000e+00> : vector<2x40xf32>
    %69 = vector.multi_reduction <add>, %68, %cst_25 [1, 3] : vector<2x2x40x128xf32> to vector<2x40xf32>
    %70 = vector.shape_cast %69 : vector<2x40xf32> to vector<2x1x40x1xf32>
    %71 = arith.mulf %65, %65 : vector<2x1x40x1xf32>
    %cst_26 = arith.constant 2.020000e+02 : f32
    %72 = vector.broadcast %cst_26 : f32 to vector<2x1x40x1xf32>
    %73 = arith.mulf %72, %71 : vector<2x1x40x1xf32>
    %74 = arith.subf %70, %73 : vector<2x1x40x1xf32>
    %cst_27 = arith.constant 0.0185185187 : f32
    %75 = vector.broadcast %cst_27 : f32 to vector<2x1x40x1xf32>
    %76 = arith.mulf %74, %75 : vector<2x1x40x1xf32>
    %cst_28 = arith.constant 0.000000e+00 : f32
    %77 = vector.broadcast %cst_28 : f32 to vector<2x1x40x1xf32>
    %78 = arith.maximumf %76, %77 : vector<2x1x40x1xf32>
    %cst_29 = arith.constant 9.99999974E-6 : f32
    %79 = vector.broadcast %cst_29 : f32 to vector<2x1x40x1xf32>
    %80 = arith.addf %78, %79 : vector<2x1x40x1xf32>
    %81 = math.rsqrt %80 : vector<2x1x40x1xf32>
    %82 = vector.broadcast %59 : vector<1x1x40x1xf32> to vector<2x1x40x1xf32>
    %83 = arith.mulf %81, %82 : vector<2x1x40x1xf32>
    %84 = arith.mulf %65, %83 : vector<2x1x40x1xf32>
    %85 = vector.broadcast %61 : vector<1x1x40x1xf32> to vector<2x1x40x1xf32>
    %86 = arith.subf %85, %84 : vector<2x1x40x1xf32>
    %87 = vector.broadcast %83 : vector<2x1x40x1xf32> to vector<2x2x40x128xf32>
    %88 = arith.mulf %57, %87 : vector<2x2x40x128xf32>
    %89 = vector.broadcast %86 : vector<2x1x40x1xf32> to vector<2x2x40x128xf32>
    %90 = arith.addf %88, %89 : vector<2x2x40x128xf32>
    %91 = vector.shape_cast %90 : vector<2x2x40x128xf32> to vector<160x128xf32>
    %cst_30 = arith.constant 0.000000e+00 : f32
    %92 = vector.broadcast %cst_30 : f32 to vector<160x128xf32>
    %93 = arith.maximumf %91, %92 : vector<160x128xf32>
    %c2 = arith.constant 2 : index
    %c0_31 = arith.constant 0 : index
    %c0_32 = arith.constant 0 : index
    %94 = vector.load %arg2[%c2, %c0_31, %c0_32] : memref<3x128x128xbf16, #tpu.memory_space<vmem>>, vector<1x128x128xbf16>
    %95 = vector.shape_cast %94 : vector<1x128x128xbf16> to vector<128x128xbf16>
    %96 = vector.extract_strided_slice %0 {offsets = [2, 0], sizes = [1, 128], strides = [1, 1]} : vector<4x128xf32> to vector<1x128xf32>
    %97 = arith.truncf %93 : vector<160x128xf32> to vector<160x128xbf16>
    %cst_33 = arith.constant dense<0.000000e+00> : vector<160x128xf32>
    %98 = tpu.matmul %97, %95, %cst_33 {dimension_numbers = #tpu.dot_dimension_numbers<[1], [0], [0], [1], [0, 0, 1, 1], [], []>} : vector<160x128xbf16>, vector<128x128xbf16>, vector<160x128xf32> -> vector<160x128xf32>
    %99 = vector.broadcast %96 : vector<1x128xf32> to vector<160x128xf32>
    %100 = arith.addf %98, %99 : vector<160x128xf32>
    %101 = vector.shape_cast %100 : vector<160x128xf32> to vector<2x2x40x128xf32>
    %102 = vector.extract_strided_slice %1 {offsets = [0, 4], sizes = [40, 1], strides = [1, 1]} : vector<40x8xf32> to vector<40x1xf32>
    %103 = vector.shape_cast %102 : vector<40x1xf32> to vector<1x1x40x1xf32>
    %104 = vector.extract_strided_slice %1 {offsets = [0, 5], sizes = [40, 1], strides = [1, 1]} : vector<40x8xf32> to vector<40x1xf32>
    %105 = vector.shape_cast %104 : vector<40x1xf32> to vector<1x1x40x1xf32>
    %cst_34 = arith.constant dense<0.000000e+00> : vector<2x40xf32>
    %106 = vector.multi_reduction <add>, %101, %cst_34 [1, 3] : vector<2x2x40x128xf32> to vector<2x40xf32>
    %107 = vector.shape_cast %106 : vector<2x40xf32> to vector<2x1x40x1xf32>
    %cst_35 = arith.constant 0.0185185187 : f32
    %108 = vector.broadcast %cst_35 : f32 to vector<2x1x40x1xf32>
    %109 = arith.mulf %107, %108 : vector<2x1x40x1xf32>
    %110 = vector.broadcast %109 : vector<2x1x40x1xf32> to vector<2x2x40x128xf32>
    %111 = arith.subf %101, %110 : vector<2x2x40x128xf32>
    %112 = arith.mulf %111, %111 : vector<2x2x40x128xf32>
    %cst_36 = arith.constant dense<0.000000e+00> : vector<2x40xf32>
    %113 = vector.multi_reduction <add>, %112, %cst_36 [1, 3] : vector<2x2x40x128xf32> to vector<2x40xf32>
    %114 = vector.shape_cast %113 : vector<2x40xf32> to vector<2x1x40x1xf32>
    %115 = arith.mulf %109, %109 : vector<2x1x40x1xf32>
    %cst_37 = arith.constant 2.020000e+02 : f32
    %116 = vector.broadcast %cst_37 : f32 to vector<2x1x40x1xf32>
    %117 = arith.mulf %116, %115 : vector<2x1x40x1xf32>
    %118 = arith.subf %114, %117 : vector<2x1x40x1xf32>
    %cst_38 = arith.constant 0.0185185187 : f32
    %119 = vector.broadcast %cst_38 : f32 to vector<2x1x40x1xf32>
    %120 = arith.mulf %118, %119 : vector<2x1x40x1xf32>
    %cst_39 = arith.constant 0.000000e+00 : f32
    %121 = vector.broadcast %cst_39 : f32 to vector<2x1x40x1xf32>
    %122 = arith.maximumf %120, %121 : vector<2x1x40x1xf32>
    %cst_40 = arith.constant 9.99999974E-6 : f32
    %123 = vector.broadcast %cst_40 : f32 to vector<2x1x40x1xf32>
    %124 = arith.addf %122, %123 : vector<2x1x40x1xf32>
    %125 = math.rsqrt %124 : vector<2x1x40x1xf32>
    %126 = vector.broadcast %103 : vector<1x1x40x1xf32> to vector<2x1x40x1xf32>
    %127 = arith.mulf %125, %126 : vector<2x1x40x1xf32>
    %128 = arith.mulf %109, %127 : vector<2x1x40x1xf32>
    %129 = vector.broadcast %105 : vector<1x1x40x1xf32> to vector<2x1x40x1xf32>
    %130 = arith.subf %129, %128 : vector<2x1x40x1xf32>
    %131 = vector.broadcast %127 : vector<2x1x40x1xf32> to vector<2x2x40x128xf32>
    %132 = arith.mulf %101, %131 : vector<2x2x40x128xf32>
    %133 = vector.broadcast %130 : vector<2x1x40x1xf32> to vector<2x2x40x128xf32>
    %134 = arith.addf %132, %133 : vector<2x2x40x128xf32>
    %135 = vector.shape_cast %134 : vector<2x2x40x128xf32> to vector<160x128xf32>
    %136 = vector.shape_cast %135 : vector<160x128xf32> to vector<2x2x40x128xf32>
    %137 = vector.extract_strided_slice %136 {offsets = [0, 0, 0, 0], sizes = [1, 2, 40, 27], strides = [1, 1, 1, 1]} : vector<2x2x40x128xf32> to vector<1x2x40x27xf32>
    %138 = vector.shape_cast %137 : vector<1x2x40x27xf32> to vector<2x40x27xf32>
    %c0_41 = arith.constant 0 : index
    %c0_42 = arith.constant 0 : index
    %c0_43 = arith.constant 0 : index
    %139 = vector.load %arg10[%c0_41, %c0_42, %c0_43] : memref<2x40x27xf32, #tpu.memory_space<vmem>>, vector<2x40x27xf32>
    tpu.vector_store %arg10[%c0_41, %c0_42, %c0_43], %138 {strides = array<i32>} : memref<2x40x27xf32, #tpu.memory_space<vmem>>, vector<2x40x27xf32>,
    %140 = vector.extract_strided_slice %136 {offsets = [1, 0, 0, 0], sizes = [1, 2, 40, 27], strides = [1, 1, 1, 1]} : vector<2x2x40x128xf32> to vector<1x2x40x27xf32>
    %141 = vector.shape_cast %140 : vector<1x2x40x27xf32> to vector<2x40x27xf32>
    %c0_44 = arith.constant 0 : index
    %c0_45 = arith.constant 0 : index
    %c0_46 = arith.constant 0 : index
    %142 = vector.load %arg11[%c0_44, %c0_45, %c0_46] : memref<2x40x27xf32, #tpu.memory_space<vmem>>, vector<2x40x27xf32>
    tpu.vector_store %arg11[%c0_44, %c0_45, %c0_46], %141 {strides = array<i32>} : memref<2x40x27xf32, #tpu.memory_space<vmem>>, vector<2x40x27xf32>,
    %c0_47 = arith.constant 0 : index
    %c0_48 = arith.constant 0 : index
    %143 = vector.load %arg4[%c0_47, %c0_48] : memref<128x512xbf16, #tpu.memory_space<vmem>>, vector<128x512xbf16>
    %c0_49 = arith.constant 0 : index
    %c0_50 = arith.constant 0 : index
    %144 = vector.load %arg5[%c0_49, %c0_50] : memref<1x512xf32, #tpu.memory_space<vmem>>, vector<1x512xf32>
    %145 = arith.truncf %135 : vector<160x128xf32> to vector<160x128xbf16>
    %cst_51 = arith.constant dense<0.000000e+00> : vector<160x512xf32>
    %146 = tpu.matmul %145, %143, %cst_51 {dimension_numbers = #tpu.dot_dimension_numbers<[1], [0], [0], [1], [0, 0, 1, 1], [], []>} : vector<160x128xbf16>, vector<128x512xbf16>, vector<160x512xf32> -> vector<160x512xf32>
    %147 = vector.broadcast %144 : vector<1x512xf32> to vector<160x512xf32>
    %148 = arith.addf %146, %147 : vector<160x512xf32>
    %149 = vector.shape_cast %148 : vector<160x512xf32> to vector<2x2x40x512xf32>
    %150 = vector.extract_strided_slice %1 {offsets = [0, 6], sizes = [40, 1], strides = [1, 1]} : vector<40x8xf32> to vector<40x1xf32>
    %151 = vector.shape_cast %150 : vector<40x1xf32> to vector<1x1x40x1xf32>
    %152 = vector.extract_strided_slice %1 {offsets = [0, 7], sizes = [40, 1], strides = [1, 1]} : vector<40x8xf32> to vector<40x1xf32>
    %153 = vector.shape_cast %152 : vector<40x1xf32> to vector<1x1x40x1xf32>
    %cst_52 = arith.constant dense<0.000000e+00> : vector<2x40xf32>
    %154 = vector.multi_reduction <add>, %149, %cst_52 [1, 3] : vector<2x2x40x512xf32> to vector<2x40xf32>
    %155 = vector.shape_cast %154 : vector<2x40xf32> to vector<2x1x40x1xf32>
    %cst_53 = arith.constant 9.765625E-4 : f32
    %156 = vector.broadcast %cst_53 : f32 to vector<2x1x40x1xf32>
    %157 = arith.mulf %155, %156 : vector<2x1x40x1xf32>
    %158 = vector.broadcast %157 : vector<2x1x40x1xf32> to vector<2x2x40x512xf32>
    %159 = arith.subf %149, %158 : vector<2x2x40x512xf32>
    %160 = arith.mulf %159, %159 : vector<2x2x40x512xf32>
    %cst_54 = arith.constant dense<0.000000e+00> : vector<2x40xf32>
    %161 = vector.multi_reduction <add>, %160, %cst_54 [1, 3] : vector<2x2x40x512xf32> to vector<2x40xf32>
    %162 = vector.shape_cast %161 : vector<2x40xf32> to vector<2x1x40x1xf32>
    %cst_55 = arith.constant 9.765625E-4 : f32
    %163 = vector.broadcast %cst_55 : f32 to vector<2x1x40x1xf32>
    %164 = arith.mulf %162, %163 : vector<2x1x40x1xf32>
    %cst_56 = arith.constant 0.000000e+00 : f32
    %165 = vector.broadcast %cst_56 : f32 to vector<2x1x40x1xf32>
    %166 = arith.maximumf %164, %165 : vector<2x1x40x1xf32>
    %cst_57 = arith.constant 9.99999974E-6 : f32
    %167 = vector.broadcast %cst_57 : f32 to vector<2x1x40x1xf32>
    %168 = arith.addf %166, %167 : vector<2x1x40x1xf32>
    %169 = math.rsqrt %168 : vector<2x1x40x1xf32>
    %170 = vector.broadcast %151 : vector<1x1x40x1xf32> to vector<2x1x40x1xf32>
    %171 = arith.mulf %169, %170 : vector<2x1x40x1xf32>
    %172 = arith.mulf %157, %171 : vector<2x1x40x1xf32>
    %173 = vector.broadcast %153 : vector<1x1x40x1xf32> to vector<2x1x40x1xf32>
    %174 = arith.subf %173, %172 : vector<2x1x40x1xf32>
    %175 = vector.broadcast %171 : vector<2x1x40x1xf32> to vector<2x2x40x512xf32>
    %176 = arith.mulf %149, %175 : vector<2x2x40x512xf32>
    %177 = vector.broadcast %174 : vector<2x1x40x1xf32> to vector<2x2x40x512xf32>
    %178 = arith.addf %176, %177 : vector<2x2x40x512xf32>
    %179 = vector.shape_cast %178 : vector<2x2x40x512xf32> to vector<160x512xf32>
    %cst_58 = arith.constant 0.000000e+00 : f32
    %180 = vector.broadcast %cst_58 : f32 to vector<160x512xf32>
    %181 = arith.maximumf %179, %180 : vector<160x512xf32>
    %c0_59 = arith.constant 0 : index
    %c0_60 = arith.constant 0 : index
    %182 = vector.load %arg6[%c0_59, %c0_60] : memref<512x128xbf16, #tpu.memory_space<vmem>>, vector<512x128xbf16>
    %183 = vector.extract_strided_slice %0 {offsets = [3, 0], sizes = [1, 128], strides = [1, 1]} : vector<4x128xf32> to vector<1x128xf32>
    %184 = arith.truncf %181 : vector<160x512xf32> to vector<160x512xbf16>
    %cst_61 = arith.constant dense<0.000000e+00> : vector<160x128xf32>
    %185 = tpu.matmul %184, %182, %cst_61 {dimension_numbers = #tpu.dot_dimension_numbers<[1], [0], [0], [1], [0, 0, 1, 1], [], []>} : vector<160x512xbf16>, vector<512x128xbf16>, vector<160x128xf32> -> vector<160x128xf32>
    %186 = vector.broadcast %183 : vector<1x128xf32> to vector<160x128xf32>
    %187 = arith.addf %185, %186 : vector<160x128xf32>
    %188 = vector.shape_cast %187 : vector<160x128xf32> to vector<2x2x40x128xf32>
    %189 = vector.extract_strided_slice %188 {offsets = [0, 0, 0, 0], sizes = [1, 2, 40, 27], strides = [1, 1, 1, 1]} : vector<2x2x40x128xf32> to vector<1x2x40x27xf32>
    %190 = vector.shape_cast %189 : vector<1x2x40x27xf32> to vector<2x40x27xf32>
    %c0_62 = arith.constant 0 : index
    %c0_63 = arith.constant 0 : index
    %c0_64 = arith.constant 0 : index
    %191 = vector.load %arg8[%c0_62, %c0_63, %c0_64] : memref<2x40x27xf32, #tpu.memory_space<vmem>>, vector<2x40x27xf32>
    tpu.vector_store %arg8[%c0_62, %c0_63, %c0_64], %190 {strides = array<i32>} : memref<2x40x27xf32, #tpu.memory_space<vmem>>, vector<2x40x27xf32>,
    %192 = vector.extract_strided_slice %188 {offsets = [1, 0, 0, 0], sizes = [1, 2, 40, 27], strides = [1, 1, 1, 1]} : vector<2x2x40x128xf32> to vector<1x2x40x27xf32>
    %193 = vector.shape_cast %192 : vector<1x2x40x27xf32> to vector<2x40x27xf32>
    %c0_65 = arith.constant 0 : index
    %c0_66 = arith.constant 0 : index
    %c0_67 = arith.constant 0 : index
    %194 = vector.load %arg9[%c0_65, %c0_66, %c0_67] : memref<2x40x27xf32, #tpu.memory_space<vmem>>, vector<2x40x27xf32>
    tpu.vector_store %arg9[%c0_65, %c0_66, %c0_67], %193 {strides = array<i32>} : memref<2x40x27xf32, #tpu.memory_space<vmem>>, vector<2x40x27xf32>,
    return
  }
}

</mosaic_0001>

<llo_original>
// kernel: simsiam_forward.1
$region0: #{simsiam_forward.1}
  #allocation0 [shape = 'u32[]', space=smem, size = 0x4, offset = 0x4, fixed_abs, tag = 'smem constant byte address 0x4 - core index']
  #allocation1 [shape = 'u32[144,128]{1,0:T(1,128)}', space=vmem, size = 0x12000, scoped, tag = 'internal scratch']
  %s0 = inlined_call_operand.vmem [shape: f32[2,40,128], index: 0, kind: input, shape index: {}]
  %s1 = inlined_call_operand.vmem [shape: f32[2,40,128], index: 1, kind: input, shape index: {}]
  %s2 = inlined_call_operand.hbm [shape: bf16[3,128,128], index: 2, kind: input, shape index: {}]
  %s3 = inlined_call_operand.vmem [shape: f32[4,128], index: 3, kind: input, shape index: {}]
  %s4 = inlined_call_operand.vmem [shape: bf16[128,512], index: 4, kind: input, shape index: {}]
  %s5 = inlined_call_operand.vmem [shape: f32[1,512], index: 5, kind: input, shape index: {}]
  %s6 = inlined_call_operand.vmem [shape: bf16[512,128], index: 6, kind: input, shape index: {}]
  %s7 = inlined_call_operand.vmem [shape: f32[40,8], index: 7, kind: input, shape index: {}]
  %s8 = inlined_call_operand.vmem [shape: f32[2,40,27], index: 8, kind: output, shape index: {0}]
  %s9 = inlined_call_operand.vmem [shape: f32[2,40,27], index: 9, kind: output, shape index: {1}]
  %s10 = inlined_call_operand.vmem [shape: f32[2,40,27], index: 10, kind: output, shape index: {2}]
  %s11 = inlined_call_operand.vmem [shape: f32[2,40,27], index: 11, kind: output, shape index: {3}]
  %12 = xla_tuple %s8, %s9, %s10, %s11
  %s13 = sld [smem:[#allocation0]]
  $region70: #{simsiam_forward.1} parent=0
    _
  %s15 = ssub.s32 1, %s13
  %s16 = scalar_select 0, %s15, %s13
  $region1: #{simsiam_forward.1} parent=0
    #allocation2 [shape = 'u8[98304]{0}', space=vmem, size = 0x18000, scoped, tag = 'input window, operand 2, single buffered']
    #allocation3 [shape = 's32[1]{0}', space=sflag, size = 0x4, scoped, tag = 'scoped memory for simsiam_forward.1']
    %17 = vsyncpa [#allocation3], 0
    // Predicated region
    $region2: #{simsiam_forward.1} parent=1 // pred_check
      _
    $region3: #{simsiam_forward.1} parent=1 // pred_check_branch
      %19 = sbr.rel (0) target = $region5
    $region4: #{simsiam_forward.1} parent=1 // pred_region
      _
    $region5: #{simsiam_forward.1} parent=1 // pred_fallthru
      _
    // Predicated region
    $region6: #{simsiam_forward.1} parent=1 // pred_check
      _
    $region7: #{simsiam_forward.1} parent=1 // pred_check_branch
      %21 = sbr.rel (0) target = $region9
    $region8: #{simsiam_forward.1} parent=1 // pred_region
      _
    $region9: #{simsiam_forward.1} parent=1 // pred_fallthru
      _
    // Predicated region
    $region10: #{simsiam_forward.1} parent=1 // pred_check
      _
    $region11: #{simsiam_forward.1} parent=1 // pred_check_branch
      %23 = sbr.rel (0) target = $region13
    $region12: #{simsiam_forward.1} parent=1 // pred_region
      %s25 = ssub.s32 3072, 3072
      %26 = vsyncadd [#allocation3], %s25
      %s27 = sshll.u32 [#allocation2], 4
      %s28 = int_to_ptr.vmem [resolvable:$true] %s27
      %33 = dma.hbm_to_vmem [thread:$0]  %s2, 3072, %s28, [#allocation3], 64, 64, 4
    $region13: #{simsiam_forward.1} parent=1 // pred_fallthru
      _
    // Predicated region
    $region14: #{simsiam_forward.1} parent=1 // pred_check
      _
    $region15: #{simsiam_forward.1} parent=1 // pred_check_branch
      %35 = sbr.rel (0) target = $region17
    $region16: #{simsiam_forward.1} parent=1 // pred_region
      _
    $region17: #{simsiam_forward.1} parent=1 // pred_fallthru
      _
    // Predicated region
    $region18: #{simsiam_forward.1} parent=1 // pred_check
      _
    $region19: #{simsiam_forward.1} parent=1 // pred_check_branch
      %37 = sbr.rel (0) target = $region21
    $region20: #{simsiam_forward.1} parent=1 // pred_region
      _
    $region21: #{simsiam_forward.1} parent=1 // pred_fallthru
      _
    // Predicated region
    $region22: #{simsiam_forward.1} parent=1 // pred_check
      _
    $region23: #{simsiam_forward.1} parent=1 // pred_check_branch
      %39 = sbr.rel (0) target = $region25
    $region24: #{simsiam_forward.1} parent=1 // pred_region
      _
    $region25: #{simsiam_forward.1} parent=1 // pred_fallthru
      _
    // Predicated region
    $region26: #{simsiam_forward.1} parent=1 // pred_check
      _
    $region27: #{simsiam_forward.1} parent=1 // pred_check_branch
      %41 = sbr.rel (0) target = $region29
    $region28: #{simsiam_forward.1} parent=1 // pred_region
      _
    $region29: #{simsiam_forward.1} parent=1 // pred_fallthru
      _
    // Predicated region
    $region30: #{simsiam_forward.1} parent=1 // pred_check
      _
    $region31: #{simsiam_forward.1} parent=1 // pred_check_branch
      %43 = sbr.rel (0) target = $region33
    $region32: #{simsiam_forward.1} parent=1 // pred_region
      _
    $region33: #{simsiam_forward.1} parent=1 // pred_fallthru
      _
    // Predicated region
    $region34: #{simsiam_forward.1} parent=1 // pred_check
      _
    $region35: #{simsiam_forward.1} parent=1 // pred_check_branch
      %45 = sbr.rel (0) target = $region37
    $region36: #{simsiam_forward.1} parent=1 // pred_region
      %46 = dma.done [#allocation3], 3072
    $region37: #{simsiam_forward.1} parent=1 // pred_fallthru
      _
    %v48 = vld [vmem:[%s3] sm:$0xf]
    %v49 = vld [vmem:[%s7] sm:$0xff]
    %v50 = vld [vmem:[%s7 + $0x8] sm:$0xff]
    %v51 = vld [vmem:[%s7 + $0x10] sm:$0xff]
    %v52 = vld [vmem:[%s7 + $0x18] sm:$0xff]
    %v53 = vld [vmem:[%s7 + $0x20] sm:$0xff]
    %v54 = vld [vmem:[%s0] sm:$0xff]
    %v55 = vld [vmem:[%s0 + $0x8] sm:$0xff]
    %v56 = vld [vmem:[%s0 + $0x10] sm:$0xff]
    %v57 = vld [vmem:[%s0 + $0x18] sm:$0xff]
    %v58 = vld [vmem:[%s0 + $0x20] sm:$0xff]
    %v59 = vld [vmem:[%s0 + $0x28] sm:$0xff]
    %v60 = vld [vmem:[%s0 + $0x30] sm:$0xff]
    %v61 = vld [vmem:[%s0 + $0x38] sm:$0xff]
    %v62 = vld [vmem:[%s0 + $0x40] sm:$0xff]
    %v63 = vld [vmem:[%s0 + $0x48] sm:$0xff]
    %v64 = vld [vmem:[%s1] sm:$0xff]
    %v65 = vld [vmem:[%s1 + $0x8] sm:$0xff]
    %v66 = vld [vmem:[%s1 + $0x10] sm:$0xff]
    %v67 = vld [vmem:[%s1 + $0x18] sm:$0xff]
    %v68 = vld [vmem:[%s1 + $0x20] sm:$0xff]
    %v69 = vld [vmem:[%s1 + $0x28] sm:$0xff]
    %v70 = vld [vmem:[%s1 + $0x30] sm:$0xff]
    %v71 = vld [vmem:[%s1 + $0x38] sm:$0xff]
    %v72 = vld [vmem:[%s1 + $0x40] sm:$0xff]
    %v73 = vld [vmem:[%s1 + $0x48] sm:$0xff]
    %v74 = vld [vmem:[#allocation2] sm:$0xf]
    %v75 = vld [vmem:[#allocation2 + $0x4] sm:$0xf]
    %v76 = vld [vmem:[#allocation2 + $0x8] sm:$0xf]
    %v77 = vld [vmem:[#allocation2 + $0xc] sm:$0xf]
    %v78 = vld [vmem:[#allocation2 + $0x10] sm:$0xf]
    %v79 = vld [vmem:[#allocation2 + $0x14] sm:$0xf]
    %v80 = vld [vmem:[#allocation2 + $0x18] sm:$0xf]
    %v81 = vld [vmem:[#allocation2 + $0x1c] sm:$0xf]
    %v82 = vld [vmem:[#allocation2 + $0x20] sm:$0xf]
    %v83 = vld [vmem:[#allocation2 + $0x24] sm:$0xf]
    %v84 = vld [vmem:[#allocation2 + $0x28] sm:$0xf]
    %v85 = vld [vmem:[#allocation2 + $0x2c] sm:$0xf]
    %v86 = vld [vmem:[#allocation2 + $0x30] sm:$0xf]
    %v87 = vld [vmem:[#allocation2 + $0x34] sm:$0xf]
    %v88 = vld [vmem:[#allocation2 + $0x38] sm:$0xf]
    %v89 = vld [vmem:[#allocation2 + $0x3c] sm:$0xf]
    %v90 = vpack.c.bf16 %v55, %v54
    %v91 = vpack.c.bf16 %v57, %v56
    %v92 = vpack.c.bf16 %v59, %v58
    %v93 = vpack.c.bf16 %v61, %v60
    %v94 = vpack.c.bf16 %v63, %v62
    %v95 = vpack.c.bf16 %v65, %v64
    %v96 = vpack.c.bf16 %v67, %v66
    %v97 = vpack.c.bf16 %v69, %v68
    %v98 = vpack.c.bf16 %v71, %v70
    %v99 = vpack.c.bf16 %v73, %v72
    %v100 = vlaneseq
    %v101 = vshrl.u32 %v100, 7
    %v102 = vsub.s32 0, %v101
    %v103 = vrot.slane %v48, %v102
    %v120 = vunpack.c.l.b16 %v74
    %v121 = vunpack.c.l.b16 %v75
    %v122 = vunpack.c.l.b16 %v76
    %v123 = vunpack.c.l.b16 %v77
    %v124 = vunpack.c.l.b16 %v78
    %v125 = vunpack.c.l.b16 %v79
    %v126 = vunpack.c.l.b16 %v80
    %v127 = vunpack.c.l.b16 %v81
    %v128 = vunpack.c.l.b16 %v82
    %v129 = vunpack.c.l.b16 %v83
    %v130 = vunpack.c.l.b16 %v84
    %v131 = vunpack.c.l.b16 %v85
    %v132 = vunpack.c.l.b16 %v86
    %v133 = vunpack.c.l.b16 %v87
    %v134 = vunpack.c.l.b16 %v88
    %v135 = vunpack.c.l.b16 %v89
    %v136 = vpack.c.b16 %v121, %v120
    %v137 = vpack.c.b16 %v123, %v122
    %v138 = vpack.c.b16 %v125, %v124
    %v139 = vpack.c.b16 %v127, %v126
    %v140 = vpack.c.b16 %v129, %v128
    %v141 = vpack.c.b16 %v131, %v130
    %v142 = vpack.c.b16 %v133, %v132
    %v143 = vpack.c.b16 %v135, %v134
    %152 = vmatprep.subr.bf16.mxu0 0
    %153 = vmatpush1.bf16.msra.mxu0 %v136
    %154 = vmatprep.subr.bf16.mxu0 0
    %155 = vmatpush1.bf16.msra.mxu0 %v137
    %156 = vmatprep.subr.bf16.mxu0 0
    %157 = vmatpush1.bf16.msra.mxu0 %v138
    %158 = vmatprep.subr.bf16.mxu0 0
    %159 = vmatpush1.bf16.msra.mxu0 %v139
    %160 = vmatprep.subr.bf16.mxu0 0
    %161 = vmatpush1.bf16.msra.mxu0 %v140
    %162 = vmatprep.subr.bf16.mxu0 0
    %163 = vmatpush1.bf16.msra.mxu0 %v141
    %164 = vmatprep.subr.bf16.mxu0 0
    %165 = vmatpush1.bf16.msra.mxu0 %v142
    %166 = vmatprep.subr.bf16.mxu0 0
    %167 = vmatpush1.bf16.msra.mxu0 %v143
    %168 = vmatprep.subr.bf16.mxu0 0
    %169 = vmatpush1.bf16.msra.mxu0 0
    %170 = vmatprep.subr.bf16.mxu0 0
    %171 = vmatpush1.bf16.msra.mxu0 0
    %172 = vmatprep.subr.bf16.mxu0 0
    %173 = vmatpush1.bf16.msra.mxu0 0
    %174 = vmatprep.subr.bf16.mxu0 0
    %175 = vmatpush1.bf16.msra.mxu0 0
    %176 = vmatprep.subr.bf16.mxu0 0
    %177 = vmatpush1.bf16.msra.mxu0 0
    %178 = vmatprep.subr.bf16.mxu0 0
    %179 = vmatpush1.bf16.msra.mxu0 0
    %180 = vmatprep.subr.bf16.mxu0 0
    %181 = vmatpush1.bf16.msra.mxu0 0
    %182 = vmatprep.subr.bf16.mxu0 0
    %183 = vmatpush1.bf16.msra.mxu0 0
    %184 = vmatprep.mubr.bf16.mxu0 0
    %185 = vmatmul.mubr.bf16.gmra.mrb[0].mxu0 %v90
    %v186 = vpop.f32.mrb[0].mxu0
    %v187 = vadd.f32 %v103, %v186
    %v188 = vpop.f32.mrb[0].mxu0
    %v189 = vpop.f32.mrb[0].mxu0
    %v190 = vadd.f32 %v103, %v189
    %v191 = vpop.f32.mrb[0].mxu0
    %192 = vmatprep.mubr.bf16.mxu0 0
    %193 = vmatmul.mubr.bf16.gmra.mrb[0].mxu0 %v91
    %v194 = vpop.f32.mrb[0].mxu0
    %v195 = vadd.f32 %v103, %v194
    %v196 = vpop.f32.mrb[0].mxu0
    %v197 = vpop.f32.mrb[0].mxu0
    %v198 = vadd.f32 %v103, %v197
    %v199 = vpop.f32.mrb[0].mxu0
    %200 = vmatprep.mubr.bf16.mxu0 0
    %201 = vmatmul.mubr.bf16.gmra.mrb[0].mxu0 %v92
    %v202 = vpop.f32.mrb[0].mxu0
    %v203 = vadd.f32 %v103, %v202
    %v204 = vpop.f32.mrb[0].mxu0
    %v205 = vpop.f32.mrb[0].mxu0
    %v206 = vadd.f32 %v103, %v205
    %v207 = vpop.f32.mrb[0].mxu0
    %208 = vmatprep.mubr.bf16.mxu0 0
    %209 = vmatmul.mubr.bf16.gmra.mrb[0].mxu0 %v93
    %v210 = vpop.f32.mrb[0].mxu0
    %v211 = vadd.f32 %v103, %v210
    %v212 = vpop.f32.mrb[0].mxu0
    %v213 = vpop.f32.mrb[0].mxu0
    %v214 = vadd.f32 %v103, %v213
    %v215 = vpop.f32.mrb[0].mxu0
    %216 = vmatprep.mubr.bf16.mxu0 0
    %217 = vmatmul.mubr.bf16.gmra.mrb[0].mxu0 %v94
    %v218 = vpop.f32.mrb[0].mxu0
    %v219 = vadd.f32 %v103, %v218
    %v220 = vpop.f32.mrb[0].mxu0
    %v221 = vpop.f32.mrb[0].mxu0
    %v222 = vadd.f32 %v103, %v221
    %v223 = vpop.f32.mrb[0].mxu0
    %224 = vmatprep.mubr.bf16.mxu0 0
    %225 = vmatmul.mubr.bf16.gmra.mrb[0].mxu0 %v95
    %v226 = vpop.f32.mrb[0].mxu0
    %v227 = vadd.f32 %v103, %v226
    %v228 = vpop.f32.mrb[0].mxu0
    %v229 = vpop.f32.mrb[0].mxu0
    %v230 = vadd.f32 %v103, %v229
    %v231 = vpop.f32.mrb[0].mxu0
    %232 = vmatprep.mubr.bf16.mxu0 0
    %233 = vmatmul.mubr.bf16.gmra.mrb[0].mxu0 %v96
    %v234 = vpop.f32.mrb[0].mxu0
    %v235 = vadd.f32 %v103, %v234
    %v236 = vpop.f32.mrb[0].mxu0
    %v237 = vpop.f32.mrb[0].mxu0
    %v238 = vadd.f32 %v103, %v237
    %v239 = vpop.f32.mrb[0].mxu0
    %240 = vmatprep.mubr.bf16.mxu0 0
    %241 = vmatmul.mubr.bf16.gmra.mrb[0].mxu0 %v97
    %v242 = vpop.f32.mrb[0].mxu0
    %v243 = vadd.f32 %v103, %v242
    %v244 = vpop.f32.mrb[0].mxu0
    %v245 = vpop.f32.mrb[0].mxu0
    %v246 = vadd.f32 %v103, %v245
    %v247 = vpop.f32.mrb[0].mxu0
    %248 = vmatprep.mubr.bf16.mxu0 0
    %249 = vmatmul.mubr.bf16.gmra.mrb[0].mxu0 %v98
    %v250 = vpop.f32.mrb[0].mxu0
    %v251 = vadd.f32 %v103, %v250
    %v252 = vpop.f32.mrb[0].mxu0
    %v253 = vpop.f32.mrb[0].mxu0
    %v254 = vadd.f32 %v103, %v253
    %v255 = vpop.f32.mrb[0].mxu0
    %256 = vmatprep.mubr.bf16.mxu0 0
    %257 = vmatmul.mubr.bf16.gmra.mrb[0].mxu0 %v99
    %v258 = vpop.f32.mrb[0].mxu0
    %v259 = vadd.f32 %v103, %v258
    %v260 = vpop.f32.mrb[0].mxu0
    %v261 = vpop.f32.mrb[0].mxu0
    %v262 = vadd.f32 %v103, %v261
    %v263 = vpop.f32.mrb[0].mxu0
    %264 = vdwg.mxu0
    %v265 = vadd.f32 %v187, %v206
    %266 = vadd.xlane.f32.xlu0 %v265
    %v267 = vpop.xlane.xlu0 %266
    %v268 = vadd.f32 %v190, %v211
    %269 = vadd.xlane.f32.xlu0 %v268
    %v270 = vpop.xlane.xlu0 %269
    %v271 = vadd.f32 %v195, %v214
    %272 = vadd.xlane.f32.xlu0 %v271
    %v273 = vpop.xlane.xlu0 %272
    %v274 = vadd.f32 %v198, %v219
    %275 = vadd.xlane.f32.xlu0 %v274
    %v276 = vpop.xlane.xlu0 %275
    %v277 = vadd.f32 %v203, %v222
    %278 = vadd.xlane.f32.xlu0 %v277
    %v279 = vpop.xlane.xlu0 %278
    %v280 = vadd.f32 %v227, %v246
    %281 = vadd.xlane.f32.xlu0 %v280
    %v282 = vpop.xlane.xlu0 %281
    %v283 = vadd.f32 %v230, %v251
    %284 = vadd.xlane.f32.xlu0 %v283
    %v285 = vpop.xlane.xlu0 %284
    %v286 = vadd.f32 %v235, %v254
    %287 = vadd.xlane.f32.xlu0 %v286
    %v288 = vpop.xlane.xlu0 %287
    %v289 = vadd.f32 %v238, %v259
    %290 = vadd.xlane.f32.xlu0 %v289
    %v291 = vpop.xlane.xlu0 %290
    %v292 = vadd.f32 %v243, %v262
    %293 = vadd.xlane.f32.xlu0 %v292
    %v294 = vpop.xlane.xlu0 %293
    %v295 = vmul.f32 %v267, 0.018518519
    %v296 = vmul.f32 %v270, 0.018518519
    %v297 = vmul.f32 %v273, 0.018518519
    %v298 = vmul.f32 %v276, 0.018518519
    %v299 = vmul.f32 %v279, 0.018518519
    %v300 = vmul.f32 %v282, 0.018518519
    %v301 = vmul.f32 %v285, 0.018518519
    %v302 = vmul.f32 %v288, 0.018518519
    %v303 = vmul.f32 %v291, 0.018518519
    %v304 = vmul.f32 %v294, 0.018518519
    %v305 = vsub.f32 %v187, %v295
    %v306 = vsub.f32 %v190, %v296
    %v307 = vsub.f32 %v195, %v297
    %v308 = vsub.f32 %v198, %v298
    %v309 = vsub.f32 %v203, %v299
    %v310 = vsub.f32 %v206, %v295
    %v311 = vsub.f32 %v211, %v296
    %v312 = vsub.f32 %v214, %v297
    %v313 = vsub.f32 %v219, %v298
    %v314 = vsub.f32 %v222, %v299
    %v315 = vsub.f32 %v227, %v300
    %v316 = vsub.f32 %v230, %v301
    %v317 = vsub.f32 %v235, %v302
    %v318 = vsub.f32 %v238, %v303
    %v319 = vsub.f32 %v243, %v304
    %v320 = vsub.f32 %v246, %v300
    %v321 = vsub.f32 %v251, %v301
    %v322 = vsub.f32 %v254, %v302
    %v323 = vsub.f32 %v259, %v303
    %v324 = vsub.f32 %v262, %v304
    %v325 = vmul.f32 %v305, %v305
    %v326 = vmul.f32 %v306, %v306
    %v327 = vmul.f32 %v307, %v307
    %v328 = vmul.f32 %v308, %v308
    %v329 = vmul.f32 %v309, %v309
    %v330 = vmul.f32 %v310, %v310
    %v331 = vmul.f32 %v311, %v311
    %v332 = vmul.f32 %v312, %v312
    %v333 = vmul.f32 %v313, %v313
    %v334 = vmul.f32 %v314, %v314
    %v335 = vmul.f32 %v315, %v315
    %v336 = vmul.f32 %v316, %v316
    %v337 = vmul.f32 %v317, %v317
    %v338 = vmul.f32 %v318, %v318
    %v339 = vmul.f32 %v319, %v319
    %v340 = vmul.f32 %v320, %v320
    %v341 = vmul.f32 %v321, %v321
    %v342 = vmul.f32 %v322, %v322
    %v343 = vmul.f32 %v323, %v323
    %v344 = vmul.f32 %v324, %v324
    %v345 = vadd.f32 %v325, %v330
    %346 = vadd.xlane.f32.xlu0 %v345
    %v347 = vpop.xlane.xlu0 %346
    %v348 = vadd.f32 %v326, %v331
    %349 = vadd.xlane.f32.xlu0 %v348
    %v350 = vpop.xlane.xlu0 %349
    %v351 = vadd.f32 %v327, %v332
    %352 = vadd.xlane.f32.xlu0 %v351
    %v353 = vpop.xlane.xlu0 %352
    %v354 = vadd.f32 %v328, %v333
    %355 = vadd.xlane.f32.xlu0 %v354
    %v356 = vpop.xlane.xlu0 %355
    %v357 = vadd.f32 %v329, %v334
    %358 = vadd.xlane.f32.xlu0 %v357
    %v359 = vpop.xlane.xlu0 %358
    %v360 = vadd.f32 %v335, %v340
    %361 = vadd.xlane.f32.xlu0 %v360
    %v362 = vpop.xlane.xlu0 %361
    %v363 = vadd.f32 %v336, %v341
    %364 = vadd.xlane.f32.xlu0 %v363
    %v365 = vpop.xlane.xlu0 %364
    %v366 = vadd.f32 %v337, %v342
    %367 = vadd.xlane.f32.xlu0 %v366
    %v368 = vpop.xlane.xlu0 %367
    %v369 = vadd.f32 %v338, %v343
    %370 = vadd.xlane.f32.xlu0 %v369
    %v371 = vpop.xlane.xlu0 %370
    %v372 = vadd.f32 %v339, %v344
    %373 = vadd.xlane.f32.xlu0 %v372
    %v374 = vpop.xlane.xlu0 %373
    %v375 = vmul.f32 %v295, %v295
    %v376 = vmul.f32 %v296, %v296
    %v377 = vmul.f32 %v297, %v297
    %v378 = vmul.f32 %v298, %v298
    %v379 = vmul.f32 %v299, %v299
    %v380 = vmul.f32 %v300, %v300
    %v381 = vmul.f32 %v301, %v301
    %v382 = vmul.f32 %v302, %v302
    %v383 = vmul.f32 %v303, %v303
    %v384 = vmul.f32 %v304, %v304
    %v385 = vmul.f32 %v375, 202.0
    %v386 = vmul.f32 %v376, 202.0
    %v387 = vmul.f32 %v377, 202.0
    %v388 = vmul.f32 %v378, 202.0
    %v389 = vmul.f32 %v379, 202.0
    %v390 = vmul.f32 %v380, 202.0
    %v391 = vmul.f32 %v381, 202.0
    %v392 = vmul.f32 %v382, 202.0
    %v393 = vmul.f32 %v383, 202.0
    %v394 = vmul.f32 %v384, 202.0
    %v395 = vsub.f32 %v347, %v385
    %v396 = vsub.f32 %v350, %v386
    %v397 = vsub.f32 %v353, %v387
    %v398 = vsub.f32 %v356, %v388
    %v399 = vsub.f32 %v359, %v389
    %v400 = vsub.f32 %v362, %v390
    %v401 = vsub.f32 %v365, %v391
    %v402 = vsub.f32 %v368, %v392
    %v403 = vsub.f32 %v371, %v393
    %v404 = vsub.f32 %v374, %v394
    %v405 = vmul.f32 %v395, 0.018518519
    %v406 = vmul.f32 %v396, 0.018518519
    %v407 = vmul.f32 %v397, 0.018518519
    %v408 = vmul.f32 %v398, 0.018518519
    %v409 = vmul.f32 %v399, 0.018518519
    %v410 = vmul.f32 %v400, 0.018518519
    %v411 = vmul.f32 %v401, 0.018518519
    %v412 = vmul.f32 %v402, 0.018518519
    %v413 = vmul.f32 %v403, 0.018518519
    %v414 = vmul.f32 %v404, 0.018518519
    %v415 = vmax.f32 %v405, 0.0
    %v416 = vmax.f32 %v406, 0.0
    %v417 = vmax.f32 %v407, 0.0
    %v418 = vmax.f32 %v408, 0.0
    %v419 = vmax.f32 %v409, 0.0
    %v420 = vmax.f32 %v410, 0.0
    %v421 = vmax.f32 %v411, 0.0
    %v422 = vmax.f32 %v412, 0.0
    %v423 = vmax.f32 %v413, 0.0
    %v424 = vmax.f32 %v414, 0.0
    %v425 = vadd.f32 %v415, 1e-05
    %v426 = vadd.f32 %v416, 1e-05
    %v427 = vadd.f32 %v417, 1e-05
    %v428 = vadd.f32 %v418, 1e-05
    %v429 = vadd.f32 %v419, 1e-05
    %v430 = vadd.f32 %v420, 1e-05
    %v431 = vadd.f32 %v421, 1e-05
    %v432 = vadd.f32 %v422, 1e-05
    %v433 = vadd.f32 %v423, 1e-05
    %v434 = vadd.f32 %v424, 1e-05
    %v435 = vrsqrt.pop %v425
    %v436 = vrsqrt.pop %v426
    %v437 = vrsqrt.pop %v427
    %v438 = vrsqrt.pop %v428
    %v439 = vrsqrt.pop %v429
    %v440 = vrsqrt.pop %v430
    %v441 = vrsqrt.pop %v431
    %v442 = vrsqrt.pop %v432
    %v443 = vrsqrt.pop %v433
    %v444 = vrsqrt.pop %v434
    %v445 = vmul.f32 %v435, %v49
    %v446 = vmul.f32 %v436, %v50
    %v447 = vmul.f32 %v437, %v51
    %v448 = vmul.f32 %v438, %v52
    %v449 = vmul.f32 %v439, %v53
    %v450 = vmul.f32 %v440, %v49
    %v451 = vmul.f32 %v441, %v50
    %v452 = vmul.f32 %v442, %v51
    %v453 = vmul.f32 %v443, %v52
    %v454 = vmul.f32 %v444, %v53
    %v455 = vmul.f32 %v295, %v445
    %v456 = vmul.f32 %v296, %v446
    %v457 = vmul.f32 %v297, %v447
    %v458 = vmul.f32 %v298, %v448
    %v459 = vmul.f32 %v299, %v449
    %v460 = vmul.f32 %v300, %v450
    %v461 = vmul.f32 %v301, %v451
    %v462 = vmul.f32 %v302, %v452
    %v463 = vmul.f32 %v303, %v453
    %v464 = vmul.f32 %v304, %v454
    %475 = vrot.lane.b32.xlu0 %v455, 1
    %v476 = vpop.permute.xlu0 %475
    %477 = vrot.lane.b32.xlu0 %v456, 1
    %v478 = vpop.permute.xlu0 %477
    %479 = vrot.lane.b32.xlu0 %v457, 1
    %v480 = vpop.permute.xlu0 %479
    %481 = vrot.lane.b32.xlu0 %v458, 1
    %v482 = vpop.permute.xlu0 %481
    %483 = vrot.lane.b32.xlu0 %v459, 1
    %v484 = vpop.permute.xlu0 %483
    %485 = vrot.lane.b32.xlu0 %v460, 1
    %v486 = vpop.permute.xlu0 %485
    %487 = vrot.lane.b32.xlu0 %v461, 1
    %v488 = vpop.permute.xlu0 %487
    %489 = vrot.lane.b32.xlu0 %v462, 1
    %v490 = vpop.permute.xlu0 %489
    %491 = vrot.lane.b32.xlu0 %v463, 1
    %v492 = vpop.permute.xlu0 %491
    %493 = vrot.lane.b32.xlu0 %v464, 1
    %v494 = vpop.permute.xlu0 %493
    %v505 = vsub.f32 %v49, %v476
    %v506 = vsub.f32 %v50, %v478
    %v507 = vsub.f32 %v51, %v480
    %v508 = vsub.f32 %v52, %v482
    %v509 = vsub.f32 %v53, %v484
    %v510 = vsub.f32 %v49, %v486
    %v511 = vsub.f32 %v50, %v488
    %v512 = vsub.f32 %v51, %v490
    %v513 = vsub.f32 %v52, %v492
    %v514 = vsub.f32 %v53, %v494
    %516 = vset.pattern.permute.xlu0 0
    %517 = vperm.xlu0 %516, %v445
    %v518 = vpop.permute.xlu0 %517
    %521 = vset.pattern.permute.xlu0 0
    %522 = vperm.xlu0 %521, %v446
    %v523 = vpop.permute.xlu0 %522
    %526 = vset.pattern.permute.xlu0 0
    %527 = vperm.xlu0 %526, %v447
    %v528 = vpop.permute.xlu0 %527
    %531 = vset.pattern.permute.xlu0 0
    %532 = vperm.xlu0 %531, %v448
    %v533 = vpop.permute.xlu0 %532
    %536 = vset.pattern.permute.xlu0 0
    %537 = vperm.xlu0 %536, %v449
    %v538 = vpop.permute.xlu0 %537
    %541 = vset.pattern.permute.xlu0 0
    %542 = vperm.xlu0 %541, %v450
    %v543 = vpop.permute.xlu0 %542
    %546 = vset.pattern.permute.xlu0 0
    %547 = vperm.xlu0 %546, %v451
    %v548 = vpop.permute.xlu0 %547
    %551 = vset.pattern.permute.xlu0 0
    %552 = vperm.xlu0 %551, %v452
    %v553 = vpop.permute.xlu0 %552
    %556 = vset.pattern.permute.xlu0 0
    %557 = vperm.xlu0 %556, %v453
    %v558 = vpop.permute.xlu0 %557
    %561 = vset.pattern.permute.xlu0 0
    %562 = vperm.xlu0 %561, %v454
    %v563 = vpop.permute.xlu0 %562
    %v565 = vmul.f32 %v187, %v518
    %v566 = vmul.f32 %v190, %v523
    %v567 = vmul.f32 %v195, %v528
    %v568 = vmul.f32 %v198, %v533
    %v569 = vmul.f32 %v203, %v538
    %v570 = vmul.f32 %v206, %v518
    %v571 = vmul.f32 %v211, %v523
    %v572 = vmul.f32 %v214, %v528
    %v573 = vmul.f32 %v219, %v533
    %v574 = vmul.f32 %v222, %v538
    %v575 = vmul.f32 %v227, %v543
    %v576 = vmul.f32 %v230, %v548
    %v577 = vmul.f32 %v235, %v553
    %v578 = vmul.f32 %v238, %v558
    %v579 = vmul.f32 %v243, %v563
    %v580 = vmul.f32 %v246, %v543
    %v581 = vmul.f32 %v251, %v548
    %v582 = vmul.f32 %v254, %v553
    %v583 = vmul.f32 %v259, %v558
    %v584 = vmul.f32 %v262, %v563
    %586 = vset.pattern.permute.xlu0 1
    %587 = vperm.xlu0 %586, %v505
    %v588 = vpop.permute.xlu0 %587
    %591 = vset.pattern.permute.xlu0 1
    %592 = vperm.xlu0 %591, %v506
    %v593 = vpop.permute.xlu0 %592
    %596 = vset.pattern.permute.xlu0 1
    %597 = vperm.xlu0 %596, %v507
    %v598 = vpop.permute.xlu0 %597
    %601 = vset.pattern.permute.xlu0 1
    %602 = vperm.xlu0 %601, %v508
    %v603 = vpop.permute.xlu0 %602
    %606 = vset.pattern.permute.xlu0 1
    %607 = vperm.xlu0 %606, %v509
    %v608 = vpop.permute.xlu0 %607
    %611 = vset.pattern.permute.xlu0 1
    %612 = vperm.xlu0 %611, %v510
    %v613 = vpop.permute.xlu0 %612
    %616 = vset.pattern.permute.xlu0 1
    %617 = vperm.xlu0 %616, %v511
    %v618 = vpop.permute.xlu0 %617
    %621 = vset.pattern.permute.xlu0 1
    %622 = vperm.xlu0 %621, %v512
    %v623 = vpop.permute.xlu0 %622
    %626 = vset.pattern.permute.xlu0 1
    %627 = vperm.xlu0 %626, %v513
    %v628 = vpop.permute.xlu0 %627
    %631 = vset.pattern.permute.xlu0 1
    %632 = vperm.xlu0 %631, %v514
    %v633 = vpop.permute.xlu0 %632
    %v635 = vadd.f32 %v565, %v588
    %v636 = vadd.f32 %v566, %v593
    %v637 = vadd.f32 %v567, %v598
    %v638 = vadd.f32 %v568, %v603
    %v639 = vadd.f32 %v569, %v608
    %v640 = vadd.f32 %v570, %v588
    %v641 = vadd.f32 %v571, %v593
    %v642 = vadd.f32 %v572, %v598
    %v643 = vadd.f32 %v573, %v603
    %v644 = vadd.f32 %v574, %v608
    %v645 = vadd.f32 %v575, %v613
    %v646 = vadd.f32 %v576, %v618
    %v647 = vadd.f32 %v577, %v623
    %v648 = vadd.f32 %v578, %v628
    %v649 = vadd.f32 %v579, %v633
    %v650 = vadd.f32 %v580, %v613
    %v651 = vadd.f32 %v581, %v618
    %v652 = vadd.f32 %v582, %v623
    %v653 = vadd.f32 %v583, %v628
    %v654 = vadd.f32 %v584, %v633
    %v655 = vmax.f32 %v635, 0.0
    %v656 = vmax.f32 %v636, 0.0
    %v657 = vmax.f32 %v637, 0.0
    %v658 = vmax.f32 %v638, 0.0
    %v659 = vmax.f32 %v639, 0.0
    %v660 = vmax.f32 %v640, 0.0
    %v661 = vmax.f32 %v641, 0.0
    %v662 = vmax.f32 %v642, 0.0
    %v663 = vmax.f32 %v643, 0.0
    %v664 = vmax.f32 %v644, 0.0
    %v665 = vmax.f32 %v645, 0.0
    %v666 = vmax.f32 %v646, 0.0
    %v667 = vmax.f32 %v647, 0.0
    %v668 = vmax.f32 %v648, 0.0
    %v669 = vmax.f32 %v649, 0.0
    %v670 = vmax.f32 %v650, 0.0
    %v671 = vmax.f32 %v651, 0.0
    %v672 = vmax.f32 %v652, 0.0
    %v673 = vmax.f32 %v653, 0.0
    %v674 = vmax.f32 %v654, 0.0
    %s675 = scalar_lea.vmem [#allocation2], 64
    %v676 = vld [vmem:[%s675] sm:$0xf]
    %v677 = vld [vmem:[%s675 + $0x4] sm:$0xf]
    %v678 = vld [vmem:[%s675 + $0x8] sm:$0xf]
    %v679 = vld [vmem:[%s675 + $0xc] sm:$0xf]
    %v680 = vld [vmem:[%s675 + $0x10] sm:$0xf]
    %v681 = vld [vmem:[%s675 + $0x14] sm:$0xf]
    %v682 = vld [vmem:[%s675 + $0x18] sm:$0xf]
    %v683 = vld [vmem:[%s675 + $0x1c] sm:$0xf]
    %v684 = vld [vmem:[%s675 + $0x20] sm:$0xf]
    %v685 = vld [vmem:[%s675 + $0x24] sm:$0xf]
    %v686 = vld [vmem:[%s675 + $0x28] sm:$0xf]
    %v687 = vld [vmem:[%s675 + $0x2c] sm:$0xf]
    %v688 = vld [vmem:[%s675 + $0x30] sm:$0xf]
    %v689 = vld [vmem:[%s675 + $0x34] sm:$0xf]
    %v690 = vld [vmem:[%s675 + $0x38] sm:$0xf]
    %v691 = vld [vmem:[%s675 + $0x3c] sm:$0xf]
    %v692 = vpack.c.bf16 %v656, %v655
    %v693 = vpack.c.bf16 %v658, %v657
    %v694 = vpack.c.bf16 %v660, %v659
    %v695 = vpack.c.bf16 %v662, %v661
    %v696 = vpack.c.bf16 %v664, %v663
    %v697 = vpack.c.bf16 %v666, %v665
    %v698 = vpack.c.bf16 %v668, %v667
    %v699 = vpack.c.bf16 %v670, %v669
    %v700 = vpack.c.bf16 %v672, %v671
    %v701 = vpack.c.bf16 %v674, %v673
    %v702 = vlaneseq
    %v703 = vshrl.u32 %v702, 7
    %v704 = vsub.s32 1, %v703
    %v705 = vrot.slane %v48, %v704
    %v722 = vunpack.c.l.b16 %v676
    %v723 = vunpack.c.l.b16 %v677
    %v724 = vunpack.c.l.b16 %v678
    %v725 = vunpack.c.l.b16 %v679
    %v726 = vunpack.c.l.b16 %v680
    %v727 = vunpack.c.l.b16 %v681
    %v728 = vunpack.c.l.b16 %v682
    %v729 = vunpack.c.l.b16 %v683
    %v730 = vunpack.c.l.b16 %v684
    %v731 = vunpack.c.l.b16 %v685
    %v732 = vunpack.c.l.b16 %v686
    %v733 = vunpack.c.l.b16 %v687
    %v734 = vunpack.c.l.b16 %v688
    %v735 = vunpack.c.l.b16 %v689
    %v736 = vunpack.c.l.b16 %v690
    %v737 = vunpack.c.l.b16 %v691
    %v738 = vpack.c.b16 %v723, %v722
    %v739 = vpack.c.b16 %v725, %v724
    %v740 = vpack.c.b16 %v727, %v726
    %v741 = vpack.c.b16 %v729, %v728
    %v742 = vpack.c.b16 %v731, %v730
    %v743 = vpack.c.b16 %v733, %v732
    %v744 = vpack.c.b16 %v735, %v734
    %v745 = vpack.c.b16 %v737, %v736
    %754 = vmatprep.subr.bf16.mxu0 0
    %755 = vmatpush1.bf16.msra.mxu0 %v738
    %756 = vmatprep.subr.bf16.mxu0 0
    %757 = vmatpush1.bf16.msra.mxu0 %v739
    %758 = vmatprep.subr.bf16.mxu0 0
    %759 = vmatpush1.bf16.msra.mxu0 %v740
    %760 = vmatprep.subr.bf16.mxu0 0
    %761 = vmatpush1.bf16.msra.mxu0 %v741
    %762 = vmatprep.subr.bf16.mxu0 0
    %763 = vmatpush1.bf16.msra.mxu0 %v742
    %764 = vmatprep.subr.bf16.mxu0 0
    %765 = vmatpush1.bf16.msra.mxu0 %v743
    %766 = vmatprep.subr.bf16.mxu0 0
    %767 = vmatpush1.bf16.msra.mxu0 %v744
    %768 = vmatprep.subr.bf16.mxu0 0
    %769 = vmatpush1.bf16.msra.mxu0 %v745
    %770 = vmatprep.subr.bf16.mxu0 0
    %771 = vmatpush1.bf16.msra.mxu0 0
    %772 = vmatprep.subr.bf16.mxu0 0
    %773 = vmatpush1.bf16.msra.mxu0 0
    %774 = vmatprep.subr.bf16.mxu0 0
    %775 = vmatpush1.bf16.msra.mxu0 0
    %776 = vmatprep.subr.bf16.mxu0 0
    %777 = vmatpush1.bf16.msra.mxu0 0
    %778 = vmatprep.subr.bf16.mxu0 0
    %779 = vmatpush1.bf16.msra.mxu0 0
    %780 = vmatprep.subr.bf16.mxu0 0
    %781 = vmatpush1.bf16.msra.mxu0 0
    %782 = vmatprep.subr.bf16.mxu0 0
    %783 = vmatpush1.bf16.msra.mxu0 0
    %784 = vmatprep.subr.bf16.mxu0 0
    %785 = vmatpush1.bf16.msra.mxu0 0
    %786 = vmatprep.mubr.bf16.mxu0 0
    %787 = vmatmul.mubr.bf16.gmra.mrb[0].mxu0 %v692
    %v788 = vpop.f32.mrb[0].mxu0
    %v789 = vadd.f32 %v705, %v788
    %v790 = vpop.f32.mrb[0].mxu0
    %v791 = vpop.f32.mrb[0].mxu0
    %v792 = vadd.f32 %v705, %v791
    %v793 = vpop.f32.mrb[0].mxu0
    %794 = vmatprep.mubr.bf16.mxu0 0
    %795 = vmatmul.mubr.bf16.gmra.mrb[0].mxu0 %v693
    %v796 = vpop.f32.mrb[0].mxu0
    %v797 = vadd.f32 %v705, %v796
    %v798 = vpop.f32.mrb[0].mxu0
    %v799 = vpop.f32.mrb[0].mxu0
    %v800 = vadd.f32 %v705, %v799
    %v801 = vpop.f32.mrb[0].mxu0
    %802 = vmatprep.mubr.bf16.mxu0 0
    %803 = vmatmul.mubr.bf16.gmra.mrb[0].mxu0 %v694
    %v804 = vpop.f32.mrb[0].mxu0
    %v805 = vadd.f32 %v705, %v804
    %v806 = vpop.f32.mrb[0].mxu0
    %v807 = vpop.f32.mrb[0].mxu0
    %v808 = vadd.f32 %v705, %v807
    %v809 = vpop.f32.mrb[0].mxu0
    %810 = vmatprep.mubr.bf16.mxu0 0
    %811 = vmatmul.mubr.bf16.gmra.mrb[0].mxu0 %v695
    %v812 = vpop.f32.mrb[0].mxu0
    %v813 = vadd.f32 %v705, %v812
    %v814 = vpop.f32.mrb[0].mxu0
    %v815 = vpop.f32.mrb[0].mxu0
    %v816 = vadd.f32 %v705, %v815
    %v817 = vpop.f32.mrb[0].mxu0
    %818 = vmatprep.mubr.bf16.mxu0 0
    %819 = vmatmul.mubr.bf16.gmra.mrb[0].mxu0 %v696
    %v820 = vpop.f32.mrb[0].mxu0
    %v821 = vadd.f32 %v705, %v820
    %v822 = vpop.f32.mrb[0].mxu0
    %v823 = vpop.f32.mrb[0].mxu0
    %v824 = vadd.f32 %v705, %v823
    %v825 = vpop.f32.mrb[0].mxu0
    %826 = vmatprep.mubr.bf16.mxu0 0
    %827 = vmatmul.mubr.bf16.gmra.mrb[0].mxu0 %v697
    %v828 = vpop.f32.mrb[0].mxu0
    %v829 = vadd.f32 %v705, %v828
    %v830 = vpop.f32.mrb[0].mxu0
    %v831 = vpop.f32.mrb[0].mxu0
    %v832 = vadd.f32 %v705, %v831
    %v833 = vpop.f32.mrb[0].mxu0
    %834 = vmatprep.mubr.bf16.mxu0 0
    %835 = vmatmul.mubr.bf16.gmra.mrb[0].mxu0 %v698
    %v836 = vpop.f32.mrb[0].mxu0
    %v837 = vadd.f32 %v705, %v836
    %v838 = vpop.f32.mrb[0].mxu0
    %v839 = vpop.f32.mrb[0].mxu0
    %v840 = vadd.f32 %v705, %v839
    %v841 = vpop.f32.mrb[0].mxu0
    %842 = vmatprep.mubr.bf16.mxu0 0
    %843 = vmatmul.mubr.bf16.gmra.mrb[0].mxu0 %v699
    %v844 = vpop.f32.mrb[0].mxu0
    %v845 = vadd.f32 %v705, %v844
    %v846 = vpop.f32.mrb[0].mxu0
    %v847 = vpop.f32.mrb[0].mxu0
    %v848 = vadd.f32 %v705, %v847
    %v849 = vpop.f32.mrb[0].mxu0
    %850 = vmatprep.mubr.bf16.mxu0 0
    %851 = vmatmul.mubr.bf16.gmra.mrb[0].mxu0 %v700
    %v852 = vpop.f32.mrb[0].mxu0
    %v853 = vadd.f32 %v705, %v852
    %v854 = vpop.f32.mrb[0].mxu0
    %v855 = vpop.f32.mrb[0].mxu0
    %v856 = vadd.f32 %v705, %v855
    %v857 = vpop.f32.mrb[0].mxu0
    %858 = vmatprep.mubr.bf16.mxu0 0
    %859 = vmatmul.mubr.bf16.gmra.mrb[0].mxu0 %v701
    %v860 = vpop.f32.mrb[0].mxu0
    %v861 = vadd.f32 %v705, %v860
    %v862 = vpop.f32.mrb[0].mxu0
    %v863 = vpop.f32.mrb[0].mxu0
    %v864 = vadd.f32 %v705, %v863
    %v865 = vpop.f32.mrb[0].mxu0
    %866 = vdwg.mxu0
    %v867 = vadd.f32 %v789, %v808
    %868 = vadd.xlane.f32.xlu0 %v867
    %v869 = vpop.xlane.xlu0 %868
    %v870 = vadd.f32 %v792, %v813
    %871 = vadd.xlane.f32.xlu0 %v870
    %v872 = vpop.xlane.xlu0 %871
    %v873 = vadd.f32 %v797, %v816
    %874 = vadd.xlane.f32.xlu0 %v873
    %v875 = vpop.xlane.xlu0 %874
    %v876 = vadd.f32 %v800, %v821
    %877 = vadd.xlane.f32.xlu0 %v876
    %v878 = vpop.xlane.xlu0 %877
    %v879 = vadd.f32 %v805, %v824
    %880 = vadd.xlane.f32.xlu0 %v879
    %v881 = vpop.xlane.xlu0 %880
    %v882 = vadd.f32 %v829, %v848
    %883 = vadd.xlane.f32.xlu0 %v882
    %v884 = vpop.xlane.xlu0 %883
    %v885 = vadd.f32 %v832, %v853
    %886 = vadd.xlane.f32.xlu0 %v885
    %v887 = vpop.xlane.xlu0 %886
    %v888 = vadd.f32 %v837, %v856
    %889 = vadd.xlane.f32.xlu0 %v888
    %v890 = vpop.xlane.xlu0 %889
    %v891 = vadd.f32 %v840, %v861
    %892 = vadd.xlane.f32.xlu0 %v891
    %v893 = vpop.xlane.xlu0 %892
    %v894 = vadd.f32 %v845, %v864
    %895 = vadd.xlane.f32.xlu0 %v894
    %v896 = vpop.xlane.xlu0 %895
    %v897 = vmul.f32 %v869, 0.018518519
    %v898 = vmul.f32 %v872, 0.018518519
    %v899 = vmul.f32 %v875, 0.018518519
    %v900 = vmul.f32 %v878, 0.018518519
    %v901 = vmul.f32 %v881, 0.018518519
    %v902 = vmul.f32 %v884, 0.018518519
    %v903 = vmul.f32 %v887, 0.018518519
    %v904 = vmul.f32 %v890, 0.018518519
    %v905 = vmul.f32 %v893, 0.018518519
    %v906 = vmul.f32 %v896, 0.018518519
    %v907 = vsub.f32 %v789, %v897
    %v908 = vsub.f32 %v792, %v898
    %v909 = vsub.f32 %v797, %v899
    %v910 = vsub.f32 %v800, %v900
    %v911 = vsub.f32 %v805, %v901
    %v912 = vsub.f32 %v808, %v897
    %v913 = vsub.f32 %v813, %v898
    %v914 = vsub.f32 %v816, %v899
    %v915 = vsub.f32 %v821, %v900
    %v916 = vsub.f32 %v824, %v901
    %v917 = vsub.f32 %v829, %v902
    %v918 = vsub.f32 %v832, %v903
    %v919 = vsub.f32 %v837, %v904
    %v920 = vsub.f32 %v840, %v905
    %v921 = vsub.f32 %v845, %v906
    %v922 = vsub.f32 %v848, %v902
    %v923 = vsub.f32 %v853, %v903
    %v924 = vsub.f32 %v856, %v904
    %v925 = vsub.f32 %v861, %v905
    %v926 = vsub.f32 %v864, %v906
    %v927 = vmul.f32 %v907, %v907
    %v928 = vmul.f32 %v908, %v908
    %v929 = vmul.f32 %v909, %v909
    %v930 = vmul.f32 %v910, %v910
    %v931 = vmul.f32 %v911, %v911
    %v932 = vmul.f32 %v912, %v912
    %v933 = vmul.f32 %v913, %v913
    %v934 = vmul.f32 %v914, %v914
    %v935 = vmul.f32 %v915, %v915
    %v936 = vmul.f32 %v916, %v916
    %v937 = vmul.f32 %v917, %v917
    %v938 = vmul.f32 %v918, %v918
    %v939 = vmul.f32 %v919, %v919
    %v940 = vmul.f32 %v920, %v920
    %v941 = vmul.f32 %v921, %v921
    %v942 = vmul.f32 %v922, %v922
    %v943 = vmul.f32 %v923, %v923
    %v944 = vmul.f32 %v924, %v924
    %v945 = vmul.f32 %v925, %v925
    %v946 = vmul.f32 %v926, %v926
    %v947 = vadd.f32 %v927, %v932
    %948 = vadd.xlane.f32.xlu0 %v947
    %v949 = vpop.xlane.xlu0 %948
    %v950 = vadd.f32 %v928, %v933
    %951 = vadd.xlane.f32.xlu0 %v950
    %v952 = vpop.xlane.xlu0 %951
    %v953 = vadd.f32 %v929, %v934
    %954 = vadd.xlane.f32.xlu0 %v953
    %v955 = vpop.xlane.xlu0 %954
    %v956 = vadd.f32 %v930, %v935
    %957 = vadd.xlane.f32.xlu0 %v956
    %v958 = vpop.xlane.xlu0 %957
    %v959 = vadd.f32 %v931, %v936
    %960 = vadd.xlane.f32.xlu0 %v959
    %v961 = vpop.xlane.xlu0 %960
    %v962 = vadd.f32 %v937, %v942
    %963 = vadd.xlane.f32.xlu0 %v962
    %v964 = vpop.xlane.xlu0 %963
    %v965 = vadd.f32 %v938, %v943
    %966 = vadd.xlane.f32.xlu0 %v965
    %v967 = vpop.xlane.xlu0 %966
    %v968 = vadd.f32 %v939, %v944
    %969 = vadd.xlane.f32.xlu0 %v968
    %v970 = vpop.xlane.xlu0 %969
    %v971 = vadd.f32 %v940, %v945
    %972 = vadd.xlane.f32.xlu0 %v971
    %v973 = vpop.xlane.xlu0 %972
    %v974 = vadd.f32 %v941, %v946
    %975 = vadd.xlane.f32.xlu0 %v974
    %v976 = vpop.xlane.xlu0 %975
    %v977 = vmul.f32 %v897, %v897
    %v978 = vmul.f32 %v898, %v898
    %v979 = vmul.f32 %v899, %v899
    %v980 = vmul.f32 %v900, %v900
    %v981 = vmul.f32 %v901, %v901
    %v982 = vmul.f32 %v902, %v902
    %v983 = vmul.f32 %v903, %v903
    %v984 = vmul.f32 %v904, %v904
    %v985 = vmul.f32 %v905, %v905
    %v986 = vmul.f32 %v906, %v906
    %v987 = vmul.f32 %v977, 202.0
    %v988 = vmul.f32 %v978, 202.0
    %v989 = vmul.f32 %v979, 202.0
    %v990 = vmul.f32 %v980, 202.0
    %v991 = vmul.f32 %v981, 202.0
    %v992 = vmul.f32 %v982, 202.0
    %v993 = vmul.f32 %v983, 202.0
    %v994 = vmul.f32 %v984, 202.0
    %v995 = vmul.f32 %v985, 202.0
    %v996 = vmul.f32 %v986, 202.0
    %v997 = vsub.f32 %v949, %v987
    %v998 = vsub.f32 %v952, %v988
    %v999 = vsub.f32 %v955, %v989
    %v1000 = vsub.f32 %v958, %v990
    %v1001 = vsub.f32 %v961, %v991
    %v1002 = vsub.f32 %v964, %v992
    %v1003 = vsub.f32 %v967, %v993
    %v1004 = vsub.f32 %v970, %v994
    %v1005 = vsub.f32 %v973, %v995
    %v1006 = vsub.f32 %v976, %v996
    %v1007 = vmul.f32 %v997, 0.018518519
    %v1008 = vmul.f32 %v998, 0.018518519
    %v1009 = vmul.f32 %v999, 0.018518519
    %v1010 = vmul.f32 %v1000, 0.018518519
    %v1011 = vmul.f32 %v1001, 0.018518519
    %v1012 = vmul.f32 %v1002, 0.018518519
    %v1013 = vmul.f32 %v1003, 0.018518519
    %v1014 = vmul.f32 %v1004, 0.018518519
    %v1015 = vmul.f32 %v1005, 0.018518519
    %v1016 = vmul.f32 %v1006, 0.018518519
    %v1017 = vmax.f32 %v1007, 0.0
    %v1018 = vmax.f32 %v1008, 0.0
    %v1019 = vmax.f32 %v1009, 0.0
    %v1020 = vmax.f32 %v1010, 0.0
    %v1021 = vmax.f32 %v1011, 0.0
    %v1022 = vmax.f32 %v1012, 0.0
    %v1023 = vmax.f32 %v1013, 0.0
    %v1024 = vmax.f32 %v1014, 0.0
    %v1025 = vmax.f32 %v1015, 0.0
    %v1026 = vmax.f32 %v1016, 0.0
    %v1027 = vadd.f32 %v1017, 1e-05
    %v1028 = vadd.f32 %v1018, 1e-05
    %v1029 = vadd.f32 %v1019, 1e-05
    %v1030 = vadd.f32 %v1020, 1e-05
    %v1031 = vadd.f32 %v1021, 1e-05
    %v1032 = vadd.f32 %v1022, 1e-05
    %v1033 = vadd.f32 %v1023, 1e-05
    %v1034 = vadd.f32 %v1024, 1e-05
    %v1035 = vadd.f32 %v1025, 1e-05
    %v1036 = vadd.f32 %v1026, 1e-05
    %v1037 = vrsqrt.pop %v1027
    %v1038 = vrsqrt.pop %v1028
    %v1039 = vrsqrt.pop %v1029
    %v1040 = vrsqrt.pop %v1030
    %v1041 = vrsqrt.pop %v1031
    %v1042 = vrsqrt.pop %v1032
    %v1043 = vrsqrt.pop %v1033
    %v1044 = vrsqrt.pop %v1034
    %v1045 = vrsqrt.pop %v1035
    %v1046 = vrsqrt.pop %v1036
    %v1047 = vmul.f32 %v1037, %v49
    %v1048 = vmul.f32 %v1038, %v50
    %v1049 = vmul.f32 %v1039, %v51
    %v1050 = vmul.f32 %v1040, %v52
    %v1051 = vmul.f32 %v1041, %v53
    %v1052 = vmul.f32 %v1042, %v49
    %v1053 = vmul.f32 %v1043, %v50
    %v1054 = vmul.f32 %v1044, %v51
    %v1055 = vmul.f32 %v1045, %v52
    %v1056 = vmul.f32 %v1046, %v53
    %v1057 = vmul.f32 %v897, %v1047
    %v1058 = vmul.f32 %v898, %v1048
    %v1059 = vmul.f32 %v899, %v1049
    %v1060 = vmul.f32 %v900, %v1050
    %v1061 = vmul.f32 %v901, %v1051
    %v1062 = vmul.f32 %v902, %v1052
    %v1063 = vmul.f32 %v903, %v1053
    %v1064 = vmul.f32 %v904, %v1054
    %v1065 = vmul.f32 %v905, %v1055
    %v1066 = vmul.f32 %v906, %v1056
    %1077 = vrot.lane.b32.xlu0 %v1057, 1
    %v1078 = vpop.permute.xlu0 %1077
    %1079 = vrot.lane.b32.xlu0 %v1058, 1
    %v1080 = vpop.permute.xlu0 %1079
    %1081 = vrot.lane.b32.xlu0 %v1059, 1
    %v1082 = vpop.permute.xlu0 %1081
    %1083 = vrot.lane.b32.xlu0 %v1060, 1
    %v1084 = vpop.permute.xlu0 %1083
    %1085 = vrot.lane.b32.xlu0 %v1061, 1
    %v1086 = vpop.permute.xlu0 %1085
    %1087 = vrot.lane.b32.xlu0 %v1062, 1
    %v1088 = vpop.permute.xlu0 %1087
    %1089 = vrot.lane.b32.xlu0 %v1063, 1
    %v1090 = vpop.permute.xlu0 %1089
    %1091 = vrot.lane.b32.xlu0 %v1064, 1
    %v1092 = vpop.permute.xlu0 %1091
    %1093 = vrot.lane.b32.xlu0 %v1065, 1
    %v1094 = vpop.permute.xlu0 %1093
    %1095 = vrot.lane.b32.xlu0 %v1066, 1
    %v1096 = vpop.permute.xlu0 %1095
    %v1107 = vsub.f32 %v49, %v1078
    %v1108 = vsub.f32 %v50, %v1080
    %v1109 = vsub.f32 %v51, %v1082
    %v1110 = vsub.f32 %v52, %v1084
    %v1111 = vsub.f32 %v53, %v1086
    %v1112 = vsub.f32 %v49, %v1088
    %v1113 = vsub.f32 %v50, %v1090
    %v1114 = vsub.f32 %v51, %v1092
    %v1115 = vsub.f32 %v52, %v1094
    %v1116 = vsub.f32 %v53, %v1096
    %1118 = vset.pattern.permute.xlu0 2
    %1119 = vperm.xlu0 %1118, %v1047
    %v1120 = vpop.permute.xlu0 %1119
    %1123 = vset.pattern.permute.xlu0 2
    %1124 = vperm.xlu0 %1123, %v1048
    %v1125 = vpop.permute.xlu0 %1124
    %1128 = vset.pattern.permute.xlu0 2
    %1129 = vperm.xlu0 %1128, %v1049
    %v1130 = vpop.permute.xlu0 %1129
    %1133 = vset.pattern.permute.xlu0 2
    %1134 = vperm.xlu0 %1133, %v1050
    %v1135 = vpop.permute.xlu0 %1134
    %1138 = vset.pattern.permute.xlu0 2
    %1139 = vperm.xlu0 %1138, %v1051
    %v1140 = vpop.permute.xlu0 %1139
    %1143 = vset.pattern.permute.xlu0 2
    %1144 = vperm.xlu0 %1143, %v1052
    %v1145 = vpop.permute.xlu0 %1144
    %1148 = vset.pattern.permute.xlu0 2
    %1149 = vperm.xlu0 %1148, %v1053
    %v1150 = vpop.permute.xlu0 %1149
    %1153 = vset.pattern.permute.xlu0 2
    %1154 = vperm.xlu0 %1153, %v1054
    %v1155 = vpop.permute.xlu0 %1154
    %1158 = vset.pattern.permute.xlu0 2
    %1159 = vperm.xlu0 %1158, %v1055
    %v1160 = vpop.permute.xlu0 %1159
    %1163 = vset.pattern.permute.xlu0 2
    %1164 = vperm.xlu0 %1163, %v1056
    %v1165 = vpop.permute.xlu0 %1164
    %v1167 = vmul.f32 %v789, %v1120
    %v1168 = vmul.f32 %v792, %v1125
    %v1169 = vmul.f32 %v797, %v1130
    %v1170 = vmul.f32 %v800, %v1135
    %v1171 = vmul.f32 %v805, %v1140
    %v1172 = vmul.f32 %v808, %v1120
    %v1173 = vmul.f32 %v813, %v1125
    %v1174 = vmul.f32 %v816, %v1130
    %v1175 = vmul.f32 %v821, %v1135
    %v1176 = vmul.f32 %v824, %v1140
    %v1177 = vmul.f32 %v829, %v1145
    %v1178 = vmul.f32 %v832, %v1150
    %v1179 = vmul.f32 %v837, %v1155
    %v1180 = vmul.f32 %v840, %v1160
    %v1181 = vmul.f32 %v845, %v1165
    %v1182 = vmul.f32 %v848, %v1145
    %v1183 = vmul.f32 %v853, %v1150
    %v1184 = vmul.f32 %v856, %v1155
    %v1185 = vmul.f32 %v861, %v1160
    %v1186 = vmul.f32 %v864, %v1165
    %1188 = vset.pattern.permute.xlu0 3
    %1189 = vperm.xlu0 %1188, %v1107
    %v1190 = vpop.permute.xlu0 %1189
    %1193 = vset.pattern.permute.xlu0 3
    %1194 = vperm.xlu0 %1193, %v1108
    %v1195 = vpop.permute.xlu0 %1194
    %1198 = vset.pattern.permute.xlu0 3
    %1199 = vperm.xlu0 %1198, %v1109
    %v1200 = vpop.permute.xlu0 %1199
    %1203 = vset.pattern.permute.xlu0 3
    %1204 = vperm.xlu0 %1203, %v1110
    %v1205 = vpop.permute.xlu0 %1204
    %1208 = vset.pattern.permute.xlu0 3
    %1209 = vperm.xlu0 %1208, %v1111
    %v1210 = vpop.permute.xlu0 %1209
    %1213 = vset.pattern.permute.xlu0 3
    %1214 = vperm.xlu0 %1213, %v1112
    %v1215 = vpop.permute.xlu0 %1214
    %1218 = vset.pattern.permute.xlu0 3
    %1219 = vperm.xlu0 %1218, %v1113
    %v1220 = vpop.permute.xlu0 %1219
    %1223 = vset.pattern.permute.xlu0 3
    %1224 = vperm.xlu0 %1223, %v1114
    %v1225 = vpop.permute.xlu0 %1224
    %1228 = vset.pattern.permute.xlu0 3
    %1229 = vperm.xlu0 %1228, %v1115
    %v1230 = vpop.permute.xlu0 %1229
    %1233 = vset.pattern.permute.xlu0 3
    %1234 = vperm.xlu0 %1233, %v1116
    %v1235 = vpop.permute.xlu0 %1234
    %v1237 = vadd.f32 %v1167, %v1190
    %v1238 = vadd.f32 %v1168, %v1195
    %v1239 = vadd.f32 %v1169, %v1200
    %v1240 = vadd.f32 %v1170, %v1205
    %v1241 = vadd.f32 %v1171, %v1210
    %v1242 = vadd.f32 %v1172, %v1190
    %v1243 = vadd.f32 %v1173, %v1195
    %v1244 = vadd.f32 %v1174, %v1200
    %v1245 = vadd.f32 %v1175, %v1205
    %v1246 = vadd.f32 %v1176, %v1210
    %v1247 = vadd.f32 %v1177, %v1215
    %v1248 = vadd.f32 %v1178, %v1220
    %v1249 = vadd.f32 %v1179, %v1225
    %v1250 = vadd.f32 %v1180, %v1230
    %v1251 = vadd.f32 %v1181, %v1235
    %v1252 = vadd.f32 %v1182, %v1215
    %v1253 = vadd.f32 %v1183, %v1220
    %v1254 = vadd.f32 %v1184, %v1225
    %v1255 = vadd.f32 %v1185, %v1230
    %v1256 = vadd.f32 %v1186, %v1235
    %v1257 = vmax.f32 %v1237, 0.0
    %v1258 = vmax.f32 %v1238, 0.0
    %v1259 = vmax.f32 %v1239, 0.0
    %v1260 = vmax.f32 %v1240, 0.0
    %v1261 = vmax.f32 %v1241, 0.0
    %v1262 = vmax.f32 %v1242, 0.0
    %v1263 = vmax.f32 %v1243, 0.0
    %v1264 = vmax.f32 %v1244, 0.0
    %v1265 = vmax.f32 %v1245, 0.0
    %v1266 = vmax.f32 %v1246, 0.0
    %v1267 = vmax.f32 %v1247, 0.0
    %v1268 = vmax.f32 %v1248, 0.0
    %v1269 = vmax.f32 %v1249, 0.0
    %v1270 = vmax.f32 %v1250, 0.0
    %v1271 = vmax.f32 %v1251, 0.0
    %v1272 = vmax.f32 %v1252, 0.0
    %v1273 = vmax.f32 %v1253, 0.0
    %v1274 = vmax.f32 %v1254, 0.0
    %v1275 = vmax.f32 %v1255, 0.0
    %v1276 = vmax.f32 %v1256, 0.0
    %s1277 = scalar_lea.vmem [#allocation2], 128
    %v1278 = vld [vmem:[%s1277] sm:$0xf]
    %v1279 = vld [vmem:[%s1277 + $0x4] sm:$0xf]
    %v1280 = vld [vmem:[%s1277 + $0x8] sm:$0xf]
    %v1281 = vld [vmem:[%s1277 + $0xc] sm:$0xf]
    %v1282 = vld [vmem:[%s1277 + $0x10] sm:$0xf]
    %v1283 = vld [vmem:[%s1277 + $0x14] sm:$0xf]
    %v1284 = vld [vmem:[%s1277 + $0x18] sm:$0xf]
    %v1285 = vld [vmem:[%s1277 + $0x1c] sm:$0xf]
    %v1286 = vld [vmem:[%s1277 + $0x20] sm:$0xf]
    %v1287 = vld [vmem:[%s1277 + $0x24] sm:$0xf]
    %v1288 = vld [vmem:[%s1277 + $0x28] sm:$0xf]
    %v1289 = vld [vmem:[%s1277 + $0x2c] sm:$0xf]
    %v1290 = vld [vmem:[%s1277 + $0x30] sm:$0xf]
    %v1291 = vld [vmem:[%s1277 + $0x34] sm:$0xf]
    %v1292 = vld [vmem:[%s1277 + $0x38] sm:$0xf]
    %v1293 = vld [vmem:[%s1277 + $0x3c] sm:$0xf]
    %v1294 = vpack.c.bf16 %v1258, %v1257
    %v1295 = vpack.c.bf16 %v1260, %v1259
    %v1296 = vpack.c.bf16 %v1262, %v1261
    %v1297 = vpack.c.bf16 %v1264, %v1263
    %v1298 = vpack.c.bf16 %v1266, %v1265
    %v1299 = vpack.c.bf16 %v1268, %v1267
    %v1300 = vpack.c.bf16 %v1270, %v1269
    %v1301 = vpack.c.bf16 %v1272, %v1271
    %v1302 = vpack.c.bf16 %v1274, %v1273
    %v1303 = vpack.c.bf16 %v1276, %v1275
    %v1304 = vlaneseq
    %v1305 = vshrl.u32 %v1304, 7
    %v1306 = vsub.s32 2, %v1305
    %v1307 = vrot.slane %v48, %v1306
    %v1324 = vunpack.c.l.b16 %v1278
    %v1325 = vunpack.c.l.b16 %v1279
    %v1326 = vunpack.c.l.b16 %v1280
    %v1327 = vunpack.c.l.b16 %v1281
    %v1328 = vunpack.c.l.b16 %v1282
    %v1329 = vunpack.c.l.b16 %v1283
    %v1330 = vunpack.c.l.b16 %v1284
    %v1331 = vunpack.c.l.b16 %v1285
    %v1332 = vunpack.c.l.b16 %v1286
    %v1333 = vunpack.c.l.b16 %v1287
    %v1334 = vunpack.c.l.b16 %v1288
    %v1335 = vunpack.c.l.b16 %v1289
    %v1336 = vunpack.c.l.b16 %v1290
    %v1337 = vunpack.c.l.b16 %v1291
    %v1338 = vunpack.c.l.b16 %v1292
    %v1339 = vunpack.c.l.b16 %v1293
    %v1340 = vpack.c.b16 %v1325, %v1324
    %v1341 = vpack.c.b16 %v1327, %v1326
    %v1342 = vpack.c.b16 %v1329, %v1328
    %v1343 = vpack.c.b16 %v1331, %v1330
    %v1344 = vpack.c.b16 %v1333, %v1332
    %v1345 = vpack.c.b16 %v1335, %v1334
    %v1346 = vpack.c.b16 %v1337, %v1336
    %v1347 = vpack.c.b16 %v1339, %v1338
    %1356 = vmatprep.subr.bf16.mxu0 0
    %1357 = vmatpush1.bf16.msra.mxu0 %v1340
    %1358 = vmatprep.subr.bf16.mxu0 0
    %1359 = vmatpush1.bf16.msra.mxu0 %v1341
    %1360 = vmatprep.subr.bf16.mxu0 0
    %1361 = vmatpush1.bf16.msra.mxu0 %v1342
    %1362 = vmatprep.subr.bf16.mxu0 0
    %1363 = vmatpush1.bf16.msra.mxu0 %v1343
    %1364 = vmatprep.subr.bf16.mxu0 0
    %1365 = vmatpush1.bf16.msra.mxu0 %v1344
    %1366 = vmatprep.subr.bf16.mxu0 0
    %1367 = vmatpush1.bf16.msra.mxu0 %v1345
    %1368 = vmatprep.subr.bf16.mxu0 0
    %1369 = vmatpush1.bf16.msra.mxu0 %v1346
    %1370 = vmatprep.subr.bf16.mxu0 0
    %1371 = vmatpush1.bf16.msra.mxu0 %v1347
    %1372 = vmatprep.subr.bf16.mxu0 0
    %1373 = vmatpush1.bf16.msra.mxu0 0
    %1374 = vmatprep.subr.bf16.mxu0 0
    %1375 = vmatpush1.bf16.msra.mxu0 0
    %1376 = vmatprep.subr.bf16.mxu0 0
    %1377 = vmatpush1.bf16.msra.mxu0 0
    %1378 = vmatprep.subr.bf16.mxu0 0
    %1379 = vmatpush1.bf16.msra.mxu0 0
    %1380 = vmatprep.subr.bf16.mxu0 0
    %1381 = vmatpush1.bf16.msra.mxu0 0
    %1382 = vmatprep.subr.bf16.mxu0 0
    %1383 = vmatpush1.bf16.msra.mxu0 0
    %1384 = vmatprep.subr.bf16.mxu0 0
    %1385 = vmatpush1.bf16.msra.mxu0 0
    %1386 = vmatprep.subr.bf16.mxu0 0
    %1387 = vmatpush1.bf16.msra.mxu0 0
    %1388 = vmatprep.mubr.bf16.mxu0 0
    %1389 = vmatmul.mubr.bf16.gmra.mrb[0].mxu0 %v1294
    %v1390 = vpop.f32.mrb[0].mxu0
    %v1391 = vadd.f32 %v1307, %v1390
    %v1392 = vpop.f32.mrb[0].mxu0
    %v1393 = vpop.f32.mrb[0].mxu0
    %v1394 = vadd.f32 %v1307, %v1393
    %v1395 = vpop.f32.mrb[0].mxu0
    %1396 = vmatprep.mubr.bf16.mxu0 0
    %1397 = vmatmul.mubr.bf16.gmra.mrb[0].mxu0 %v1295
    %v1398 = vpop.f32.mrb[0].mxu0
    %v1399 = vadd.f32 %v1307, %v1398
    %v1400 = vpop.f32.mrb[0].mxu0
    %v1401 = vpop.f32.mrb[0].mxu0
    %v1402 = vadd.f32 %v1307, %v1401
    %v1403 = vpop.f32.mrb[0].mxu0
    %1404 = vmatprep.mubr.bf16.mxu0 0
    %1405 = vmatmul.mubr.bf16.gmra.mrb[0].mxu0 %v1296
    %v1406 = vpop.f32.mrb[0].mxu0
    %v1407 = vadd.f32 %v1307, %v1406
    %v1408 = vpop.f32.mrb[0].mxu0
    %v1409 = vpop.f32.mrb[0].mxu0
    %v1410 = vadd.f32 %v1307, %v1409
    %v1411 = vpop.f32.mrb[0].mxu0
    %1412 = vmatprep.mubr.bf16.mxu0 0
    %1413 = vmatmul.mubr.bf16.gmra.mrb[0].mxu0 %v1297
    %v1414 = vpop.f32.mrb[0].mxu0
    %v1415 = vadd.f32 %v1307, %v1414
    %v1416 = vpop.f32.mrb[0].mxu0
    %v1417 = vpop.f32.mrb[0].mxu0
    %v1418 = vadd.f32 %v1307, %v1417
    %v1419 = vpop.f32.mrb[0].mxu0
    %1420 = vmatprep.mubr.bf16.mxu0 0
    %1421 = vmatmul.mubr.bf16.gmra.mrb[0].mxu0 %v1298
    %v1422 = vpop.f32.mrb[0].mxu0
    %v1423 = vadd.f32 %v1307, %v1422
    %v1424 = vpop.f32.mrb[0].mxu0
    %v1425 = vpop.f32.mrb[0].mxu0
    %v1426 = vadd.f32 %v1307, %v1425
    %v1427 = vpop.f32.mrb[0].mxu0
    %1428 = vmatprep.mubr.bf16.mxu0 0
    %1429 = vmatmul.mubr.bf16.gmra.mrb[0].mxu0 %v1299
    %v1430 = vpop.f32.mrb[0].mxu0
    %v1431 = vadd.f32 %v1307, %v1430
    %v1432 = vpop.f32.mrb[0].mxu0
    %v1433 = vpop.f32.mrb[0].mxu0
    %v1434 = vadd.f32 %v1307, %v1433
    %v1435 = vpop.f32.mrb[0].mxu0
    %1436 = vmatprep.mubr.bf16.mxu0 0
    %1437 = vmatmul.mubr.bf16.gmra.mrb[0].mxu0 %v1300
    %v1438 = vpop.f32.mrb[0].mxu0
    %v1439 = vadd.f32 %v1307, %v1438
    %v1440 = vpop.f32.mrb[0].mxu0
    %v1441 = vpop.f32.mrb[0].mxu0
    %v1442 = vadd.f32 %v1307, %v1441
    %v1443 = vpop.f32.mrb[0].mxu0
    %1444 = vmatprep.mubr.bf16.mxu0 0
    %1445 = vmatmul.mubr.bf16.gmra.mrb[0].mxu0 %v1301
    %v1446 = vpop.f32.mrb[0].mxu0
    %v1447 = vadd.f32 %v1307, %v1446
    %v1448 = vpop.f32.mrb[0].mxu0
    %v1449 = vpop.f32.mrb[0].mxu0
    %v1450 = vadd.f32 %v1307, %v1449
    %v1451 = vpop.f32.mrb[0].mxu0
    %1452 = vmatprep.mubr.bf16.mxu0 0
    %1453 = vmatmul.mubr.bf16.gmra.mrb[0].mxu0 %v1302
    %v1454 = vpop.f32.mrb[0].mxu0
    %v1455 = vadd.f32 %v1307, %v1454
    %v1456 = vpop.f32.mrb[0].mxu0
    %v1457 = vpop.f32.mrb[0].mxu0
    %v1458 = vadd.f32 %v1307, %v1457
    %v1459 = vpop.f32.mrb[0].mxu0
    %1460 = vmatprep.mubr.bf16.mxu0 0
    %1461 = vmatmul.mubr.bf16.gmra.mrb[0].mxu0 %v1303
    %v1462 = vpop.f32.mrb[0].mxu0
    %v1463 = vadd.f32 %v1307, %v1462
    %v1464 = vpop.f32.mrb[0].mxu0
    %v1465 = vpop.f32.mrb[0].mxu0
    %v1466 = vadd.f32 %v1307, %v1465
    %v1467 = vpop.f32.mrb[0].mxu0
    %1468 = vdwg.mxu0
    %v1469 = vadd.f32 %v1391, %v1410
    %1470 = vadd.xlane.f32.xlu0 %v1469
    %v1471 = vpop.xlane.xlu0 %1470
    %v1472 = vadd.f32 %v1394, %v1415
    %1473 = vadd.xlane.f32.xlu0 %v1472
    %v1474 = vpop.xlane.xlu0 %1473
    %v1475 = vadd.f32 %v1399, %v1418
    %1476 = vadd.xlane.f32.xlu0 %v1475
    %v1477 = vpop.xlane.xlu0 %1476
    %v1478 = vadd.f32 %v1402, %v1423
    %1479 = vadd.xlane.f32.xlu0 %v1478
    %v1480 = vpop.xlane.xlu0 %1479
    %v1481 = vadd.f32 %v1407, %v1426
    %1482 = vadd.xlane.f32.xlu0 %v1481
    %v1483 = vpop.xlane.xlu0 %1482
    %v1484 = vadd.f32 %v1431, %v1450
    %1485 = vadd.xlane.f32.xlu0 %v1484
    %v1486 = vpop.xlane.xlu0 %1485
    %v1487 = vadd.f32 %v1434, %v1455
    %1488 = vadd.xlane.f32.xlu0 %v1487
    %v1489 = vpop.xlane.xlu0 %1488
    %v1490 = vadd.f32 %v1439, %v1458
    %1491 = vadd.xlane.f32.xlu0 %v1490
    %v1492 = vpop.xlane.xlu0 %1491
    %v1493 = vadd.f32 %v1442, %v1463
    %1494 = vadd.xlane.f32.xlu0 %v1493
    %v1495 = vpop.xlane.xlu0 %1494
    %v1496 = vadd.f32 %v1447, %v1466
    %1497 = vadd.xlane.f32.xlu0 %v1496
    %v1498 = vpop.xlane.xlu0 %1497
    %v1499 = vmul.f32 %v1471, 0.018518519
    %v1500 = vmul.f32 %v1474, 0.018518519
    %v1501 = vmul.f32 %v1477, 0.018518519
    %v1502 = vmul.f32 %v1480, 0.018518519
    %v1503 = vmul.f32 %v1483, 0.018518519
    %v1504 = vmul.f32 %v1486, 0.018518519
    %v1505 = vmul.f32 %v1489, 0.018518519
    %v1506 = vmul.f32 %v1492, 0.018518519
    %v1507 = vmul.f32 %v1495, 0.018518519
    %v1508 = vmul.f32 %v1498, 0.018518519
    %v1509 = vsub.f32 %v1391, %v1499
    %v1510 = vsub.f32 %v1394, %v1500
    %v1511 = vsub.f32 %v1399, %v1501
    %v1512 = vsub.f32 %v1402, %v1502
    %v1513 = vsub.f32 %v1407, %v1503
    %v1514 = vsub.f32 %v1410, %v1499
    %v1515 = vsub.f32 %v1415, %v1500
    %v1516 = vsub.f32 %v1418, %v1501
    %v1517 = vsub.f32 %v1423, %v1502
    %v1518 = vsub.f32 %v1426, %v1503
    %v1519 = vsub.f32 %v1431, %v1504
    %v1520 = vsub.f32 %v1434, %v1505
    %v1521 = vsub.f32 %v1439, %v1506
    %v1522 = vsub.f32 %v1442, %v1507
    %v1523 = vsub.f32 %v1447, %v1508
    %v1524 = vsub.f32 %v1450, %v1504
    %v1525 = vsub.f32 %v1455, %v1505
    %v1526 = vsub.f32 %v1458, %v1506
    %v1527 = vsub.f32 %v1463, %v1507
    %v1528 = vsub.f32 %v1466, %v1508
    %v1529 = vmul.f32 %v1509, %v1509
    %v1530 = vmul.f32 %v1510, %v1510
    %v1531 = vmul.f32 %v1511, %v1511
    %v1532 = vmul.f32 %v1512, %v1512
    %v1533 = vmul.f32 %v1513, %v1513
    %v1534 = vmul.f32 %v1514, %v1514
    %v1535 = vmul.f32 %v1515, %v1515
    %v1536 = vmul.f32 %v1516, %v1516
    %v1537 = vmul.f32 %v1517, %v1517
    %v1538 = vmul.f32 %v1518, %v1518
    %v1539 = vmul.f32 %v1519, %v1519
    %v1540 = vmul.f32 %v1520, %v1520
    %v1541 = vmul.f32 %v1521, %v1521
    %v1542 = vmul.f32 %v1522, %v1522
    %v1543 = vmul.f32 %v1523, %v1523
    %v1544 = vmul.f32 %v1524, %v1524
    %v1545 = vmul.f32 %v1525, %v1525
    %v1546 = vmul.f32 %v1526, %v1526
    %v1547 = vmul.f32 %v1527, %v1527
    %v1548 = vmul.f32 %v1528, %v1528
    %v1549 = vadd.f32 %v1529, %v1534
    %1550 = vadd.xlane.f32.xlu0 %v1549
    %v1551 = vpop.xlane.xlu0 %1550
    %v1552 = vadd.f32 %v1530, %v1535
    %1553 = vadd.xlane.f32.xlu0 %v1552
    %v1554 = vpop.xlane.xlu0 %1553
    %v1555 = vadd.f32 %v1531, %v1536
    %1556 = vadd.xlane.f32.xlu0 %v1555
    %v1557 = vpop.xlane.xlu0 %1556
    %v1558 = vadd.f32 %v1532, %v1537
    %1559 = vadd.xlane.f32.xlu0 %v1558
    %v1560 = vpop.xlane.xlu0 %1559
    %v1561 = vadd.f32 %v1533, %v1538
    %1562 = vadd.xlane.f32.xlu0 %v1561
    %v1563 = vpop.xlane.xlu0 %1562
    %v1564 = vadd.f32 %v1539, %v1544
    %1565 = vadd.xlane.f32.xlu0 %v1564
    %v1566 = vpop.xlane.xlu0 %1565
    %v1567 = vadd.f32 %v1540, %v1545
    %1568 = vadd.xlane.f32.xlu0 %v1567
    %v1569 = vpop.xlane.xlu0 %1568
    %v1570 = vadd.f32 %v1541, %v1546
    %1571 = vadd.xlane.f32.xlu0 %v1570
    %v1572 = vpop.xlane.xlu0 %1571
    %v1573 = vadd.f32 %v1542, %v1547
    %1574 = vadd.xlane.f32.xlu0 %v1573
    %v1575 = vpop.xlane.xlu0 %1574
    %v1576 = vadd.f32 %v1543, %v1548
    %1577 = vadd.xlane.f32.xlu0 %v1576
    %v1578 = vpop.xlane.xlu0 %1577
    %v1579 = vmul.f32 %v1499, %v1499
    %v1580 = vmul.f32 %v1500, %v1500
    %v1581 = vmul.f32 %v1501, %v1501
    %v1582 = vmul.f32 %v1502, %v1502
    %v1583 = vmul.f32 %v1503, %v1503
    %v1584 = vmul.f32 %v1504, %v1504
    %v1585 = vmul.f32 %v1505, %v1505
    %v1586 = vmul.f32 %v1506, %v1506
    %v1587 = vmul.f32 %v1507, %v1507
    %v1588 = vmul.f32 %v1508, %v1508
    %v1589 = vmul.f32 %v1579, 202.0
    %v1590 = vmul.f32 %v1580, 202.0
    %v1591 = vmul.f32 %v1581, 202.0
    %v1592 = vmul.f32 %v1582, 202.0
    %v1593 = vmul.f32 %v1583, 202.0
    %v1594 = vmul.f32 %v1584, 202.0
    %v1595 = vmul.f32 %v1585, 202.0
    %v1596 = vmul.f32 %v1586, 202.0
    %v1597 = vmul.f32 %v1587, 202.0
    %v1598 = vmul.f32 %v1588, 202.0
    %v1599 = vsub.f32 %v1551, %v1589
    %v1600 = vsub.f32 %v1554, %v1590
    %v1601 = vsub.f32 %v1557, %v1591
    %v1602 = vsub.f32 %v1560, %v1592
    %v1603 = vsub.f32 %v1563, %v1593
    %v1604 = vsub.f32 %v1566, %v1594
    %v1605 = vsub.f32 %v1569, %v1595
    %v1606 = vsub.f32 %v1572, %v1596
    %v1607 = vsub.f32 %v1575, %v1597
    %v1608 = vsub.f32 %v1578, %v1598
    %v1609 = vmul.f32 %v1599, 0.018518519
    %v1610 = vmul.f32 %v1600, 0.018518519
    %v1611 = vmul.f32 %v1601, 0.018518519
    %v1612 = vmul.f32 %v1602, 0.018518519
    %v1613 = vmul.f32 %v1603, 0.018518519
    %v1614 = vmul.f32 %v1604, 0.018518519
    %v1615 = vmul.f32 %v1605, 0.018518519
    %v1616 = vmul.f32 %v1606, 0.018518519
    %v1617 = vmul.f32 %v1607, 0.018518519
    %v1618 = vmul.f32 %v1608, 0.018518519
    %v1619 = vmax.f32 %v1609, 0.0
    %v1620 = vmax.f32 %v1610, 0.0
    %v1621 = vmax.f32 %v1611, 0.0
    %v1622 = vmax.f32 %v1612, 0.0
    %v1623 = vmax.f32 %v1613, 0.0
    %v1624 = vmax.f32 %v1614, 0.0
    %v1625 = vmax.f32 %v1615, 0.0
    %v1626 = vmax.f32 %v1616, 0.0
    %v1627 = vmax.f32 %v1617, 0.0
    %v1628 = vmax.f32 %v1618, 0.0
    %v1629 = vadd.f32 %v1619, 1e-05
    %v1630 = vadd.f32 %v1620, 1e-05
    %v1631 = vadd.f32 %v1621, 1e-05
    %v1632 = vadd.f32 %v1622, 1e-05
    %v1633 = vadd.f32 %v1623, 1e-05
    %v1634 = vadd.f32 %v1624, 1e-05
    %v1635 = vadd.f32 %v1625, 1e-05
    %v1636 = vadd.f32 %v1626, 1e-05
    %v1637 = vadd.f32 %v1627, 1e-05
    %v1638 = vadd.f32 %v1628, 1e-05
    %v1639 = vrsqrt.pop %v1629
    %v1640 = vrsqrt.pop %v1630
    %v1641 = vrsqrt.pop %v1631
    %v1642 = vrsqrt.pop %v1632
    %v1643 = vrsqrt.pop %v1633
    %v1644 = vrsqrt.pop %v1634
    %v1645 = vrsqrt.pop %v1635
    %v1646 = vrsqrt.pop %v1636
    %v1647 = vrsqrt.pop %v1637
    %v1648 = vrsqrt.pop %v1638
    %v1649 = vmul.f32 %v1639, %v49
    %v1650 = vmul.f32 %v1640, %v50
    %v1651 = vmul.f32 %v1641, %v51
    %v1652 = vmul.f32 %v1642, %v52
    %v1653 = vmul.f32 %v1643, %v53
    %v1654 = vmul.f32 %v1644, %v49
    %v1655 = vmul.f32 %v1645, %v50
    %v1656 = vmul.f32 %v1646, %v51
    %v1657 = vmul.f32 %v1647, %v52
    %v1658 = vmul.f32 %v1648, %v53
    %v1659 = vmul.f32 %v1499, %v1649
    %v1660 = vmul.f32 %v1500, %v1650
    %v1661 = vmul.f32 %v1501, %v1651
    %v1662 = vmul.f32 %v1502, %v1652
    %v1663 = vmul.f32 %v1503, %v1653
    %v1664 = vmul.f32 %v1504, %v1654
    %v1665 = vmul.f32 %v1505, %v1655
    %v1666 = vmul.f32 %v1506, %v1656
    %v1667 = vmul.f32 %v1507, %v1657
    %v1668 = vmul.f32 %v1508, %v1658
    %1679 = vrot.lane.b32.xlu0 %v1659, 1
    %v1680 = vpop.permute.xlu0 %1679
    %1681 = vrot.lane.b32.xlu0 %v1660, 1
    %v1682 = vpop.permute.xlu0 %1681
    %1683 = vrot.lane.b32.xlu0 %v1661, 1
    %v1684 = vpop.permute.xlu0 %1683
    %1685 = vrot.lane.b32.xlu0 %v1662, 1
    %v1686 = vpop.permute.xlu0 %1685
    %1687 = vrot.lane.b32.xlu0 %v1663, 1
    %v1688 = vpop.permute.xlu0 %1687
    %1689 = vrot.lane.b32.xlu0 %v1664, 1
    %v1690 = vpop.permute.xlu0 %1689
    %1691 = vrot.lane.b32.xlu0 %v1665, 1
    %v1692 = vpop.permute.xlu0 %1691
    %1693 = vrot.lane.b32.xlu0 %v1666, 1
    %v1694 = vpop.permute.xlu0 %1693
    %1695 = vrot.lane.b32.xlu0 %v1667, 1
    %v1696 = vpop.permute.xlu0 %1695
    %1697 = vrot.lane.b32.xlu0 %v1668, 1
    %v1698 = vpop.permute.xlu0 %1697
    %v1709 = vsub.f32 %v49, %v1680
    %v1710 = vsub.f32 %v50, %v1682
    %v1711 = vsub.f32 %v51, %v1684
    %v1712 = vsub.f32 %v52, %v1686
    %v1713 = vsub.f32 %v53, %v1688
    %v1714 = vsub.f32 %v49, %v1690
    %v1715 = vsub.f32 %v50, %v1692
    %v1716 = vsub.f32 %v51, %v1694
    %v1717 = vsub.f32 %v52, %v1696
    %v1718 = vsub.f32 %v53, %v1698
    %1720 = vset.pattern.permute.xlu0 4
    %1721 = vperm.xlu0 %1720, %v1649
    %v1722 = vpop.permute.xlu0 %1721
    %1725 = vset.pattern.permute.xlu0 4
    %1726 = vperm.xlu0 %1725, %v1650
    %v1727 = vpop.permute.xlu0 %1726
    %1730 = vset.pattern.permute.xlu0 4
    %1731 = vperm.xlu0 %1730, %v1651
    %v1732 = vpop.permute.xlu0 %1731
    %1735 = vset.pattern.permute.xlu0 4
    %1736 = vperm.xlu0 %1735, %v1652
    %v1737 = vpop.permute.xlu0 %1736
    %1740 = vset.pattern.permute.xlu0 4
    %1741 = vperm.xlu0 %1740, %v1653
    %v1742 = vpop.permute.xlu0 %1741
    %1745 = vset.pattern.permute.xlu0 4
    %1746 = vperm.xlu0 %1745, %v1654
    %v1747 = vpop.permute.xlu0 %1746
    %1750 = vset.pattern.permute.xlu0 4
    %1751 = vperm.xlu0 %1750, %v1655
    %v1752 = vpop.permute.xlu0 %1751
    %1755 = vset.pattern.permute.xlu0 4
    %1756 = vperm.xlu0 %1755, %v1656
    %v1757 = vpop.permute.xlu0 %1756
    %1760 = vset.pattern.permute.xlu0 4
    %1761 = vperm.xlu0 %1760, %v1657
    %v1762 = vpop.permute.xlu0 %1761
    %1765 = vset.pattern.permute.xlu0 4
    %1766 = vperm.xlu0 %1765, %v1658
    %v1767 = vpop.permute.xlu0 %1766
    %v1769 = vmul.f32 %v1391, %v1722
    %v1770 = vmul.f32 %v1394, %v1727
    %v1771 = vmul.f32 %v1399, %v1732
    %v1772 = vmul.f32 %v1402, %v1737
    %v1773 = vmul.f32 %v1407, %v1742
    %v1774 = vmul.f32 %v1410, %v1722
    %v1775 = vmul.f32 %v1415, %v1727
    %v1776 = vmul.f32 %v1418, %v1732
    %v1777 = vmul.f32 %v1423, %v1737
    %v1778 = vmul.f32 %v1426, %v1742
    %v1779 = vmul.f32 %v1431, %v1747
    %v1780 = vmul.f32 %v1434, %v1752
    %v1781 = vmul.f32 %v1439, %v1757
    %v1782 = vmul.f32 %v1442, %v1762
    %v1783 = vmul.f32 %v1447, %v1767
    %v1784 = vmul.f32 %v1450, %v1747
    %v1785 = vmul.f32 %v1455, %v1752
    %v1786 = vmul.f32 %v1458, %v1757
    %v1787 = vmul.f32 %v1463, %v1762
    %v1788 = vmul.f32 %v1466, %v1767
    %1790 = vset.pattern.permute.xlu0 5
    %1791 = vperm.xlu0 %1790, %v1709
    %v1792 = vpop.permute.xlu0 %1791
    %1795 = vset.pattern.permute.xlu0 5
    %1796 = vperm.xlu0 %1795, %v1710
    %v1797 = vpop.permute.xlu0 %1796
    %1800 = vset.pattern.permute.xlu0 5
    %1801 = vperm.xlu0 %1800, %v1711
    %v1802 = vpop.permute.xlu0 %1801
    %1805 = vset.pattern.permute.xlu0 5
    %1806 = vperm.xlu0 %1805, %v1712
    %v1807 = vpop.permute.xlu0 %1806
    %1810 = vset.pattern.permute.xlu0 5
    %1811 = vperm.xlu0 %1810, %v1713
    %v1812 = vpop.permute.xlu0 %1811
    %1815 = vset.pattern.permute.xlu0 5
    %1816 = vperm.xlu0 %1815, %v1714
    %v1817 = vpop.permute.xlu0 %1816
    %1820 = vset.pattern.permute.xlu0 5
    %1821 = vperm.xlu0 %1820, %v1715
    %v1822 = vpop.permute.xlu0 %1821
    %1825 = vset.pattern.permute.xlu0 5
    %1826 = vperm.xlu0 %1825, %v1716
    %v1827 = vpop.permute.xlu0 %1826
    %1830 = vset.pattern.permute.xlu0 5
    %1831 = vperm.xlu0 %1830, %v1717
    %v1832 = vpop.permute.xlu0 %1831
    %1835 = vset.pattern.permute.xlu0 5
    %1836 = vperm.xlu0 %1835, %v1718
    %v1837 = vpop.permute.xlu0 %1836
    %v1839 = vadd.f32 %v1769, %v1792
    %v1840 = vadd.f32 %v1770, %v1797
    %v1841 = vadd.f32 %v1771, %v1802
    %v1842 = vadd.f32 %v1772, %v1807
    %v1843 = vadd.f32 %v1773, %v1812
    %v1844 = vadd.f32 %v1774, %v1792
    %v1845 = vadd.f32 %v1775, %v1797
    %v1846 = vadd.f32 %v1776, %v1802
    %v1847 = vadd.f32 %v1777, %v1807
    %v1848 = vadd.f32 %v1778, %v1812
    %v1849 = vadd.f32 %v1779, %v1817
    %v1850 = vadd.f32 %v1780, %v1822
    %v1851 = vadd.f32 %v1781, %v1827
    %v1852 = vadd.f32 %v1782, %v1832
    %v1853 = vadd.f32 %v1783, %v1837
    %v1854 = vadd.f32 %v1784, %v1817
    %v1855 = vadd.f32 %v1785, %v1822
    %v1856 = vadd.f32 %v1786, %v1827
    %v1857 = vadd.f32 %v1787, %v1832
    %v1858 = vadd.f32 %v1788, %v1837
    %vm1859 = vcmask 220160
    %1860 = vst.msk [vmem:[%s10] sm:$0xff] %vm1859, %v1839
    %1861 = vst.msk [vmem:[%s10 + $0x8] sm:$0xff] %vm1859, %v1840
    %1862 = vst.msk [vmem:[%s10 + $0x10] sm:$0xff] %vm1859, %v1841
    %1863 = vst.msk [vmem:[%s10 + $0x18] sm:$0xff] %vm1859, %v1842
    %1864 = vst.msk [vmem:[%s10 + $0x20] sm:$0xff] %vm1859, %v1843
    %1865 = vst.msk [vmem:[%s10 + $0x28] sm:$0xff] %vm1859, %v1844
    %1866 = vst.msk [vmem:[%s10 + $0x30] sm:$0xff] %vm1859, %v1845
    %1867 = vst.msk [vmem:[%s10 + $0x38] sm:$0xff] %vm1859, %v1846
    %1868 = vst.msk [vmem:[%s10 + $0x40] sm:$0xff] %vm1859, %v1847
    %1869 = vst.msk [vmem:[%s10 + $0x48] sm:$0xff] %vm1859, %v1848
    %1870 = vst.msk [vmem:[%s11] sm:$0xff] %vm1859, %v1849
    %1871 = vst.msk [vmem:[%s11 + $0x8] sm:$0xff] %vm1859, %v1850
    %1872 = vst.msk [vmem:[%s11 + $0x10] sm:$0xff] %vm1859, %v1851
    %1873 = vst.msk [vmem:[%s11 + $0x18] sm:$0xff] %vm1859, %v1852
    %1874 = vst.msk [vmem:[%s11 + $0x20] sm:$0xff] %vm1859, %v1853
    %1875 = vst.msk [vmem:[%s11 + $0x28] sm:$0xff] %vm1859, %v1854
    %1876 = vst.msk [vmem:[%s11 + $0x30] sm:$0xff] %vm1859, %v1855
    %1877 = vst.msk [vmem:[%s11 + $0x38] sm:$0xff] %vm1859, %v1856
    %1878 = vst.msk [vmem:[%s11 + $0x40] sm:$0xff] %vm1859, %v1857
    %1879 = vst.msk [vmem:[%s11 + $0x48] sm:$0xff] %vm1859, %v1858
    %v1880 = vld [vmem:[%s4] sm:$0xff]
    %v1881 = vld [vmem:[%s4 + $0x8] sm:$0xff]
    %v1882 = vld [vmem:[%s4 + $0x10] sm:$0xff]
    %v1883 = vld [vmem:[%s4 + $0x18] sm:$0xff]
    %v1884 = vld [vmem:[%s4 + $0x20] sm:$0xff]
    %v1885 = vld [vmem:[%s4 + $0x28] sm:$0xff]
    %v1886 = vld [vmem:[%s4 + $0x30] sm:$0xff]
    %v1887 = vld [vmem:[%s4 + $0x38] sm:$0xff]
    %v1888 = vld [vmem:[%s4 + $0x40] sm:$0xff]
    %v1889 = vld [vmem:[%s4 + $0x48] sm:$0xff]
    %v1890 = vld [vmem:[%s4 + $0x50] sm:$0xff]
    %v1891 = vld [vmem:[%s4 + $0x58] sm:$0xff]
    %v1892 = vld [vmem:[%s4 + $0x60] sm:$0xff]
    %v1893 = vld [vmem:[%s4 + $0x68] sm:$0xff]
    %v1894 = vld [vmem:[%s4 + $0x70] sm:$0xff]
    %v1895 = vld [vmem:[%s4 + $0x78] sm:$0xff]
    %v1896 = vld [vmem:[%s4 + $0x80] sm:$0xff]
    %v1897 = vld [vmem:[%s4 + $0x88] sm:$0xff]
    %v1898 = vld [vmem:[%s4 + $0x90] sm:$0xff]
    %v1899 = vld [vmem:[%s4 + $0x98] sm:$0xff]
    %v1900 = vld [vmem:[%s4 + $0xa0] sm:$0xff]
    %v1901 = vld [vmem:[%s4 + $0xa8] sm:$0xff]
    %v1902 = vld [vmem:[%s4 + $0xb0] sm:$0xff]
    %v1903 = vld [vmem:[%s4 + $0xb8] sm:$0xff]
    %v1904 = vld [vmem:[%s4 + $0xc0] sm:$0xff]
    %v1905 = vld [vmem:[%s4 + $0xc8] sm:$0xff]
    %v1906 = vld [vmem:[%s4 + $0xd0] sm:$0xff]
    %v1907 = vld [vmem:[%s4 + $0xd8] sm:$0xff]
    %v1908 = vld [vmem:[%s4 + $0xe0] sm:$0xff]
    %v1909 = vld [vmem:[%s4 + $0xe8] sm:$0xff]
    %v1910 = vld [vmem:[%s4 + $0xf0] sm:$0xff]
    %v1911 = vld [vmem:[%s4 + $0xf8] sm:$0xff]
    %v1912 = vld [vmem:[%s5] sm:$0xf]
    %v1913 = vpack.c.bf16 %v1840, %v1839
    %v1914 = vpack.c.bf16 %v1842, %v1841
    %v1915 = vpack.c.bf16 %v1844, %v1843
    %v1916 = vpack.c.bf16 %v1846, %v1845
    %v1917 = vpack.c.bf16 %v1848, %v1847
    %v1918 = vpack.c.bf16 %v1850, %v1849
    %v1919 = vpack.c.bf16 %v1852, %v1851
    %v1920 = vpack.c.bf16 %v1854, %v1853
    %v1921 = vpack.c.bf16 %v1856, %v1855
    %v1922 = vpack.c.bf16 %v1858, %v1857
    %v1924 = vlaneseq
    %v1925 = vshrl.u32 %v1924, 7
    %v1926 = vsub.s32 0, %v1925
    %v1927 = vrot.slane %v1912, %v1926
    %v1928 = vlaneseq
    %v1929 = vshrl.u32 %v1928, 7
    %v1930 = vsub.s32 1, %v1929
    %v1931 = vrot.slane %v1912, %v1930
    %v1932 = vlaneseq
    %v1933 = vshrl.u32 %v1932, 7
    %v1934 = vsub.s32 2, %v1933
    %v1935 = vrot.slane %v1912, %v1934
    %v1936 = vlaneseq
    %v1937 = vshrl.u32 %v1936, 7
    %v1938 = vsub.s32 3, %v1937
    %v1939 = vrot.slane %v1912, %v1938
    %v1976 = vunpack.c.l.b16 %v1880
    %v1977 = vunpack.c.h.b16 %v1880
    %v1978 = vunpack.c.l.b16 %v1881
    %v1979 = vunpack.c.h.b16 %v1881
    %v1980 = vunpack.c.l.b16 %v1882
    %v1981 = vunpack.c.h.b16 %v1882
    %v1982 = vunpack.c.l.b16 %v1883
    %v1983 = vunpack.c.h.b16 %v1883
    %v1984 = vunpack.c.l.b16 %v1884
    %v1985 = vunpack.c.h.b16 %v1884
    %v1986 = vunpack.c.l.b16 %v1885
    %v1987 = vunpack.c.h.b16 %v1885
    %v1988 = vunpack.c.l.b16 %v1886
    %v1989 = vunpack.c.h.b16 %v1886
    %v1990 = vunpack.c.l.b16 %v1887
    %v1991 = vunpack.c.h.b16 %v1887
    %v1992 = vunpack.c.l.b16 %v1888
    %v1993 = vunpack.c.h.b16 %v1888
    %v1994 = vunpack.c.l.b16 %v1889
    %v1995 = vunpack.c.h.b16 %v1889
    %v1996 = vunpack.c.l.b16 %v1890
    %v1997 = vunpack.c.h.b16 %v1890
    %v1998 = vunpack.c.l.b16 %v1891
    %v1999 = vunpack.c.h.b16 %v1891
    %v2000 = vunpack.c.l.b16 %v1892
    %v2001 = vunpack.c.h.b16 %v1892
    %v2002 = vunpack.c.l.b16 %v1893
    %v2003 = vunpack.c.h.b16 %v1893
    %v2004 = vunpack.c.l.b16 %v1894
    %v2005 = vunpack.c.h.b16 %v1894
    %v2006 = vunpack.c.l.b16 %v1895
    %v2007 = vunpack.c.h.b16 %v1895
    %v2008 = vunpack.c.l.b16 %v1896
    %v2009 = vunpack.c.h.b16 %v1896
    %v2010 = vunpack.c.l.b16 %v1897
    %v2011 = vunpack.c.h.b16 %v1897
    %v2012 = vunpack.c.l.b16 %v1898
    %v2013 = vunpack.c.h.b16 %v1898
    %v2014 = vunpack.c.l.b16 %v1899
    %v2015 = vunpack.c.h.b16 %v1899
    %v2016 = vunpack.c.l.b16 %v1900
    %v2017 = vunpack.c.h.b16 %v1900
    %v2018 = vunpack.c.l.b16 %v1901
    %v2019 = vunpack.c.h.b16 %v1901
    %v2020 = vunpack.c.l.b16 %v1902
    %v2021 = vunpack.c.h.b16 %v1902
    %v2022 = vunpack.c.l.b16 %v1903
    %v2023 = vunpack.c.h.b16 %v1903
    %v2024 = vunpack.c.l.b16 %v1904
    %v2025 = vunpack.c.h.b16 %v1904
    %v2026 = vunpack.c.l.b16 %v1905
    %v2027 = vunpack.c.h.b16 %v1905
    %v2028 = vunpack.c.l.b16 %v1906
    %v2029 = vunpack.c.h.b16 %v1906
    %v2030 = vunpack.c.l.b16 %v1907
    %v2031 = vunpack.c.h.b16 %v1907
    %v2032 = vunpack.c.l.b16 %v1908
    %v2033 = vunpack.c.h.b16 %v1908
    %v2034 = vunpack.c.l.b16 %v1909
    %v2035 = vunpack.c.h.b16 %v1909
    %v2036 = vunpack.c.l.b16 %v1910
    %v2037 = vunpack.c.h.b16 %v1910
    %v2038 = vunpack.c.l.b16 %v1911
    %v2039 = vunpack.c.h.b16 %v1911
    %v2040 = vpack.c.b16 %v1980, %v1976
    %v2041 = vpack.c.b16 %v1981, %v1977
    %v2042 = vpack.c.b16 %v1982, %v1978
    %v2043 = vpack.c.b16 %v1983, %v1979
    %v2044 = vpack.c.b16 %v1988, %v1984
    %v2045 = vpack.c.b16 %v1989, %v1985
    %v2046 = vpack.c.b16 %v1990, %v1986
    %v2047 = vpack.c.b16 %v1991, %v1987
    %v2048 = vpack.c.b16 %v1996, %v1992
    %v2049 = vpack.c.b16 %v1997, %v1993
    %v2050 = vpack.c.b16 %v1998, %v1994
    %v2051 = vpack.c.b16 %v1999, %v1995
    %v2052 = vpack.c.b16 %v2004, %v2000
    %v2053 = vpack.c.b16 %v2005, %v2001
    %v2054 = vpack.c.b16 %v2006, %v2002
    %v2055 = vpack.c.b16 %v2007, %v2003
    %v2056 = vpack.c.b16 %v2012, %v2008
    %v2057 = vpack.c.b16 %v2013, %v2009
    %v2058 = vpack.c.b16 %v2014, %v2010
    %v2059 = vpack.c.b16 %v2015, %v2011
    %v2060 = vpack.c.b16 %v2020, %v2016
    %v2061 = vpack.c.b16 %v2021, %v2017
    %v2062 = vpack.c.b16 %v2022, %v2018
    %v2063 = vpack.c.b16 %v2023, %v2019
    %v2064 = vpack.c.b16 %v2028, %v2024
    %v2065 = vpack.c.b16 %v2029, %v2025
    %v2066 = vpack.c.b16 %v2030, %v2026
    %v2067 = vpack.c.b16 %v2031, %v2027
    %v2068 = vpack.c.b16 %v2036, %v2032
    %v2069 = vpack.c.b16 %v2037, %v2033
    %v2070 = vpack.c.b16 %v2038, %v2034
    %v2071 = vpack.c.b16 %v2039, %v2035
    %2104 = vmatprep.subr.bf16.mxu0 %v2041
    %2105 = vmatpush1.bf16.msra.mxu0 %v2040
    %2106 = vmatprep.subr.bf16.mxu0 %v2045
    %2107 = vmatpush1.bf16.msra.mxu0 %v2044
    %2108 = vmatprep.subr.bf16.mxu0 %v2049
    %2109 = vmatpush1.bf16.msra.mxu0 %v2048
    %2110 = vmatprep.subr.bf16.mxu0 %v2053
    %2111 = vmatpush1.bf16.msra.mxu0 %v2052
    %2112 = vmatprep.subr.bf16.mxu0 %v2057
    %2113 = vmatpush1.bf16.msra.mxu0 %v2056
    %2114 = vmatprep.subr.bf16.mxu0 %v2061
    %2115 = vmatpush1.bf16.msra.mxu0 %v2060
    %2116 = vmatprep.subr.bf16.mxu0 %v2065
    %2117 = vmatpush1.bf16.msra.mxu0 %v2064
    %2118 = vmatprep.subr.bf16.mxu0 %v2069
    %2119 = vmatpush1.bf16.msra.mxu0 %v2068
    %2120 = vmatprep.subr.bf16.mxu0 0
    %2121 = vmatpush1.bf16.msra.mxu0 0
    %2122 = vmatprep.subr.bf16.mxu0 0
    %2123 = vmatpush1.bf16.msra.mxu0 0
    %2124 = vmatprep.subr.bf16.mxu0 0
    %2125 = vmatpush1.bf16.msra.mxu0 0
    %2126 = vmatprep.subr.bf16.mxu0 0
    %2127 = vmatpush1.bf16.msra.mxu0 0
    %2128 = vmatprep.subr.bf16.mxu0 0
    %2129 = vmatpush1.bf16.msra.mxu0 0
    %2130 = vmatprep.subr.bf16.mxu0 0
    %2131 = vmatpush1.bf16.msra.mxu0 0
    %2132 = vmatprep.subr.bf16.mxu0 0
    %2133 = vmatpush1.bf16.msra.mxu0 0
    %2134 = vmatprep.subr.bf16.mxu0 0
    %2135 = vmatpush1.bf16.msra.mxu0 0
    %2136 = vmatprep.mubr.bf16.mxu0 0
    %2137 = vmatmul.mubr.bf16.gmra.mrb[0].mxu0 %v1913
    %v2138 = vpop.f32.mrb[0].mxu0
    %v2139 = vadd.f32 %v1927, %v2138
    %v2140 = vpop.f32.mrb[0].mxu0
    %v2141 = vadd.f32 %v1931, %v2140
    %v2142 = vpop.f32.mrb[0].mxu0
    %v2143 = vadd.f32 %v1927, %v2142
    %v2144 = vpop.f32.mrb[0].mxu0
    %v2145 = vadd.f32 %v1931, %v2144
    %2146 = vmatprep.mubr.bf16.mxu0 0
    %2147 = vmatmul.mubr.bf16.gmra.mrb[0].mxu0 %v1914
    %v2148 = vpop.f32.mrb[0].mxu0
    %v2149 = vadd.f32 %v1927, %v2148
    %v2150 = vpop.f32.mrb[0].mxu0
    %v2151 = vadd.f32 %v1931, %v2150
    %v2152 = vpop.f32.mrb[0].mxu0
    %v2153 = vadd.f32 %v1927, %v2152
    %v2154 = vpop.f32.mrb[0].mxu0
    %v2155 = vadd.f32 %v1931, %v2154
    %2156 = vmatprep.mubr.bf16.mxu0 0
    %2157 = vmatmul.mubr.bf16.gmra.mrb[0].mxu0 %v1915
    %v2158 = vpop.f32.mrb[0].mxu0
    %v2159 = vadd.f32 %v1927, %v2158
    %v2160 = vpop.f32.mrb[0].mxu0
    %v2161 = vadd.f32 %v1931, %v2160
    %v2162 = vpop.f32.mrb[0].mxu0
    %v2163 = vadd.f32 %v1927, %v2162
    %v2164 = vpop.f32.mrb[0].mxu0
    %v2165 = vadd.f32 %v1931, %v2164
    %2166 = vmatprep.mubr.bf16.mxu0 0
    %2167 = vmatmul.mubr.bf16.gmra.mrb[0].mxu0 %v1916
    %v2168 = vpop.f32.mrb[0].mxu0
    %v2169 = vadd.f32 %v1927, %v2168
    %v2170 = vpop.f32.mrb[0].mxu0
    %v2171 = vadd.f32 %v1931, %v2170
    %v2172 = vpop.f32.mrb[0].mxu0
    %v2173 = vadd.f32 %v1927, %v2172
    %v2174 = vpop.f32.mrb[0].mxu0
    %v2175 = vadd.f32 %v1931, %v2174
    %2176 = vmatprep.mubr.bf16.mxu0 0
    %2177 = vmatmul.mubr.bf16.gmra.mrb[0].mxu0 %v1917
    %v2178 = vpop.f32.mrb[0].mxu0
    %v2179 = vadd.f32 %v1927, %v2178
    %v2180 = vpop.f32.mrb[0].mxu0
    %v2181 = vadd.f32 %v1931, %v2180
    %v2182 = vpop.f32.mrb[0].mxu0
    %v2183 = vadd.f32 %v1927, %v2182
    %v2184 = vpop.f32.mrb[0].mxu0
    %v2185 = vadd.f32 %v1931, %v2184
    %2186 = vmatprep.mubr.bf16.mxu0 0
    %2187 = vmatmul.mubr.bf16.gmra.mrb[0].mxu0 %v1918
    %v2188 = vpop.f32.mrb[0].mxu0
    %v2189 = vadd.f32 %v1927, %v2188
    %v2190 = vpop.f32.mrb[0].mxu0
    %v2191 = vadd.f32 %v1931, %v2190
    %v2192 = vpop.f32.mrb[0].mxu0
    %v2193 = vadd.f32 %v1927, %v2192
    %v2194 = vpop.f32.mrb[0].mxu0
    %v2195 = vadd.f32 %v1931, %v2194
    %2196 = vmatprep.mubr.bf16.mxu0 0
    %2197 = vmatmul.mubr.bf16.gmra.mrb[0].mxu0 %v1919
    %v2198 = vpop.f32.mrb[0].mxu0
    %v2199 = vadd.f32 %v1927, %v2198
    %v2200 = vpop.f32.mrb[0].mxu0
    %v2201 = vadd.f32 %v1931, %v2200
    %v2202 = vpop.f32.mrb[0].mxu0
    %v2203 = vadd.f32 %v1927, %v2202
    %v2204 = vpop.f32.mrb[0].mxu0
    %v2205 = vadd.f32 %v1931, %v2204
    %2206 = vmatprep.mubr.bf16.mxu0 0
    %2207 = vmatmul.mubr.bf16.gmra.mrb[0].mxu0 %v1920
    %v2208 = vpop.f32.mrb[0].mxu0
    %v2209 = vadd.f32 %v1927, %v2208
    %v2210 = vpop.f32.mrb[0].mxu0
    %v2211 = vadd.f32 %v1931, %v2210
    %v2212 = vpop.f32.mrb[0].mxu0
    %v2213 = vadd.f32 %v1927, %v2212
    %v2214 = vpop.f32.mrb[0].mxu0
    %v2215 = vadd.f32 %v1931, %v2214
    %2216 = vmatprep.mubr.bf16.mxu0 0
    %2217 = vmatmul.mubr.bf16.gmra.mrb[0].mxu0 %v1921
    %v2218 = vpop.f32.mrb[0].mxu0
    %v2219 = vadd.f32 %v1927, %v2218
    %v2220 = vpop.f32.mrb[0].mxu0
    %v2221 = vadd.f32 %v1931, %v2220
    %v2222 = vpop.f32.mrb[0].mxu0
    %v2223 = vadd.f32 %v1927, %v2222
    %v2224 = vpop.f32.mrb[0].mxu0
    %v2225 = vadd.f32 %v1931, %v2224
    %2226 = vmatprep.mubr.bf16.mxu0 0
    %2227 = vmatmul.mubr.bf16.gmra.mrb[0].mxu0 %v1922
    %v2228 = vpop.f32.mrb[0].mxu0
    %v2229 = vadd.f32 %v1927, %v2228
    %v2230 = vpop.f32.mrb[0].mxu0
    %v2231 = vadd.f32 %v1931, %v2230
    %v2232 = vpop.f32.mrb[0].mxu0
    %v2233 = vadd.f32 %v1927, %v2232
    %v2234 = vpop.f32.mrb[0].mxu0
    %v2235 = vadd.f32 %v1931, %v2234
    %2236 = vdwg.mxu0
    %2237 = vmatprep.subr.bf16.mxu0 %v2043
    %2238 = vmatpush1.bf16.msra.mxu0 %v2042
    %2239 = vmatprep.subr.bf16.mxu0 %v2047
    %2240 = vmatpush1.bf16.msra.mxu0 %v2046
    %2241 = vmatprep.subr.bf16.mxu0 %v2051
    %2242 = vmatpush1.bf16.msra.mxu0 %v2050
    %2243 = vmatprep.subr.bf16.mxu0 %v2055
    %2244 = vmatpush1.bf16.msra.mxu0 %v2054
    %2245 = vmatprep.subr.bf16.mxu0 %v2059
    %2246 = vmatpush1.bf16.msra.mxu0 %v2058
    %2247 = vmatprep.subr.bf16.mxu0 %v2063
    %2248 = vmatpush1.bf16.msra.mxu0 %v2062
    %2249 = vmatprep.subr.bf16.mxu0 %v2067
    %2250 = vmatpush1.bf16.msra.mxu0 %v2066
    %2251 = vmatprep.subr.bf16.mxu0 %v2071
    %2252 = vmatpush1.bf16.msra.mxu0 %v2070
    %2253 = vmatprep.subr.bf16.mxu0 0
    %2254 = vmatpush1.bf16.msra.mxu0 0
    %2255 = vmatprep.subr.bf16.mxu0 0
    %2256 = vmatpush1.bf16.msra.mxu0 0
    %2257 = vmatprep.subr.bf16.mxu0 0
    %2258 = vmatpush1.bf16.msra.mxu0 0
    %2259 = vmatprep.subr.bf16.mxu0 0
    %2260 = vmatpush1.bf16.msra.mxu0 0
    %2261 = vmatprep.subr.bf16.mxu0 0
    %2262 = vmatpush1.bf16.msra.mxu0 0
    %2263 = vmatprep.subr.bf16.mxu0 0
    %2264 = vmatpush1.bf16.msra.mxu0 0
    %2265 = vmatprep.subr.bf16.mxu0 0
    %2266 = vmatpush1.bf16.msra.mxu0 0
    %2267 = vmatprep.subr.bf16.mxu0 0
    %2268 = vmatpush1.bf16.msra.mxu0 0
    %2269 = vmatprep.mubr.bf16.mxu0 0
    %2270 = vmatmul.mubr.bf16.gmra.mrb[0].mxu0 %v1913
    %v2271 = vpop.f32.mrb[0].mxu0
    %v2272 = vadd.f32 %v1935, %v2271
    %v2273 = vpop.f32.mrb[0].mxu0
    %v2274 = vadd.f32 %v1939, %v2273
    %v2275 = vpop.f32.mrb[0].mxu0
    %v2276 = vadd.f32 %v1935, %v2275
    %v2277 = vpop.f32.mrb[0].mxu0
    %v2278 = vadd.f32 %v1939, %v2277
    %2279 = vmatprep.mubr.bf16.mxu0 0
    %2280 = vmatmul.mubr.bf16.gmra.mrb[0].mxu0 %v1914
    %v2281 = vpop.f32.mrb[0].mxu0
    %v2282 = vadd.f32 %v1935, %v2281
    %v2283 = vpop.f32.mrb[0].mxu0
    %v2284 = vadd.f32 %v1939, %v2283
    %v2285 = vpop.f32.mrb[0].mxu0
    %v2286 = vadd.f32 %v1935, %v2285
    %v2287 = vpop.f32.mrb[0].mxu0
    %v2288 = vadd.f32 %v1939, %v2287
    %2289 = vmatprep.mubr.bf16.mxu0 0
    %2290 = vmatmul.mubr.bf16.gmra.mrb[0].mxu0 %v1915
    %v2291 = vpop.f32.mrb[0].mxu0
    %v2292 = vadd.f32 %v1935, %v2291
    %v2293 = vpop.f32.mrb[0].mxu0
    %v2294 = vadd.f32 %v1939, %v2293
    %v2295 = vpop.f32.mrb[0].mxu0
    %v2296 = vadd.f32 %v1935, %v2295
    %v2297 = vpop.f32.mrb[0].mxu0
    %v2298 = vadd.f32 %v1939, %v2297
    %2299 = vmatprep.mubr.bf16.mxu0 0
    %2300 = vmatmul.mubr.bf16.gmra.mrb[0].mxu0 %v1916
    %v2301 = vpop.f32.mrb[0].mxu0
    %v2302 = vadd.f32 %v1935, %v2301
    %v2303 = vpop.f32.mrb[0].mxu0
    %v2304 = vadd.f32 %v1939, %v2303
    %v2305 = vpop.f32.mrb[0].mxu0
    %v2306 = vadd.f32 %v1935, %v2305
    %v2307 = vpop.f32.mrb[0].mxu0
    %v2308 = vadd.f32 %v1939, %v2307
    %2309 = vmatprep.mubr.bf16.mxu0 0
    %2310 = vmatmul.mubr.bf16.gmra.mrb[0].mxu0 %v1917
    %v2311 = vpop.f32.mrb[0].mxu0
    %v2312 = vadd.f32 %v1935, %v2311
    %v2313 = vpop.f32.mrb[0].mxu0
    %v2314 = vadd.f32 %v1939, %v2313
    %v2315 = vpop.f32.mrb[0].mxu0
    %v2316 = vadd.f32 %v1935, %v2315
    %v2317 = vpop.f32.mrb[0].mxu0
    %v2318 = vadd.f32 %v1939, %v2317
    %2319 = vmatprep.mubr.bf16.mxu0 0
    %2320 = vmatmul.mubr.bf16.gmra.mrb[0].mxu0 %v1918
    %v2321 = vpop.f32.mrb[0].mxu0
    %v2322 = vadd.f32 %v1935, %v2321
    %v2323 = vpop.f32.mrb[0].mxu0
    %v2324 = vadd.f32 %v1939, %v2323
    %v2325 = vpop.f32.mrb[0].mxu0
    %v2326 = vadd.f32 %v1935, %v2325
    %v2327 = vpop.f32.mrb[0].mxu0
    %v2328 = vadd.f32 %v1939, %v2327
    %2329 = vmatprep.mubr.bf16.mxu0 0
    %2330 = vmatmul.mubr.bf16.gmra.mrb[0].mxu0 %v1919
    %v2331 = vpop.f32.mrb[0].mxu0
    %v2332 = vadd.f32 %v1935, %v2331
    %v2333 = vpop.f32.mrb[0].mxu0
    %v2334 = vadd.f32 %v1939, %v2333
    %v2335 = vpop.f32.mrb[0].mxu0
    %v2336 = vadd.f32 %v1935, %v2335
    %v2337 = vpop.f32.mrb[0].mxu0
    %v2338 = vadd.f32 %v1939, %v2337
    %2339 = vmatprep.mubr.bf16.mxu0 0
    %2340 = vmatmul.mubr.bf16.gmra.mrb[0].mxu0 %v1920
    %v2341 = vpop.f32.mrb[0].mxu0
    %v2342 = vadd.f32 %v1935, %v2341
    %v2343 = vpop.f32.mrb[0].mxu0
    %v2344 = vadd.f32 %v1939, %v2343
    %v2345 = vpop.f32.mrb[0].mxu0
    %v2346 = vadd.f32 %v1935, %v2345
    %v2347 = vpop.f32.mrb[0].mxu0
    %v2348 = vadd.f32 %v1939, %v2347
    %2349 = vmatprep.mubr.bf16.mxu0 0
    %2350 = vmatmul.mubr.bf16.gmra.mrb[0].mxu0 %v1921
    %v2351 = vpop.f32.mrb[0].mxu0
    %v2352 = vadd.f32 %v1935, %v2351
    %v2353 = vpop.f32.mrb[0].mxu0
    %v2354 = vadd.f32 %v1939, %v2353
    %v2355 = vpop.f32.mrb[0].mxu0
    %v2356 = vadd.f32 %v1935, %v2355
    %v2357 = vpop.f32.mrb[0].mxu0
    %v2358 = vadd.f32 %v1939, %v2357
    %2359 = vmatprep.mubr.bf16.mxu0 0
    %2360 = vmatmul.mubr.bf16.gmra.mrb[0].mxu0 %v1922
    %v2361 = vpop.f32.mrb[0].mxu0
    %v2362 = vadd.f32 %v1935, %v2361
    %v2363 = vpop.f32.mrb[0].mxu0
    %v2364 = vadd.f32 %v1939, %v2363
    %v2365 = vpop.f32.mrb[0].mxu0
    %v2366 = vadd.f32 %v1935, %v2365
    %v2367 = vpop.f32.mrb[0].mxu0
    %v2368 = vadd.f32 %v1939, %v2367
    %2369 = vdwg.mxu0
    %v2370 = vadd.f32 %v2139, %v2141
    %v2371 = vadd.f32 %v2370, %v2272
    %v2372 = vadd.f32 %v2371, %v2274
    %v2373 = vadd.f32 %v2372, %v2163
    %v2374 = vadd.f32 %v2373, %v2165
    %v2375 = vadd.f32 %v2374, %v2296
    %v2376 = vadd.f32 %v2375, %v2298
    %2377 = vadd.xlane.f32.xlu0 %v2376
    %v2378 = vpop.xlane.xlu0 %2377
    %v2379 = vadd.f32 %v2143, %v2145
    %v2380 = vadd.f32 %v2379, %v2276
    %v2381 = vadd.f32 %v2380, %v2278
    %v2382 = vadd.f32 %v2381, %v2169
    %v2383 = vadd.f32 %v2382, %v2171
    %v2384 = vadd.f32 %v2383, %v2302
    %v2385 = vadd.f32 %v2384, %v2304
    %2386 = vadd.xlane.f32.xlu0 %v2385
    %v2387 = vpop.xlane.xlu0 %2386
    %v2388 = vadd.f32 %v2149, %v2151
    %v2389 = vadd.f32 %v2388, %v2282
    %v2390 = vadd.f32 %v2389, %v2284
    %v2391 = vadd.f32 %v2390, %v2173
    %v2392 = vadd.f32 %v2391, %v2175
    %v2393 = vadd.f32 %v2392, %v2306
    %v2394 = vadd.f32 %v2393, %v2308
    %2395 = vadd.xlane.f32.xlu0 %v2394
    %v2396 = vpop.xlane.xlu0 %2395
    %v2397 = vadd.f32 %v2153, %v2155
    %v2398 = vadd.f32 %v2397, %v2286
    %v2399 = vadd.f32 %v2398, %v2288
    %v2400 = vadd.f32 %v2399, %v2179
    %v2401 = vadd.f32 %v2400, %v2181
    %v2402 = vadd.f32 %v2401, %v2312
    %v2403 = vadd.f32 %v2402, %v2314
    %2404 = vadd.xlane.f32.xlu0 %v2403
    %v2405 = vpop.xlane.xlu0 %2404
    %v2406 = vadd.f32 %v2159, %v2161
    %v2407 = vadd.f32 %v2406, %v2292
    %v2408 = vadd.f32 %v2407, %v2294
    %v2409 = vadd.f32 %v2408, %v2183
    %v2410 = vadd.f32 %v2409, %v2185
    %v2411 = vadd.f32 %v2410, %v2316
    %v2412 = vadd.f32 %v2411, %v2318
    %2413 = vadd.xlane.f32.xlu0 %v2412
    %v2414 = vpop.xlane.xlu0 %2413
    %v2415 = vadd.f32 %v2189, %v2191
    %v2416 = vadd.f32 %v2415, %v2322
    %v2417 = vadd.f32 %v2416, %v2324
    %v2418 = vadd.f32 %v2417, %v2213
    %v2419 = vadd.f32 %v2418, %v2215
    %v2420 = vadd.f32 %v2419, %v2346
    %v2421 = vadd.f32 %v2420, %v2348
    %2422 = vadd.xlane.f32.xlu0 %v2421
    %v2423 = vpop.xlane.xlu0 %2422
    %v2424 = vadd.f32 %v2193, %v2195
    %v2425 = vadd.f32 %v2424, %v2326
    %v2426 = vadd.f32 %v2425, %v2328
    %v2427 = vadd.f32 %v2426, %v2219
    %v2428 = vadd.f32 %v2427, %v2221
    %v2429 = vadd.f32 %v2428, %v2352
    %v2430 = vadd.f32 %v2429, %v2354
    %2431 = vadd.xlane.f32.xlu0 %v2430
    %v2432 = vpop.xlane.xlu0 %2431
    %v2433 = vadd.f32 %v2199, %v2201
    %v2434 = vadd.f32 %v2433, %v2332
    %v2435 = vadd.f32 %v2434, %v2334
    %v2436 = vadd.f32 %v2435, %v2223
    %v2437 = vadd.f32 %v2436, %v2225
    %v2438 = vadd.f32 %v2437, %v2356
    %v2439 = vadd.f32 %v2438, %v2358
    %2440 = vadd.xlane.f32.xlu0 %v2439
    %v2441 = vpop.xlane.xlu0 %2440
    %v2442 = vadd.f32 %v2203, %v2205
    %v2443 = vadd.f32 %v2442, %v2336
    %v2444 = vadd.f32 %v2443, %v2338
    %v2445 = vadd.f32 %v2444, %v2229
    %v2446 = vadd.f32 %v2445, %v2231
    %v2447 = vadd.f32 %v2446, %v2362
    %v2448 = vadd.f32 %v2447, %v2364
    %2449 = vadd.xlane.f32.xlu0 %v2448
    %v2450 = vpop.xlane.xlu0 %2449
    %v2451 = vadd.f32 %v2209, %v2211
    %v2452 = vadd.f32 %v2451, %v2342
    %v2453 = vadd.f32 %v2452, %v2344
    %v2454 = vadd.f32 %v2453, %v2233
    %v2455 = vadd.f32 %v2454, %v2235
    %v2456 = vadd.f32 %v2455, %v2366
    %v2457 = vadd.f32 %v2456, %v2368
    %2458 = vadd.xlane.f32.xlu0 %v2457
    %v2459 = vpop.xlane.xlu0 %2458
    %v2460 = vmul.f32 %v2378, 0.0009765625
    %v2461 = vmul.f32 %v2387, 0.0009765625
    %v2462 = vmul.f32 %v2396, 0.0009765625
    %v2463 = vmul.f32 %v2405, 0.0009765625
    %v2464 = vmul.f32 %v2414, 0.0009765625
    %v2465 = vmul.f32 %v2423, 0.0009765625
    %v2466 = vmul.f32 %v2432, 0.0009765625
    %v2467 = vmul.f32 %v2441, 0.0009765625
    %v2468 = vmul.f32 %v2450, 0.0009765625
    %v2469 = vmul.f32 %v2459, 0.0009765625
    %v2470 = vsub.f32 %v2139, %v2460
    %v2471 = vsub.f32 %v2141, %v2460
    %v2472 = vsub.f32 %v2272, %v2460
    %v2473 = vsub.f32 %v2274, %v2460
    %v2474 = vsub.f32 %v2143, %v2461
    %v2475 = vsub.f32 %v2145, %v2461
    %v2476 = vsub.f32 %v2276, %v2461
    %v2477 = vsub.f32 %v2278, %v2461
    %v2478 = vsub.f32 %v2149, %v2462
    %v2479 = vsub.f32 %v2151, %v2462
    %v2480 = vsub.f32 %v2282, %v2462
    %v2481 = vsub.f32 %v2284, %v2462
    %v2482 = vsub.f32 %v2153, %v2463
    %v2483 = vsub.f32 %v2155, %v2463
    %v2484 = vsub.f32 %v2286, %v2463
    %v2485 = vsub.f32 %v2288, %v2463
    %v2486 = vsub.f32 %v2159, %v2464
    %v2487 = vsub.f32 %v2161, %v2464
    %v2488 = vsub.f32 %v2292, %v2464
    %v2489 = vsub.f32 %v2294, %v2464
    %v2490 = vsub.f32 %v2163, %v2460
    %v2491 = vsub.f32 %v2165, %v2460
    %v2492 = vsub.f32 %v2296, %v2460
    %v2493 = vsub.f32 %v2298, %v2460
    %v2494 = vsub.f32 %v2169, %v2461
    %v2495 = vsub.f32 %v2171, %v2461
    %v2496 = vsub.f32 %v2302, %v2461
    %v2497 = vsub.f32 %v2304, %v2461
    %v2498 = vsub.f32 %v2173, %v2462
    %v2499 = vsub.f32 %v2175, %v2462
    %v2500 = vsub.f32 %v2306, %v2462
    %v2501 = vsub.f32 %v2308, %v2462
    %v2502 = vsub.f32 %v2179, %v2463
    %v2503 = vsub.f32 %v2181, %v2463
    %v2504 = vsub.f32 %v2312, %v2463
    %v2505 = vsub.f32 %v2314, %v2463
    %v2506 = vsub.f32 %v2183, %v2464
    %v2507 = vsub.f32 %v2185, %v2464
    %v2508 = vsub.f32 %v2316, %v2464
    %v2509 = vsub.f32 %v2318, %v2464
    %v2510 = vsub.f32 %v2189, %v2465
    %v2511 = vsub.f32 %v2191, %v2465
    %v2512 = vsub.f32 %v2322, %v2465
    %v2513 = vsub.f32 %v2324, %v2465
    %v2514 = vsub.f32 %v2193, %v2466
    %v2515 = vsub.f32 %v2195, %v2466
    %v2516 = vsub.f32 %v2326, %v2466
    %v2517 = vsub.f32 %v2328, %v2466
    %v2518 = vsub.f32 %v2199, %v2467
    %v2519 = vsub.f32 %v2201, %v2467
    %v2520 = vsub.f32 %v2332, %v2467
    %v2521 = vsub.f32 %v2334, %v2467
    %v2522 = vsub.f32 %v2203, %v2468
    %v2523 = vsub.f32 %v2205, %v2468
    %v2524 = vsub.f32 %v2336, %v2468
    %v2525 = vsub.f32 %v2338, %v2468
    %v2526 = vsub.f32 %v2209, %v2469
    %v2527 = vsub.f32 %v2211, %v2469
    %v2528 = vsub.f32 %v2342, %v2469
    %v2529 = vsub.f32 %v2344, %v2469
    %v2530 = vsub.f32 %v2213, %v2465
    %v2531 = vsub.f32 %v2215, %v2465
    %v2532 = vsub.f32 %v2346, %v2465
    %v2533 = vsub.f32 %v2348, %v2465
    %v2534 = vsub.f32 %v2219, %v2466
    %v2535 = vsub.f32 %v2221, %v2466
    %v2536 = vsub.f32 %v2352, %v2466
    %v2537 = vsub.f32 %v2354, %v2466
    %v2538 = vsub.f32 %v2223, %v2467
    %v2539 = vsub.f32 %v2225, %v2467
    %v2540 = vsub.f32 %v2356, %v2467
    %v2541 = vsub.f32 %v2358, %v2467
    %v2542 = vsub.f32 %v2229, %v2468
    %v2543 = vsub.f32 %v2231, %v2468
    %v2544 = vsub.f32 %v2362, %v2468
    %v2545 = vsub.f32 %v2364, %v2468
    %v2546 = vsub.f32 %v2233, %v2469
    %v2547 = vsub.f32 %v2235, %v2469
    %v2548 = vsub.f32 %v2366, %v2469
    %v2549 = vsub.f32 %v2368, %v2469
    %v2550 = vmul.f32 %v2470, %v2470
    %v2551 = vmul.f32 %v2471, %v2471
    %v2552 = vmul.f32 %v2472, %v2472
    %v2553 = vmul.f32 %v2473, %v2473
    %v2554 = vmul.f32 %v2474, %v2474
    %v2555 = vmul.f32 %v2475, %v2475
    %v2556 = vmul.f32 %v2476, %v2476
    %v2557 = vmul.f32 %v2477, %v2477
    %v2558 = vmul.f32 %v2478, %v2478
    %v2559 = vmul.f32 %v2479, %v2479
    %v2560 = vmul.f32 %v2480, %v2480
    %v2561 = vmul.f32 %v2481, %v2481
    %v2562 = vmul.f32 %v2482, %v2482
    %v2563 = vmul.f32 %v2483, %v2483
    %v2564 = vmul.f32 %v2484, %v2484
    %v2565 = vmul.f32 %v2485, %v2485
    %v2566 = vmul.f32 %v2486, %v2486
    %v2567 = vmul.f32 %v2487, %v2487
    %v2568 = vmul.f32 %v2488, %v2488
    %v2569 = vmul.f32 %v2489, %v2489
    %v2570 = vmul.f32 %v2490, %v2490
    %v2571 = vmul.f32 %v2491, %v2491
    %v2572 = vmul.f32 %v2492, %v2492
    %v2573 = vmul.f32 %v2493, %v2493
    %v2574 = vmul.f32 %v2494, %v2494
    %v2575 = vmul.f32 %v2495, %v2495
    %v2576 = vmul.f32 %v2496, %v2496
    %v2577 = vmul.f32 %v2497, %v2497
    %v2578 = vmul.f32 %v2498, %v2498
    %v2579 = vmul.f32 %v2499, %v2499
    %v2580 = vmul.f32 %v2500, %v2500
    %v2581 = vmul.f32 %v2501, %v2501
    %v2582 = vmul.f32 %v2502, %v2502
    %v2583 = vmul.f32 %v2503, %v2503
    %v2584 = vmul.f32 %v2504, %v2504
    %v2585 = vmul.f32 %v2505, %v2505
    %v2586 = vmul.f32 %v2506, %v2506
    %v2587 = vmul.f32 %v2507, %v2507
    %v2588 = vmul.f32 %v2508, %v2508
    %v2589 = vmul.f32 %v2509, %v2509
    %v2590 = vmul.f32 %v2510, %v2510
    %v2591 = vmul.f32 %v2511, %v2511
    %v2592 = vmul.f32 %v2512, %v2512
    %v2593 = vmul.f32 %v2513, %v2513
    %v2594 = vmul.f32 %v2514, %v2514
    %v2595 = vmul.f32 %v2515, %v2515
    %v2596 = vmul.f32 %v2516, %v2516
    %v2597 = vmul.f32 %v2517, %v2517
    %v2598 = vmul.f32 %v2518, %v2518
    %v2599 = vmul.f32 %v2519, %v2519
    %v2600 = vmul.f32 %v2520, %v2520
    %v2601 = vmul.f32 %v2521, %v2521
    %v2602 = vmul.f32 %v2522, %v2522
    %v2603 = vmul.f32 %v2523, %v2523
    %v2604 = vmul.f32 %v2524, %v2524
    %v2605 = vmul.f32 %v2525, %v2525
    %v2606 = vmul.f32 %v2526, %v2526
    %v2607 = vmul.f32 %v2527, %v2527
    %v2608 = vmul.f32 %v2528, %v2528
    %v2609 = vmul.f32 %v2529, %v2529
    %v2610 = vmul.f32 %v2530, %v2530
    %v2611 = vmul.f32 %v2531, %v2531
    %v2612 = vmul.f32 %v2532, %v2532
    %v2613 = vmul.f32 %v2533, %v2533
    %v2614 = vmul.f32 %v2534, %v2534
    %v2615 = vmul.f32 %v2535, %v2535
    %v2616 = vmul.f32 %v2536, %v2536
    %v2617 = vmul.f32 %v2537, %v2537
    %v2618 = vmul.f32 %v2538, %v2538
    %v2619 = vmul.f32 %v2539, %v2539
    %v2620 = vmul.f32 %v2540, %v2540
    %v2621 = vmul.f32 %v2541, %v2541
    %v2622 = vmul.f32 %v2542, %v2542
    %v2623 = vmul.f32 %v2543, %v2543
    %v2624 = vmul.f32 %v2544, %v2544
    %v2625 = vmul.f32 %v2545, %v2545
    %v2626 = vmul.f32 %v2546, %v2546
    %v2627 = vmul.f32 %v2547, %v2547
    %v2628 = vmul.f32 %v2548, %v2548
    %v2629 = vmul.f32 %v2549, %v2549
    %v2630 = vadd.f32 %v2550, %v2551
    %v2631 = vadd.f32 %v2630, %v2552
    %v2632 = vadd.f32 %v2631, %v2553
    %v2633 = vadd.f32 %v2632, %v2570
    %v2634 = vadd.f32 %v2633, %v2571
    %v2635 = vadd.f32 %v2634, %v2572
    %v2636 = vadd.f32 %v2635, %v2573
    %2637 = vadd.xlane.f32.xlu0 %v2636
    %v2638 = vpop.xlane.xlu0 %2637
    %v2639 = vadd.f32 %v2554, %v2555
    %v2640 = vadd.f32 %v2639, %v2556
    %v2641 = vadd.f32 %v2640, %v2557
    %v2642 = vadd.f32 %v2641, %v2574
    %v2643 = vadd.f32 %v2642, %v2575
    %v2644 = vadd.f32 %v2643, %v2576
    %v2645 = vadd.f32 %v2644, %v2577
    %2646 = vadd.xlane.f32.xlu0 %v2645
    %v2647 = vpop.xlane.xlu0 %2646
    %v2648 = vadd.f32 %v2558, %v2559
    %v2649 = vadd.f32 %v2648, %v2560
    %v2650 = vadd.f32 %v2649, %v2561
    %v2651 = vadd.f32 %v2650, %v2578
    %v2652 = vadd.f32 %v2651, %v2579
    %v2653 = vadd.f32 %v2652, %v2580
    %v2654 = vadd.f32 %v2653, %v2581
    %2655 = vadd.xlane.f32.xlu0 %v2654
    %v2656 = vpop.xlane.xlu0 %2655
    %v2657 = vadd.f32 %v2562, %v2563
    %v2658 = vadd.f32 %v2657, %v2564
    %v2659 = vadd.f32 %v2658, %v2565
    %v2660 = vadd.f32 %v2659, %v2582
    %v2661 = vadd.f32 %v2660, %v2583
    %v2662 = vadd.f32 %v2661, %v2584
    %v2663 = vadd.f32 %v2662, %v2585
    %2664 = vadd.xlane.f32.xlu0 %v2663
    %v2665 = vpop.xlane.xlu0 %2664
    %v2666 = vadd.f32 %v2566, %v2567
    %v2667 = vadd.f32 %v2666, %v2568
    %v2668 = vadd.f32 %v2667, %v2569
    %v2669 = vadd.f32 %v2668, %v2586
    %v2670 = vadd.f32 %v2669, %v2587
    %v2671 = vadd.f32 %v2670, %v2588
    %v2672 = vadd.f32 %v2671, %v2589
    %2673 = vadd.xlane.f32.xlu0 %v2672
    %v2674 = vpop.xlane.xlu0 %2673
    %v2675 = vadd.f32 %v2590, %v2591
    %v2676 = vadd.f32 %v2675, %v2592
    %v2677 = vadd.f32 %v2676, %v2593
    %v2678 = vadd.f32 %v2677, %v2610
    %v2679 = vadd.f32 %v2678, %v2611
    %v2680 = vadd.f32 %v2679, %v2612
    %v2681 = vadd.f32 %v2680, %v2613
    %2682 = vadd.xlane.f32.xlu0 %v2681
    %v2683 = vpop.xlane.xlu0 %2682
    %v2684 = vadd.f32 %v2594, %v2595
    %v2685 = vadd.f32 %v2684, %v2596
    %v2686 = vadd.f32 %v2685, %v2597
    %v2687 = vadd.f32 %v2686, %v2614
    %v2688 = vadd.f32 %v2687, %v2615
    %v2689 = vadd.f32 %v2688, %v2616
    %v2690 = vadd.f32 %v2689, %v2617
    %2691 = vadd.xlane.f32.xlu0 %v2690
    %v2692 = vpop.xlane.xlu0 %2691
    %v2693 = vadd.f32 %v2598, %v2599
    %v2694 = vadd.f32 %v2693, %v2600
    %v2695 = vadd.f32 %v2694, %v2601
    %v2696 = vadd.f32 %v2695, %v2618
    %v2697 = vadd.f32 %v2696, %v2619
    %v2698 = vadd.f32 %v2697, %v2620
    %v2699 = vadd.f32 %v2698, %v2621
    %2700 = vadd.xlane.f32.xlu0 %v2699
    %v2701 = vpop.xlane.xlu0 %2700
    %v2702 = vadd.f32 %v2602, %v2603
    %v2703 = vadd.f32 %v2702, %v2604
    %v2704 = vadd.f32 %v2703, %v2605
    %v2705 = vadd.f32 %v2704, %v2622
    %v2706 = vadd.f32 %v2705, %v2623
    %v2707 = vadd.f32 %v2706, %v2624
    %v2708 = vadd.f32 %v2707, %v2625
    %2709 = vadd.xlane.f32.xlu0 %v2708
    %v2710 = vpop.xlane.xlu0 %2709
    %v2711 = vadd.f32 %v2606, %v2607
    %v2712 = vadd.f32 %v2711, %v2608
    %v2713 = vadd.f32 %v2712, %v2609
    %v2714 = vadd.f32 %v2713, %v2626
    %v2715 = vadd.f32 %v2714, %v2627
    %v2716 = vadd.f32 %v2715, %v2628
    %v2717 = vadd.f32 %v2716, %v2629
    %2718 = vadd.xlane.f32.xlu0 %v2717
    %v2719 = vpop.xlane.xlu0 %2718
    %v2720 = vmul.f32 %v2638, 0.0009765625
    %v2721 = vmul.f32 %v2647, 0.0009765625
    %v2722 = vmul.f32 %v2656, 0.0009765625
    %v2723 = vmul.f32 %v2665, 0.0009765625
    %v2724 = vmul.f32 %v2674, 0.0009765625
    %v2725 = vmul.f32 %v2683, 0.0009765625
    %v2726 = vmul.f32 %v2692, 0.0009765625
    %v2727 = vmul.f32 %v2701, 0.0009765625
    %v2728 = vmul.f32 %v2710, 0.0009765625
    %v2729 = vmul.f32 %v2719, 0.0009765625
    %v2730 = vmax.f32 %v2720, 0.0
    %v2731 = vmax.f32 %v2721, 0.0
    %v2732 = vmax.f32 %v2722, 0.0
    %v2733 = vmax.f32 %v2723, 0.0
    %v2734 = vmax.f32 %v2724, 0.0
    %v2735 = vmax.f32 %v2725, 0.0
    %v2736 = vmax.f32 %v2726, 0.0
    %v2737 = vmax.f32 %v2727, 0.0
    %v2738 = vmax.f32 %v2728, 0.0
    %v2739 = vmax.f32 %v2729, 0.0
    %v2740 = vadd.f32 %v2730, 1e-05
    %v2741 = vadd.f32 %v2731, 1e-05
    %v2742 = vadd.f32 %v2732, 1e-05
    %v2743 = vadd.f32 %v2733, 1e-05
    %v2744 = vadd.f32 %v2734, 1e-05
    %v2745 = vadd.f32 %v2735, 1e-05
    %v2746 = vadd.f32 %v2736, 1e-05
    %v2747 = vadd.f32 %v2737, 1e-05
    %v2748 = vadd.f32 %v2738, 1e-05
    %v2749 = vadd.f32 %v2739, 1e-05
    %v2750 = vrsqrt.pop %v2740
    %v2751 = vrsqrt.pop %v2741
    %v2752 = vrsqrt.pop %v2742
    %v2753 = vrsqrt.pop %v2743
    %v2754 = vrsqrt.pop %v2744
    %v2755 = vrsqrt.pop %v2745
    %v2756 = vrsqrt.pop %v2746
    %v2757 = vrsqrt.pop %v2747
    %v2758 = vrsqrt.pop %v2748
    %v2759 = vrsqrt.pop %v2749
    %v2760 = vmul.f32 %v2750, %v49
    %v2761 = vmul.f32 %v2751, %v50
    %v2762 = vmul.f32 %v2752, %v51
    %v2763 = vmul.f32 %v2753, %v52
    %v2764 = vmul.f32 %v2754, %v53
    %v2765 = vmul.f32 %v2755, %v49
    %v2766 = vmul.f32 %v2756, %v50
    %v2767 = vmul.f32 %v2757, %v51
    %v2768 = vmul.f32 %v2758, %v52
    %v2769 = vmul.f32 %v2759, %v53
    %v2770 = vmul.f32 %v2460, %v2760
    %v2771 = vmul.f32 %v2461, %v2761
    %v2772 = vmul.f32 %v2462, %v2762
    %v2773 = vmul.f32 %v2463, %v2763
    %v2774 = vmul.f32 %v2464, %v2764
    %v2775 = vmul.f32 %v2465, %v2765
    %v2776 = vmul.f32 %v2466, %v2766
    %v2777 = vmul.f32 %v2467, %v2767
    %v2778 = vmul.f32 %v2468, %v2768
    %v2779 = vmul.f32 %v2469, %v2769
    %2790 = vrot.lane.b32.xlu0 %v2770, 1
    %v2791 = vpop.permute.xlu0 %2790
    %2792 = vrot.lane.b32.xlu0 %v2771, 1
    %v2793 = vpop.permute.xlu0 %2792
    %2794 = vrot.lane.b32.xlu0 %v2772, 1
    %v2795 = vpop.permute.xlu0 %2794
    %2796 = vrot.lane.b32.xlu0 %v2773, 1
    %v2797 = vpop.permute.xlu0 %2796
    %2798 = vrot.lane.b32.xlu0 %v2774, 1
    %v2799 = vpop.permute.xlu0 %2798
    %2800 = vrot.lane.b32.xlu0 %v2775, 1
    %v2801 = vpop.permute.xlu0 %2800
    %2802 = vrot.lane.b32.xlu0 %v2776, 1
    %v2803 = vpop.permute.xlu0 %2802
    %2804 = vrot.lane.b32.xlu0 %v2777, 1
    %v2805 = vpop.permute.xlu0 %2804
    %2806 = vrot.lane.b32.xlu0 %v2778, 1
    %v2807 = vpop.permute.xlu0 %2806
    %2808 = vrot.lane.b32.xlu0 %v2779, 1
    %v2809 = vpop.permute.xlu0 %2808
    %v2820 = vsub.f32 %v49, %v2791
    %v2821 = vsub.f32 %v50, %v2793
    %v2822 = vsub.f32 %v51, %v2795
    %v2823 = vsub.f32 %v52, %v2797
    %v2824 = vsub.f32 %v53, %v2799
    %v2825 = vsub.f32 %v49, %v2801
    %v2826 = vsub.f32 %v50, %v2803
    %v2827 = vsub.f32 %v51, %v2805
    %v2828 = vsub.f32 %v52, %v2807
    %v2829 = vsub.f32 %v53, %v2809
    %2831 = vset.pattern.permute.xlu0 6
    %2832 = vperm.xlu0 %2831, %v2760
    %v2833 = vpop.permute.xlu0 %2832
    %2836 = vset.pattern.permute.xlu0 6
    %2837 = vperm.xlu0 %2836, %v2761
    %v2838 = vpop.permute.xlu0 %2837
    %2841 = vset.pattern.permute.xlu0 6
    %2842 = vperm.xlu0 %2841, %v2762
    %v2843 = vpop.permute.xlu0 %2842
    %2846 = vset.pattern.permute.xlu0 6
    %2847 = vperm.xlu0 %2846, %v2763
    %v2848 = vpop.permute.xlu0 %2847
    %2851 = vset.pattern.permute.xlu0 6
    %2852 = vperm.xlu0 %2851, %v2764
    %v2853 = vpop.permute.xlu0 %2852
    %2856 = vset.pattern.permute.xlu0 6
    %2857 = vperm.xlu0 %2856, %v2765
    %v2858 = vpop.permute.xlu0 %2857
    %2861 = vset.pattern.permute.xlu0 6
    %2862 = vperm.xlu0 %2861, %v2766
    %v2863 = vpop.permute.xlu0 %2862
    %2866 = vset.pattern.permute.xlu0 6
    %2867 = vperm.xlu0 %2866, %v2767
    %v2868 = vpop.permute.xlu0 %2867
    %2871 = vset.pattern.permute.xlu0 6
    %2872 = vperm.xlu0 %2871, %v2768
    %v2873 = vpop.permute.xlu0 %2872
    %2876 = vset.pattern.permute.xlu0 6
    %2877 = vperm.xlu0 %2876, %v2769
    %v2878 = vpop.permute.xlu0 %2877
    %v2880 = vmul.f32 %v2139, %v2833
    %v2881 = vmul.f32 %v2141, %v2833
    %v2882 = vmul.f32 %v2272, %v2833
    %v2883 = vmul.f32 %v2274, %v2833
    %v2884 = vmul.f32 %v2143, %v2838
    %v2885 = vmul.f32 %v2145, %v2838
    %v2886 = vmul.f32 %v2276, %v2838
    %v2887 = vmul.f32 %v2278, %v2838
    %v2888 = vmul.f32 %v2149, %v2843
    %v2889 = vmul.f32 %v2151, %v2843
    %v2890 = vmul.f32 %v2282, %v2843
    %v2891 = vmul.f32 %v2284, %v2843
    %v2892 = vmul.f32 %v2153, %v2848
    %v2893 = vmul.f32 %v2155, %v2848
    %v2894 = vmul.f32 %v2286, %v2848
    %v2895 = vmul.f32 %v2288, %v2848
    %v2896 = vmul.f32 %v2159, %v2853
    %v2897 = vmul.f32 %v2161, %v2853
    %v2898 = vmul.f32 %v2292, %v2853
    %v2899 = vmul.f32 %v2294, %v2853
    %v2900 = vmul.f32 %v2163, %v2833
    %v2901 = vmul.f32 %v2165, %v2833
    %v2902 = vmul.f32 %v2296, %v2833
    %v2903 = vmul.f32 %v2298, %v2833
    %v2904 = vmul.f32 %v2169, %v2838
    %v2905 = vmul.f32 %v2171, %v2838
    %v2906 = vmul.f32 %v2302, %v2838
    %v2907 = vmul.f32 %v2304, %v2838
    %v2908 = vmul.f32 %v2173, %v2843
    %v2909 = vmul.f32 %v2175, %v2843
    %v2910 = vmul.f32 %v2306, %v2843
    %v2911 = vmul.f32 %v2308, %v2843
    %v2912 = vmul.f32 %v2179, %v2848
    %v2913 = vmul.f32 %v2181, %v2848
    %v2914 = vmul.f32 %v2312, %v2848
    %v2915 = vmul.f32 %v2314, %v2848
    %v2916 = vmul.f32 %v2183, %v2853
    %v2917 = vmul.f32 %v2185, %v2853
    %v2918 = vmul.f32 %v2316, %v2853
    %v2919 = vmul.f32 %v2318, %v2853
    %v2920 = vmul.f32 %v2189, %v2858
    %v2921 = vmul.f32 %v2191, %v2858
    %v2922 = vmul.f32 %v2322, %v2858
    %v2923 = vmul.f32 %v2324, %v2858
    %v2924 = vmul.f32 %v2193, %v2863
    %v2925 = vmul.f32 %v2195, %v2863
    %v2926 = vmul.f32 %v2326, %v2863
    %v2927 = vmul.f32 %v2328, %v2863
    %v2928 = vmul.f32 %v2199, %v2868
    %v2929 = vmul.f32 %v2201, %v2868
    %v2930 = vmul.f32 %v2332, %v2868
    %v2931 = vmul.f32 %v2334, %v2868
    %v2932 = vmul.f32 %v2203, %v2873
    %v2933 = vmul.f32 %v2205, %v2873
    %v2934 = vmul.f32 %v2336, %v2873
    %v2935 = vmul.f32 %v2338, %v2873
    %v2936 = vmul.f32 %v2209, %v2878
    %v2937 = vmul.f32 %v2211, %v2878
    %v2938 = vmul.f32 %v2342, %v2878
    %v2939 = vmul.f32 %v2344, %v2878
    %v2940 = vmul.f32 %v2213, %v2858
    %v2941 = vmul.f32 %v2215, %v2858
    %v2942 = vmul.f32 %v2346, %v2858
    %v2943 = vmul.f32 %v2348, %v2858
    %v2944 = vmul.f32 %v2219, %v2863
    %v2945 = vmul.f32 %v2221, %v2863
    %v2946 = vmul.f32 %v2352, %v2863
    %v2947 = vmul.f32 %v2354, %v2863
    %v2948 = vmul.f32 %v2223, %v2868
    %v2949 = vmul.f32 %v2225, %v2868
    %v2950 = vmul.f32 %v2356, %v2868
    %v2951 = vmul.f32 %v2358, %v2868
    %v2952 = vmul.f32 %v2229, %v2873
    %v2953 = vmul.f32 %v2231, %v2873
    %v2954 = vmul.f32 %v2362, %v2873
    %v2955 = vmul.f32 %v2364, %v2873
    %v2956 = vmul.f32 %v2233, %v2878
    %v2957 = vmul.f32 %v2235, %v2878
    %v2958 = vmul.f32 %v2366, %v2878
    %v2959 = vmul.f32 %v2368, %v2878
    %2961 = vset.pattern.permute.xlu0 7
    %2962 = vperm.xlu0 %2961, %v2820
    %v2963 = vpop.permute.xlu0 %2962
    %2966 = vset.pattern.permute.xlu0 7
    %2967 = vperm.xlu0 %2966, %v2821
    %v2968 = vpop.permute.xlu0 %2967
    %2971 = vset.pattern.permute.xlu0 7
    %2972 = vperm.xlu0 %2971, %v2822
    %v2973 = vpop.permute.xlu0 %2972
    %2976 = vset.pattern.permute.xlu0 7
    %2977 = vperm.xlu0 %2976, %v2823
    %v2978 = vpop.permute.xlu0 %2977
    %2981 = vset.pattern.permute.xlu0 7
    %2982 = vperm.xlu0 %2981, %v2824
    %v2983 = vpop.permute.xlu0 %2982
    %2986 = vset.pattern.permute.xlu0 7
    %2987 = vperm.xlu0 %2986, %v2825
    %v2988 = vpop.permute.xlu0 %2987
    %2991 = vset.pattern.permute.xlu0 7
    %2992 = vperm.xlu0 %2991, %v2826
    %v2993 = vpop.permute.xlu0 %2992
    %2996 = vset.pattern.permute.xlu0 7
    %2997 = vperm.xlu0 %2996, %v2827
    %v2998 = vpop.permute.xlu0 %2997
    %3001 = vset.pattern.permute.xlu0 7
    %3002 = vperm.xlu0 %3001, %v2828
    %v3003 = vpop.permute.xlu0 %3002
    %3006 = vset.pattern.permute.xlu0 7
    %3007 = vperm.xlu0 %3006, %v2829
    %v3008 = vpop.permute.xlu0 %3007
    %v3010 = vadd.f32 %v2880, %v2963
    %v3011 = vadd.f32 %v2881, %v2963
    %v3012 = vadd.f32 %v2882, %v2963
    %v3013 = vadd.f32 %v2883, %v2963
    %v3014 = vadd.f32 %v2884, %v2968
    %v3015 = vadd.f32 %v2885, %v2968
    %v3016 = vadd.f32 %v2886, %v2968
    %v3017 = vadd.f32 %v2887, %v2968
    %v3018 = vadd.f32 %v2888, %v2973
    %v3019 = vadd.f32 %v2889, %v2973
    %v3020 = vadd.f32 %v2890, %v2973
    %v3021 = vadd.f32 %v2891, %v2973
    %v3022 = vadd.f32 %v2892, %v2978
    %v3023 = vadd.f32 %v2893, %v2978
    %v3024 = vadd.f32 %v2894, %v2978
    %v3025 = vadd.f32 %v2895, %v2978
    %v3026 = vadd.f32 %v2896, %v2983
    %v3027 = vadd.f32 %v2897, %v2983
    %v3028 = vadd.f32 %v2898, %v2983
    %v3029 = vadd.f32 %v2899, %v2983
    %v3030 = vadd.f32 %v2900, %v2963
    %v3031 = vadd.f32 %v2901, %v2963
    %v3032 = vadd.f32 %v2902, %v2963
    %v3033 = vadd.f32 %v2903, %v2963
    %v3034 = vadd.f32 %v2904, %v2968
    %v3035 = vadd.f32 %v2905, %v2968
    %v3036 = vadd.f32 %v2906, %v2968
    %v3037 = vadd.f32 %v2907, %v2968
    %v3038 = vadd.f32 %v2908, %v2973
    %v3039 = vadd.f32 %v2909, %v2973
    %v3040 = vadd.f32 %v2910, %v2973
    %v3041 = vadd.f32 %v2911, %v2973
    %v3042 = vadd.f32 %v2912, %v2978
    %v3043 = vadd.f32 %v2913, %v2978
    %v3044 = vadd.f32 %v2914, %v2978
    %v3045 = vadd.f32 %v2915, %v2978
    %v3046 = vadd.f32 %v2916, %v2983
    %v3047 = vadd.f32 %v2917, %v2983
    %v3048 = vadd.f32 %v2918, %v2983
    %v3049 = vadd.f32 %v2919, %v2983
    %v3050 = vadd.f32 %v2920, %v2988
    %v3051 = vadd.f32 %v2921, %v2988
    %v3052 = vadd.f32 %v2922, %v2988
    %v3053 = vadd.f32 %v2923, %v2988
    %v3054 = vadd.f32 %v2924, %v2993
    %v3055 = vadd.f32 %v2925, %v2993
    %v3056 = vadd.f32 %v2926, %v2993
    %v3057 = vadd.f32 %v2927, %v2993
    %v3058 = vadd.f32 %v2928, %v2998
    %v3059 = vadd.f32 %v2929, %v2998
    %v3060 = vadd.f32 %v2930, %v2998
    %v3061 = vadd.f32 %v2931, %v2998
    %v3062 = vadd.f32 %v2932, %v3003
    %v3063 = vadd.f32 %v2933, %v3003
    %v3064 = vadd.f32 %v2934, %v3003
    %v3065 = vadd.f32 %v2935, %v3003
    %v3066 = vadd.f32 %v2936, %v3008
    %v3067 = vadd.f32 %v2937, %v3008
    %v3068 = vadd.f32 %v2938, %v3008
    %v3069 = vadd.f32 %v2939, %v3008
    %v3070 = vadd.f32 %v2940, %v2988
    %v3071 = vadd.f32 %v2941, %v2988
    %v3072 = vadd.f32 %v2942, %v2988
    %v3073 = vadd.f32 %v2943, %v2988
    %v3074 = vadd.f32 %v2944, %v2993
    %v3075 = vadd.f32 %v2945, %v2993
    %v3076 = vadd.f32 %v2946, %v2993
    %v3077 = vadd.f32 %v2947, %v2993
    %v3078 = vadd.f32 %v2948, %v2998
    %v3079 = vadd.f32 %v2949, %v2998
    %v3080 = vadd.f32 %v2950, %v2998
    %v3081 = vadd.f32 %v2951, %v2998
    %v3082 = vadd.f32 %v2952, %v3003
    %v3083 = vadd.f32 %v2953, %v3003
    %v3084 = vadd.f32 %v2954, %v3003
    %v3085 = vadd.f32 %v2955, %v3003
    %v3086 = vadd.f32 %v2956, %v3008
    %v3087 = vadd.f32 %v2957, %v3008
    %v3088 = vadd.f32 %v2958, %v3008
    %v3089 = vadd.f32 %v2959, %v3008
    %v3090 = vmax.f32 %v3010, 0.0
    %v3091 = vmax.f32 %v3011, 0.0
    %v3092 = vmax.f32 %v3012, 0.0
    %v3093 = vmax.f32 %v3013, 0.0
    %v3094 = vmax.f32 %v3014, 0.0
    %v3095 = vmax.f32 %v3015, 0.0
    %v3096 = vmax.f32 %v3016, 0.0
    %v3097 = vmax.f32 %v3017, 0.0
    %v3098 = vmax.f32 %v3018, 0.0
    %v3099 = vmax.f32 %v3019, 0.0
    %v3100 = vmax.f32 %v3020, 0.0
    %v3101 = vmax.f32 %v3021, 0.0
    %v3102 = vmax.f32 %v3022, 0.0
    %v3103 = vmax.f32 %v3023, 0.0
    %v3104 = vmax.f32 %v3024, 0.0
    %v3105 = vmax.f32 %v3025, 0.0
    %v3106 = vmax.f32 %v3026, 0.0
    %v3107 = vmax.f32 %v3027, 0.0
    %v3108 = vmax.f32 %v3028, 0.0
    %v3109 = vmax.f32 %v3029, 0.0
    %v3110 = vmax.f32 %v3030, 0.0
    %v3111 = vmax.f32 %v3031, 0.0
    %v3112 = vmax.f32 %v3032, 0.0
    %v3113 = vmax.f32 %v3033, 0.0
    %v3114 = vmax.f32 %v3034, 0.0
    %v3115 = vmax.f32 %v3035, 0.0
    %v3116 = vmax.f32 %v3036, 0.0
    %v3117 = vmax.f32 %v3037, 0.0
    %v3118 = vmax.f32 %v3038, 0.0
    %v3119 = vmax.f32 %v3039, 0.0
    %v3120 = vmax.f32 %v3040, 0.0
    %v3121 = vmax.f32 %v3041, 0.0
    %v3122 = vmax.f32 %v3042, 0.0
    %v3123 = vmax.f32 %v3043, 0.0
    %v3124 = vmax.f32 %v3044, 0.0
    %v3125 = vmax.f32 %v3045, 0.0
    %v3126 = vmax.f32 %v3046, 0.0
    %v3127 = vmax.f32 %v3047, 0.0
    %v3128 = vmax.f32 %v3048, 0.0
    %v3129 = vmax.f32 %v3049, 0.0
    %v3130 = vmax.f32 %v3050, 0.0
    %v3131 = vmax.f32 %v3051, 0.0
    %v3132 = vmax.f32 %v3052, 0.0
    %v3133 = vmax.f32 %v3053, 0.0
    %v3134 = vmax.f32 %v3054, 0.0
    %v3135 = vmax.f32 %v3055, 0.0
    %v3136 = vmax.f32 %v3056, 0.0
    %v3137 = vmax.f32 %v3057, 0.0
    %v3138 = vmax.f32 %v3058, 0.0
    %v3139 = vmax.f32 %v3059, 0.0
    %v3140 = vmax.f32 %v3060, 0.0
    %v3141 = vmax.f32 %v3061, 0.0
    %v3142 = vmax.f32 %v3062, 0.0
    %v3143 = vmax.f32 %v3063, 0.0
    %v3144 = vmax.f32 %v3064, 0.0
    %v3145 = vmax.f32 %v3065, 0.0
    %v3146 = vmax.f32 %v3066, 0.0
    %v3147 = vmax.f32 %v3067, 0.0
    %v3148 = vmax.f32 %v3068, 0.0
    %v3149 = vmax.f32 %v3069, 0.0
    %v3150 = vmax.f32 %v3070, 0.0
    %v3151 = vmax.f32 %v3071, 0.0
    %v3152 = vmax.f32 %v3072, 0.0
    %v3153 = vmax.f32 %v3073, 0.0
    %v3154 = vmax.f32 %v3074, 0.0
    %v3155 = vmax.f32 %v3075, 0.0
    %v3156 = vmax.f32 %v3076, 0.0
    %v3157 = vmax.f32 %v3077, 0.0
    %v3158 = vmax.f32 %v3078, 0.0
    %v3159 = vmax.f32 %v3079, 0.0
    %v3160 = vmax.f32 %v3080, 0.0
    %v3161 = vmax.f32 %v3081, 0.0
    %v3162 = vmax.f32 %v3082, 0.0
    %v3163 = vmax.f32 %v3083, 0.0
    %v3164 = vmax.f32 %v3084, 0.0
    %v3165 = vmax.f32 %v3085, 0.0
    %v3166 = vmax.f32 %v3086, 0.0
    %v3167 = vmax.f32 %v3087, 0.0
    %v3168 = vmax.f32 %v3088, 0.0
    %v3169 = vmax.f32 %v3089, 0.0
    %v3170 = vld [vmem:[%s6] sm:$0xf]
    %v3171 = vld [vmem:[%s6 + $0x4] sm:$0xf]
    %v3172 = vld [vmem:[%s6 + $0x8] sm:$0xf]
    %v3173 = vld [vmem:[%s6 + $0xc] sm:$0xf]
    %v3174 = vld [vmem:[%s6 + $0x10] sm:$0xf]
    %v3175 = vld [vmem:[%s6 + $0x14] sm:$0xf]
    %v3176 = vld [vmem:[%s6 + $0x18] sm:$0xf]
    %v3177 = vld [vmem:[%s6 + $0x1c] sm:$0xf]
    %v3178 = vld [vmem:[%s6 + $0x20] sm:$0xf]
    %v3179 = vld [vmem:[%s6 + $0x24] sm:$0xf]
    %v3180 = vld [vmem:[%s6 + $0x28] sm:$0xf]
    %v3181 = vld [vmem:[%s6 + $0x2c] sm:$0xf]
    %v3182 = vld [vmem:[%s6 + $0x30] sm:$0xf]
    %v3183 = vld [vmem:[%s6 + $0x34] sm:$0xf]
    %v3184 = vld [vmem:[%s6 + $0x38] sm:$0xf]
    %v3185 = vld [vmem:[%s6 + $0x3c] sm:$0xf]
    %v3186 = vld [vmem:[%s6 + $0x40] sm:$0xf]
    %v3187 = vld [vmem:[%s6 + $0x44] sm:$0xf]
    %v3188 = vld [vmem:[%s6 + $0x48] sm:$0xf]
    %v3189 = vld [vmem:[%s6 + $0x4c] sm:$0xf]
    %v3190 = vld [vmem:[%s6 + $0x50] sm:$0xf]
    %v3191 = vld [vmem:[%s6 + $0x54] sm:$0xf]
    %v3192 = vld [vmem:[%s6 + $0x58] sm:$0xf]
    %v3193 = vld [vmem:[%s6 + $0x5c] sm:$0xf]
    %v3194 = vld [vmem:[%s6 + $0x60] sm:$0xf]
    %v3195 = vld [vmem:[%s6 + $0x64] sm:$0xf]
    %v3196 = vld [vmem:[%s6 + $0x68] sm:$0xf]
    %v3197 = vld [vmem:[%s6 + $0x6c] sm:$0xf]
    %v3198 = vld [vmem:[%s6 + $0x70] sm:$0xf]
    %v3199 = vld [vmem:[%s6 + $0x74] sm:$0xf]
    %v3200 = vld [vmem:[%s6 + $0x78] sm:$0xf]
    %v3201 = vld [vmem:[%s6 + $0x7c] sm:$0xf]
    %v3202 = vld [vmem:[%s6 + $0x80] sm:$0xf]
    %v3203 = vld [vmem:[%s6 + $0x84] sm:$0xf]
    %v3204 = vld [vmem:[%s6 + $0x88] sm:$0xf]
    %v3205 = vld [vmem:[%s6 + $0x8c] sm:$0xf]
    %v3206 = vld [vmem:[%s6 + $0x90] sm:$0xf]
    %v3207 = vld [vmem:[%s6 + $0x94] sm:$0xf]
    %v3208 = vld [vmem:[%s6 + $0x98] sm:$0xf]
    %v3209 = vld [vmem:[%s6 + $0x9c] sm:$0xf]
    %v3210 = vld [vmem:[%s6 + $0xa0] sm:$0xf]
    %v3211 = vld [vmem:[%s6 + $0xa4] sm:$0xf]
    %v3212 = vld [vmem:[%s6 + $0xa8] sm:$0xf]
    %v3213 = vld [vmem:[%s6 + $0xac] sm:$0xf]
    %v3214 = vld [vmem:[%s6 + $0xb0] sm:$0xf]
    %v3215 = vld [vmem:[%s6 + $0xb4] sm:$0xf]
    %v3216 = vld [vmem:[%s6 + $0xb8] sm:$0xf]
    %v3217 = vld [vmem:[%s6 + $0xbc] sm:$0xf]
    %v3218 = vld [vmem:[%s6 + $0xc0] sm:$0xf]
    %v3219 = vld [vmem:[%s6 + $0xc4] sm:$0xf]
    %v3220 = vld [vmem:[%s6 + $0xc8] sm:$0xf]
    %v3221 = vld [vmem:[%s6 + $0xcc] sm:$0xf]
    %v3222 = vld [vmem:[%s6 + $0xd0] sm:$0xf]
    %v3223 = vld [vmem:[%s6 + $0xd4] sm:$0xf]
    %v3224 = vld [vmem:[%s6 + $0xd8] sm:$0xf]
    %v3225 = vld [vmem:[%s6 + $0xdc] sm:$0xf]
    %v3226 = vld [vmem:[%s6 + $0xe0] sm:$0xf]
    %v3227 = vld [vmem:[%s6 + $0xe4] sm:$0xf]
    %v3228 = vld [vmem:[%s6 + $0xe8] sm:$0xf]
    %v3229 = vld [vmem:[%s6 + $0xec] sm:$0xf]
    %v3230 = vld [vmem:[%s6 + $0xf0] sm:$0xf]
    %v3231 = vld [vmem:[%s6 + $0xf4] sm:$0xf]
    %v3232 = vld [vmem:[%s6 + $0xf8] sm:$0xf]
    %v3233 = vld [vmem:[%s6 + $0xfc] sm:$0xf]
    %v3234 = vpack.c.bf16 %v3094, %v3090
    %v3235 = vpack.c.bf16 %v3095, %v3091
    %v3236 = vpack.c.bf16 %v3096, %v3092
    %v3237 = vpack.c.bf16 %v3097, %v3093
    %v3238 = vpack.c.bf16 %v3102, %v3098
    %v3239 = vpack.c.bf16 %v3103, %v3099
    %v3240 = vpack.c.bf16 %v3104, %v3100
    %v3241 = vpack.c.bf16 %v3105, %v3101
    %v3242 = vpack.c.bf16 %v3110, %v3106
    %v3243 = vpack.c.bf16 %v3111, %v3107
    %v3244 = vpack.c.bf16 %v3112, %v3108
    %v3245 = vpack.c.bf16 %v3113, %v3109
    %v3246 = vpack.c.bf16 %v3118, %v3114
    %v3247 = vpack.c.bf16 %v3119, %v3115
    %v3248 = vpack.c.bf16 %v3120, %v3116
    %v3249 = vpack.c.bf16 %v3121, %v3117
    %v3250 = vpack.c.bf16 %v3126, %v3122
    %v3251 = vpack.c.bf16 %v3127, %v3123
    %v3252 = vpack.c.bf16 %v3128, %v3124
    %v3253 = vpack.c.bf16 %v3129, %v3125
    %v3254 = vpack.c.bf16 %v3134, %v3130
    %v3255 = vpack.c.bf16 %v3135, %v3131
    %v3256 = vpack.c.bf16 %v3136, %v3132
    %v3257 = vpack.c.bf16 %v3137, %v3133
    %v3258 = vpack.c.bf16 %v3142, %v3138
    %v3259 = vpack.c.bf16 %v3143, %v3139
    %v3260 = vpack.c.bf16 %v3144, %v3140
    %v3261 = vpack.c.bf16 %v3145, %v3141
    %v3262 = vpack.c.bf16 %v3150, %v3146
    %v3263 = vpack.c.bf16 %v3151, %v3147
    %v3264 = vpack.c.bf16 %v3152, %v3148
    %v3265 = vpack.c.bf16 %v3153, %v3149
    %v3266 = vpack.c.bf16 %v3158, %v3154
    %v3267 = vpack.c.bf16 %v3159, %v3155
    %v3268 = vpack.c.bf16 %v3160, %v3156
    %v3269 = vpack.c.bf16 %v3161, %v3157
    %v3270 = vpack.c.bf16 %v3166, %v3162
    %v3271 = vpack.c.bf16 %v3167, %v3163
    %v3272 = vpack.c.bf16 %v3168, %v3164
    %v3273 = vpack.c.bf16 %v3169, %v3165
    %v3274 = vlaneseq
    %v3275 = vshrl.u32 %v3274, 7
    %v3276 = vsub.s32 3, %v3275
    %v3277 = vrot.slane %v48, %v3276
    %v3342 = vunpack.c.l.b16 %v3170
    %v3343 = vunpack.c.l.b16 %v3171
    %v3344 = vunpack.c.l.b16 %v3172
    %v3345 = vunpack.c.l.b16 %v3173
    %v3346 = vunpack.c.l.b16 %v3174
    %v3347 = vunpack.c.l.b16 %v3175
    %v3348 = vunpack.c.l.b16 %v3176
    %v3349 = vunpack.c.l.b16 %v3177
    %v3350 = vunpack.c.l.b16 %v3178
    %v3351 = vunpack.c.l.b16 %v3179
    %v3352 = vunpack.c.l.b16 %v3180
    %v3353 = vunpack.c.l.b16 %v3181
    %v3354 = vunpack.c.l.b16 %v3182
    %v3355 = vunpack.c.l.b16 %v3183
    %v3356 = vunpack.c.l.b16 %v3184
    %v3357 = vunpack.c.l.b16 %v3185
    %v3358 = vunpack.c.l.b16 %v3186
    %v3359 = vunpack.c.l.b16 %v3187
    %v3360 = vunpack.c.l.b16 %v3188
    %v3361 = vunpack.c.l.b16 %v3189
    %v3362 = vunpack.c.l.b16 %v3190
    %v3363 = vunpack.c.l.b16 %v3191
    %v3364 = vunpack.c.l.b16 %v3192
    %v3365 = vunpack.c.l.b16 %v3193
    %v3366 = vunpack.c.l.b16 %v3194
    %v3367 = vunpack.c.l.b16 %v3195
    %v3368 = vunpack.c.l.b16 %v3196
    %v3369 = vunpack.c.l.b16 %v3197
    %v3370 = vunpack.c.l.b16 %v3198
    %v3371 = vunpack.c.l.b16 %v3199
    %v3372 = vunpack.c.l.b16 %v3200
    %v3373 = vunpack.c.l.b16 %v3201
    %v3374 = vunpack.c.l.b16 %v3202
    %v3375 = vunpack.c.l.b16 %v3203
    %v3376 = vunpack.c.l.b16 %v3204
    %v3377 = vunpack.c.l.b16 %v3205
    %v3378 = vunpack.c.l.b16 %v3206
    %v3379 = vunpack.c.l.b16 %v3207
    %v3380 = vunpack.c.l.b16 %v3208
    %v3381 = vunpack.c.l.b16 %v3209
    %v3382 = vunpack.c.l.b16 %v3210
    %v3383 = vunpack.c.l.b16 %v3211
    %v3384 = vunpack.c.l.b16 %v3212
    %v3385 = vunpack.c.l.b16 %v3213
    %v3386 = vunpack.c.l.b16 %v3214
    %v3387 = vunpack.c.l.b16 %v3215
    %v3388 = vunpack.c.l.b16 %v3216
    %v3389 = vunpack.c.l.b16 %v3217
    %v3390 = vunpack.c.l.b16 %v3218
    %v3391 = vunpack.c.l.b16 %v3219
    %v3392 = vunpack.c.l.b16 %v3220
    %v3393 = vunpack.c.l.b16 %v3221
    %v3394 = vunpack.c.l.b16 %v3222
    %v3395 = vunpack.c.l.b16 %v3223
    %v3396 = vunpack.c.l.b16 %v3224
    %v3397 = vunpack.c.l.b16 %v3225
    %v3398 = vunpack.c.l.b16 %v3226
    %v3399 = vunpack.c.l.b16 %v3227
    %v3400 = vunpack.c.l.b16 %v3228
    %v3401 = vunpack.c.l.b16 %v3229
    %v3402 = vunpack.c.l.b16 %v3230
    %v3403 = vunpack.c.l.b16 %v3231
    %v3404 = vunpack.c.l.b16 %v3232
    %v3405 = vunpack.c.l.b16 %v3233
    %v3406 = vpack.c.b16 %v3343, %v3342
    %v3407 = vpack.c.b16 %v3345, %v3344
    %v3408 = vpack.c.b16 %v3347, %v3346
    %v3409 = vpack.c.b16 %v3349, %v3348
    %v3410 = vpack.c.b16 %v3351, %v3350
    %v3411 = vpack.c.b16 %v3353, %v3352
    %v3412 = vpack.c.b16 %v3355, %v3354
    %v3413 = vpack.c.b16 %v3357, %v3356
    %v3414 = vpack.c.b16 %v3359, %v3358
    %v3415 = vpack.c.b16 %v3361, %v3360
    %v3416 = vpack.c.b16 %v3363, %v3362
    %v3417 = vpack.c.b16 %v3365, %v3364
    %v3418 = vpack.c.b16 %v3367, %v3366
    %v3419 = vpack.c.b16 %v3369, %v3368
    %v3420 = vpack.c.b16 %v3371, %v3370
    %v3421 = vpack.c.b16 %v3373, %v3372
    %v3422 = vpack.c.b16 %v3375, %v3374
    %v3423 = vpack.c.b16 %v3377, %v3376
    %v3424 = vpack.c.b16 %v3379, %v3378
    %v3425 = vpack.c.b16 %v3381, %v3380
    %v3426 = vpack.c.b16 %v3383, %v3382
    %v3427 = vpack.c.b16 %v3385, %v3384
    %v3428 = vpack.c.b16 %v3387, %v3386
    %v3429 = vpack.c.b16 %v3389, %v3388
    %v3430 = vpack.c.b16 %v3391, %v3390
    %v3431 = vpack.c.b16 %v3393, %v3392
    %v3432 = vpack.c.b16 %v3395, %v3394
    %v3433 = vpack.c.b16 %v3397, %v3396
    %v3434 = vpack.c.b16 %v3399, %v3398
    %v3435 = vpack.c.b16 %v3401, %v3400
    %v3436 = vpack.c.b16 %v3403, %v3402
    %v3437 = vpack.c.b16 %v3405, %v3404
    %3470 = vmatprep.subr.bf16.mxu0 0
    %3471 = vmatpush1.bf16.msra.mxu0 %v3406
    %3472 = vmatprep.subr.bf16.mxu0 0
    %3473 = vmatpush1.bf16.msra.mxu0 %v3407
    %3474 = vmatprep.subr.bf16.mxu0 0
    %3475 = vmatpush1.bf16.msra.mxu0 %v3408
    %3476 = vmatprep.subr.bf16.mxu0 0
    %3477 = vmatpush1.bf16.msra.mxu0 %v3409
    %3478 = vmatprep.subr.bf16.mxu0 0
    %3479 = vmatpush1.bf16.msra.mxu0 %v3410
    %3480 = vmatprep.subr.bf16.mxu0 0
    %3481 = vmatpush1.bf16.msra.mxu0 %v3411
    %3482 = vmatprep.subr.bf16.mxu0 0
    %3483 = vmatpush1.bf16.msra.mxu0 %v3412
    %3484 = vmatprep.subr.bf16.mxu0 0
    %3485 = vmatpush1.bf16.msra.mxu0 %v3413
    %3486 = vmatprep.subr.bf16.mxu0 0
    %3487 = vmatpush1.bf16.msra.mxu0 %v3414
    %3488 = vmatprep.subr.bf16.mxu0 0
    %3489 = vmatpush1.bf16.msra.mxu0 %v3415
    %3490 = vmatprep.subr.bf16.mxu0 0
    %3491 = vmatpush1.bf16.msra.mxu0 %v3416
    %3492 = vmatprep.subr.bf16.mxu0 0
    %3493 = vmatpush1.bf16.msra.mxu0 %v3417
    %3494 = vmatprep.subr.bf16.mxu0 0
    %3495 = vmatpush1.bf16.msra.mxu0 %v3418
    %3496 = vmatprep.subr.bf16.mxu0 0
    %3497 = vmatpush1.bf16.msra.mxu0 %v3419
    %3498 = vmatprep.subr.bf16.mxu0 0
    %3499 = vmatpush1.bf16.msra.mxu0 %v3420
    %3500 = vmatprep.subr.bf16.mxu0 0
    %3501 = vmatpush1.bf16.msra.mxu0 %v3421
    %3502 = vmatprep.mubr.bf16.mxu0 %v3235
    %3503 = vmatmul.mubr.bf16.gmra.mrb[0].mxu0 %v3234
    %v3504 = vpop.f32.mrb[0].mxu0
    %v3505 = vadd.f32 %v3277, %v3504
    %v3506 = vpop.f32.mrb[0].mxu0
    %v3507 = vpop.f32.mrb[0].mxu0
    %v3508 = vadd.f32 %v3277, %v3507
    %v3509 = vpop.f32.mrb[0].mxu0
    %3510 = vmatprep.mubr.bf16.mxu0 %v3239
    %3511 = vmatmul.mubr.bf16.gmra.mrb[0].mxu0 %v3238
    %v3512 = vpop.f32.mrb[0].mxu0
    %v3513 = vadd.f32 %v3277, %v3512
    %v3514 = vpop.f32.mrb[0].mxu0
    %v3515 = vpop.f32.mrb[0].mxu0
    %v3516 = vadd.f32 %v3277, %v3515
    %v3517 = vpop.f32.mrb[0].mxu0
    %3518 = vmatprep.mubr.bf16.mxu0 %v3243
    %3519 = vmatmul.mubr.bf16.gmra.mrb[0].mxu0 %v3242
    %v3520 = vpop.f32.mrb[0].mxu0
    %v3521 = vadd.f32 %v3277, %v3520
    %v3522 = vpop.f32.mrb[0].mxu0
    %v3523 = vpop.f32.mrb[0].mxu0
    %v3524 = vadd.f32 %v3277, %v3523
    %v3525 = vpop.f32.mrb[0].mxu0
    %3526 = vmatprep.mubr.bf16.mxu0 %v3247
    %3527 = vmatmul.mubr.bf16.gmra.mrb[0].mxu0 %v3246
    %v3528 = vpop.f32.mrb[0].mxu0
    %v3529 = vadd.f32 %v3277, %v3528
    %v3530 = vpop.f32.mrb[0].mxu0
    %v3531 = vpop.f32.mrb[0].mxu0
    %v3532 = vadd.f32 %v3277, %v3531
    %v3533 = vpop.f32.mrb[0].mxu0
    %3534 = vmatprep.mubr.bf16.mxu0 %v3251
    %3535 = vmatmul.mubr.bf16.gmra.mrb[0].mxu0 %v3250
    %v3536 = vpop.f32.mrb[0].mxu0
    %v3537 = vadd.f32 %v3277, %v3536
    %v3538 = vpop.f32.mrb[0].mxu0
    %v3539 = vpop.f32.mrb[0].mxu0
    %v3540 = vadd.f32 %v3277, %v3539
    %v3541 = vpop.f32.mrb[0].mxu0
    %3542 = vmatprep.mubr.bf16.mxu0 %v3255
    %3543 = vmatmul.mubr.bf16.gmra.mrb[0].mxu0 %v3254
    %v3544 = vpop.f32.mrb[0].mxu0
    %v3545 = vadd.f32 %v3277, %v3544
    %v3546 = vpop.f32.mrb[0].mxu0
    %v3547 = vpop.f32.mrb[0].mxu0
    %v3548 = vadd.f32 %v3277, %v3547
    %v3549 = vpop.f32.mrb[0].mxu0
    %3550 = vmatprep.mubr.bf16.mxu0 %v3259
    %3551 = vmatmul.mubr.bf16.gmra.mrb[0].mxu0 %v3258
    %v3552 = vpop.f32.mrb[0].mxu0
    %v3553 = vadd.f32 %v3277, %v3552
    %v3554 = vpop.f32.mrb[0].mxu0
    %v3555 = vpop.f32.mrb[0].mxu0
    %v3556 = vadd.f32 %v3277, %v3555
    %v3557 = vpop.f32.mrb[0].mxu0
    %3558 = vmatprep.mubr.bf16.mxu0 %v3263
    %3559 = vmatmul.mubr.bf16.gmra.mrb[0].mxu0 %v3262
    %v3560 = vpop.f32.mrb[0].mxu0
    %v3561 = vadd.f32 %v3277, %v3560
    %v3562 = vpop.f32.mrb[0].mxu0
    %v3563 = vpop.f32.mrb[0].mxu0
    %v3564 = vadd.f32 %v3277, %v3563
    %v3565 = vpop.f32.mrb[0].mxu0
    %3566 = vmatprep.mubr.bf16.mxu0 %v3267
    %3567 = vmatmul.mubr.bf16.gmra.mrb[0].mxu0 %v3266
    %v3568 = vpop.f32.mrb[0].mxu0
    %v3569 = vadd.f32 %v3277, %v3568
    %v3570 = vpop.f32.mrb[0].mxu0
    %v3571 = vpop.f32.mrb[0].mxu0
    %v3572 = vadd.f32 %v3277, %v3571
    %v3573 = vpop.f32.mrb[0].mxu0
    %3574 = vmatprep.mubr.bf16.mxu0 %v3271
    %3575 = vmatmul.mubr.bf16.gmra.mrb[0].mxu0 %v3270
    %v3576 = vpop.f32.mrb[0].mxu0
    %v3577 = vadd.f32 %v3277, %v3576
    %v3578 = vpop.f32.mrb[0].mxu0
    %v3579 = vpop.f32.mrb[0].mxu0
    %v3580 = vadd.f32 %v3277, %v3579
    %v3581 = vpop.f32.mrb[0].mxu0
    %3582 = vdwg.mxu0
    %3583 = vmatprep.subr.bf16.mxu0 0
    %3584 = vmatpush1.bf16.msra.mxu0 %v3422
    %3585 = vmatprep.subr.bf16.mxu0 0
    %3586 = vmatpush1.bf16.msra.mxu0 %v3423
    %3587 = vmatprep.subr.bf16.mxu0 0
    %3588 = vmatpush1.bf16.msra.mxu0 %v3424
    %3589 = vmatprep.subr.bf16.mxu0 0
    %3590 = vmatpush1.bf16.msra.mxu0 %v3425
    %3591 = vmatprep.subr.bf16.mxu0 0
    %3592 = vmatpush1.bf16.msra.mxu0 %v3426
    %3593 = vmatprep.subr.bf16.mxu0 0
    %3594 = vmatpush1.bf16.msra.mxu0 %v3427
    %3595 = vmatprep.subr.bf16.mxu0 0
    %3596 = vmatpush1.bf16.msra.mxu0 %v3428
    %3597 = vmatprep.subr.bf16.mxu0 0
    %3598 = vmatpush1.bf16.msra.mxu0 %v3429
    %3599 = vmatprep.subr.bf16.mxu0 0
    %3600 = vmatpush1.bf16.msra.mxu0 %v3430
    %3601 = vmatprep.subr.bf16.mxu0 0
    %3602 = vmatpush1.bf16.msra.mxu0 %v3431
    %3603 = vmatprep.subr.bf16.mxu0 0
    %3604 = vmatpush1.bf16.msra.mxu0 %v3432
    %3605 = vmatprep.subr.bf16.mxu0 0
    %3606 = vmatpush1.bf16.msra.mxu0 %v3433
    %3607 = vmatprep.subr.bf16.mxu0 0
    %3608 = vmatpush1.bf16.msra.mxu0 %v3434
    %3609 = vmatprep.subr.bf16.mxu0 0
    %3610 = vmatpush1.bf16.msra.mxu0 %v3435
    %3611 = vmatprep.subr.bf16.mxu0 0
    %3612 = vmatpush1.bf16.msra.mxu0 %v3436
    %3613 = vmatprep.subr.bf16.mxu0 0
    %3614 = vmatpush1.bf16.msra.mxu0 %v3437
    %3615 = vmatprep.mubr.bf16.mxu0 %v3237
    %3616 = vmatmul.mubr.bf16.gmra.mrb[0].mxu0 %v3236
    %v3617 = vpop.f32.mrb[0].mxu0
    %v3618 = vadd.f32 %v3505, %v3617
    %v3619 = vpop.f32.mrb[0].mxu0
    %v3620 = vpop.f32.mrb[0].mxu0
    %v3621 = vadd.f32 %v3508, %v3620
    %v3622 = vpop.f32.mrb[0].mxu0
    %3623 = vmatprep.mubr.bf16.mxu0 %v3241
    %3624 = vmatmul.mubr.bf16.gmra.mrb[0].mxu0 %v3240
    %v3625 = vpop.f32.mrb[0].mxu0
    %v3626 = vadd.f32 %v3513, %v3625
    %v3627 = vpop.f32.mrb[0].mxu0
    %v3628 = vpop.f32.mrb[0].mxu0
    %v3629 = vadd.f32 %v3516, %v3628
    %v3630 = vpop.f32.mrb[0].mxu0
    %3631 = vmatprep.mubr.bf16.mxu0 %v3245
    %3632 = vmatmul.mubr.bf16.gmra.mrb[0].mxu0 %v3244
    %v3633 = vpop.f32.mrb[0].mxu0
    %v3634 = vadd.f32 %v3521, %v3633
    %v3635 = vpop.f32.mrb[0].mxu0
    %v3636 = vpop.f32.mrb[0].mxu0
    %v3637 = vadd.f32 %v3524, %v3636
    %v3638 = vpop.f32.mrb[0].mxu0
    %3639 = vmatprep.mubr.bf16.mxu0 %v3249
    %3640 = vmatmul.mubr.bf16.gmra.mrb[0].mxu0 %v3248
    %v3641 = vpop.f32.mrb[0].mxu0
    %v3642 = vadd.f32 %v3529, %v3641
    %v3643 = vpop.f32.mrb[0].mxu0
    %v3644 = vpop.f32.mrb[0].mxu0
    %v3645 = vadd.f32 %v3532, %v3644
    %v3646 = vpop.f32.mrb[0].mxu0
    %3647 = vmatprep.mubr.bf16.mxu0 %v3253
    %3648 = vmatmul.mubr.bf16.gmra.mrb[0].mxu0 %v3252
    %v3649 = vpop.f32.mrb[0].mxu0
    %v3650 = vadd.f32 %v3537, %v3649
    %v3651 = vpop.f32.mrb[0].mxu0
    %v3652 = vpop.f32.mrb[0].mxu0
    %v3653 = vadd.f32 %v3540, %v3652
    %v3654 = vpop.f32.mrb[0].mxu0
    %3655 = vmatprep.mubr.bf16.mxu0 %v3257
    %3656 = vmatmul.mubr.bf16.gmra.mrb[0].mxu0 %v3256
    %v3657 = vpop.f32.mrb[0].mxu0
    %v3658 = vadd.f32 %v3545, %v3657
    %v3659 = vpop.f32.mrb[0].mxu0
    %v3660 = vpop.f32.mrb[0].mxu0
    %v3661 = vadd.f32 %v3548, %v3660
    %v3662 = vpop.f32.mrb[0].mxu0
    %3663 = vmatprep.mubr.bf16.mxu0 %v3261
    %3664 = vmatmul.mubr.bf16.gmra.mrb[0].mxu0 %v3260
    %v3665 = vpop.f32.mrb[0].mxu0
    %v3666 = vadd.f32 %v3553, %v3665
    %v3667 = vpop.f32.mrb[0].mxu0
    %v3668 = vpop.f32.mrb[0].mxu0
    %v3669 = vadd.f32 %v3556, %v3668
    %v3670 = vpop.f32.mrb[0].mxu0
    %3671 = vmatprep.mubr.bf16.mxu0 %v3265
    %3672 = vmatmul.mubr.bf16.gmra.mrb[0].mxu0 %v3264
    %v3673 = vpop.f32.mrb[0].mxu0
    %v3674 = vadd.f32 %v3561, %v3673
    %v3675 = vpop.f32.mrb[0].mxu0
    %v3676 = vpop.f32.mrb[0].mxu0
    %v3677 = vadd.f32 %v3564, %v3676
    %v3678 = vpop.f32.mrb[0].mxu0
    %3679 = vmatprep.mubr.bf16.mxu0 %v3269
    %3680 = vmatmul.mubr.bf16.gmra.mrb[0].mxu0 %v3268
    %v3681 = vpop.f32.mrb[0].mxu0
    %v3682 = vadd.f32 %v3569, %v3681
    %v3683 = vpop.f32.mrb[0].mxu0
    %v3684 = vpop.f32.mrb[0].mxu0
    %v3685 = vadd.f32 %v3572, %v3684
    %v3686 = vpop.f32.mrb[0].mxu0
    %3687 = vmatprep.mubr.bf16.mxu0 %v3273
    %3688 = vmatmul.mubr.bf16.gmra.mrb[0].mxu0 %v3272
    %v3689 = vpop.f32.mrb[0].mxu0
    %v3690 = vadd.f32 %v3577, %v3689
    %v3691 = vpop.f32.mrb[0].mxu0
    %v3692 = vpop.f32.mrb[0].mxu0
    %v3693 = vadd.f32 %v3580, %v3692
    %v3694 = vpop.f32.mrb[0].mxu0
    %3695 = vdwg.mxu0
    %3696 = vst.msk [vmem:[%s8] sm:$0xff] %vm1859, %v3618
    %3697 = vst.msk [vmem:[%s8 + $0x8] sm:$0xff] %vm1859, %v3621
    %3698 = vst.msk [vmem:[%s8 + $0x10] sm:$0xff] %vm1859, %v3626
    %3699 = vst.msk [vmem:[%s8 + $0x18] sm:$0xff] %vm1859, %v3629
    %3700 = vst.msk [vmem:[%s8 + $0x20] sm:$0xff] %vm1859, %v3634
    %3701 = vst.msk [vmem:[%s8 + $0x28] sm:$0xff] %vm1859, %v3637
    %3702 = vst.msk [vmem:[%s8 + $0x30] sm:$0xff] %vm1859, %v3642
    %3703 = vst.msk [vmem:[%s8 + $0x38] sm:$0xff] %vm1859, %v3645
    %3704 = vst.msk [vmem:[%s8 + $0x40] sm:$0xff] %vm1859, %v3650
    %3705 = vst.msk [vmem:[%s8 + $0x48] sm:$0xff] %vm1859, %v3653
    %3706 = vst.msk [vmem:[%s9] sm:$0xff] %vm1859, %v3658
    %3707 = vst.msk [vmem:[%s9 + $0x8] sm:$0xff] %vm1859, %v3661
    %3708 = vst.msk [vmem:[%s9 + $0x10] sm:$0xff] %vm1859, %v3666
    %3709 = vst.msk [vmem:[%s9 + $0x18] sm:$0xff] %vm1859, %v3669
    %3710 = vst.msk [vmem:[%s9 + $0x20] sm:$0xff] %vm1859, %v3674
    %3711 = vst.msk [vmem:[%s9 + $0x28] sm:$0xff] %vm1859, %v3677
    %3712 = vst.msk [vmem:[%s9 + $0x30] sm:$0xff] %vm1859, %v3682
    %3713 = vst.msk [vmem:[%s9 + $0x38] sm:$0xff] %vm1859, %v3685
    %3714 = vst.msk [vmem:[%s9 + $0x40] sm:$0xff] %vm1859, %v3690
    %3715 = vst.msk [vmem:[%s9 + $0x48] sm:$0xff] %vm1859, %v3693
    // Predicated region
    $region38: #{simsiam_forward.1} parent=1 // pred_check
      _
    $region39: #{simsiam_forward.1} parent=1 // pred_check_branch
      %3717 = sbr.rel (0) target = $region41
    $region40: #{simsiam_forward.1} parent=1 // pred_region
      _
    $region41: #{simsiam_forward.1} parent=1 // pred_fallthru
      _
    // Predicated region
    $region42: #{simsiam_forward.1} parent=1 // pred_check
      _
    $region43: #{simsiam_forward.1} parent=1 // pred_check_branch
      %3719 = sbr.rel (0) target = $region45
    $region44: #{simsiam_forward.1} parent=1 // pred_region
      _
    $region45: #{simsiam_forward.1} parent=1 // pred_fallthru
      _
    // Predicated region
    $region46: #{simsiam_forward.1} parent=1 // pred_check
      _
    $region47: #{simsiam_forward.1} parent=1 // pred_check_branch
      %3721 = sbr.rel (0) target = $region49
    $region48: #{simsiam_forward.1} parent=1 // pred_region
      _
    $region49: #{simsiam_forward.1} parent=1 // pred_fallthru
      _
    // Predicated region
    $region50: #{simsiam_forward.1} parent=1 // pred_check
      _
    $region51: #{simsiam_forward.1} parent=1 // pred_check_branch
      %3723 = sbr.rel (0) target = $region53
    $region52: #{simsiam_forward.1} parent=1 // pred_region
      _
    $region53: #{simsiam_forward.1} parent=1 // pred_fallthru
      _
    // Predicated region
    $region54: #{simsiam_forward.1} parent=1 // pred_check
      _
    $region55: #{simsiam_forward.1} parent=1 // pred_check_branch
      %3725 = sbr.rel (0) target = $region57
    $region56: #{simsiam_forward.1} parent=1 // pred_region
      _
    $region57: #{simsiam_forward.1} parent=1 // pred_fallthru
      _
    // Predicated region
    $region58: #{simsiam_forward.1} parent=1 // pred_check
      _
    $region59: #{simsiam_forward.1} parent=1 // pred_check_branch
      %3727 = sbr.rel (0) target = $region61
    $region60: #{simsiam_forward.1} parent=1 // pred_region
      _
    $region61: #{simsiam_forward.1} parent=1 // pred_fallthru
      _
    // Predicated region
    $region62: #{simsiam_forward.1} parent=1 // pred_check
      _
    $region63: #{simsiam_forward.1} parent=1 // pred_check_branch
      %3729 = sbr.rel (0) target = $region65
    $region64: #{simsiam_forward.1} parent=1 // pred_region
      _
    $region65: #{simsiam_forward.1} parent=1 // pred_fallthru
      _
    // Predicated region
    $region66: #{simsiam_forward.1} parent=1 // pred_check
      _
    $region67: #{simsiam_forward.1} parent=1 // pred_check_branch
      %3731 = sbr.rel (0) target = $region69
    $region68: #{simsiam_forward.1} parent=1 // pred_region
      _
    $region69: #{simsiam_forward.1} parent=1 // pred_fallthru
      _
    %3732 = vsyncpa [#allocation3], 1

</llo_original>
